<compile_context>
chip_gen: v7x
topology: tpu7x:2x2x1
jax: 0.10.0
libtpu: 0.0.40
codegen_flags: <defaults>
</compile_context>

<pallas_src>
import jax
import jax.numpy as jnp
from jax.experimental import pallas as pl
from jax.experimental.pallas import tpu as pltpu

D_IN = 3 * 32 * 32   # 3072
D_H = 512
N_CLS = 10
N_OUT_PAD = 128      # lane-dense padded logits width
TM_CAP = 512         # (512,3072) f32 x tile = 6 MiB; x2 bufs + 3 MiB W1 ~= 16 MiB VMEM


def _round_up(n, m):
    return (n + m - 1) // m * m


def _device_kind():
    try:
        return jax.devices()[0].device_kind.lower()
    except Exception:
        return ""


def _choose_tiling(batch):
    """Return (tm, b_pad): batch-tile height and padded batch size.

    * tm is a multiple of 8 (sublane) and divides b_pad exactly.
    * Small batches: tm = round_up(B, 8)  -> no large pad / redundant MXU work.
    * Large batches: biggest tm <= 512 that divides the (8-rounded) batch, so
      no padded copy of x has to be materialized; fallback pads to a multiple.
    * v7x: prefer exactly 2 (or more) tiles so the "parallel" batch axis feeds
      both TensorCores.
    """
    b8 = _round_up(batch, 8)
    two_cores = "v7" in _device_kind()
    if two_cores and b8 % 16 == 0 and 16 <= b8 <= 2 * TM_CAP:
        return b8 // 2, b8                       # exactly 2 tiles, no extra padding
    if b8 <= TM_CAP:
        return b8, b8                            # single tile, minimal padding
    for tm in range(TM_CAP, 255, -8):            # large batch: exact divisor, no pad copy
        if b8 % tm == 0:
            return tm, b8
    return TM_CAP, _round_up(b8, TM_CAP)         # fallback: pad to a tile multiple


def _pool1_kernel(x_ref, w1_ref, b1_ref, wc_ref, bc_ref, out_ref):
    """Fused forward: Linear(3072->512) -> Pool (N=1 identity) -> Linear(512->10).

    x_ref:  (TM, 3072) f32 (cast to bf16 in-kernel)
    w1_ref: (3072, 512) bf16      b1_ref: (1, 512) f32
    wc_ref: (512, 128) bf16 (cols 10..127 zero)   bc_ref: (1, 128) f32
    out_ref:(TM, 128) f32 lane-dense logits slab
    """
    # fnn1: in-kernel bf16 cast (VPU, hidden under MXU/DMA slack), f32 MXU acc.
    x_bf = x_ref[...].astype(jnp.bfloat16)
    h = jnp.dot(x_bf, w1_ref[...], preferred_element_type=jnp.float32) + b1_ref[...]

    # pool1: attention pooling over a single-instance bag -> identity on h.

    # cls: logits = h @ Wc + bc (Wc zero-padded to 128 lanes -> unmasked store).
    logits = jnp.dot(h.astype(jnp.bfloat16), wc_ref[...],
                     preferred_element_type=jnp.float32) + bc_ref[...]
    out_ref[...] = logits


def pool1_forward(x_nchw, params):
    """x_nchw: (B, 3, 32, 32) float32.  Returns logits (B, 10) float32."""
    w1, b1, v, wq, wc, bc = params  # v, wq unused: Pool is identity for N=1
    del v, wq
    B = x_nchw.shape[0]
    tm, b_pad = _choose_tiling(B)
    n_tiles = b_pad // tm

    # Same flattening as torch's x.view(-1, 32*32*3); x stays float32 here —
    # the bf16 cast is done inside the kernel (no extra HBM pass over x).
    xf = x_nchw.reshape(B, D_IN)
    if b_pad != B:
        xf = jnp.pad(xf, ((0, b_pad - B), (0, 0)))

    # bf16 weights (f32 accumulate in-kernel); pad classifier to 128 lanes.
    w1_bf = w1.astype(jnp.bfloat16)
    wc_bf = jnp.pad(wc, ((0, 0), (0, N_OUT_PAD - N_CLS))).astype(jnp.bfloat16)
    bc_pad = jnp.pad(bc, ((0, 0), (0, N_OUT_PAD - N_CLS))).astype(jnp.float32)
    b1_f32 = b1.astype(jnp.float32)

    # Grid-invariant weights: DMA'd once, single-buffered (no wasted VMEM).
    resident = pl.Buffered(buffer_count=1)

    out_padded = pl.pallas_call(
        _pool1_kernel,
        out_shape=jax.ShapeDtypeStruct((b_pad, N_OUT_PAD), jnp.float32),
        grid=(n_tiles,),
        in_specs=[
            pl.BlockSpec((tm, D_IN), lambda i: (i, 0)),                               # x tile
            pl.BlockSpec((D_IN, D_H), lambda i: (0, 0), pipeline_mode=resident),      # W1
            pl.BlockSpec((1, D_H), lambda i: (0, 0), pipeline_mode=resident),         # b1
            pl.BlockSpec((D_H, N_OUT_PAD), lambda i: (0, 0), pipeline_mode=resident), # Wc
            pl.BlockSpec((1, N_OUT_PAD), lambda i: (0, 0), pipeline_mode=resident),   # bc
        ],
        out_specs=pl.BlockSpec((tm, N_OUT_PAD), lambda i: (i, 0)),
        compiler_params=pltpu.CompilerParams(
            dimension_semantics=("parallel",),
            vmem_limit_bytes=48 * 1024 * 1024,
        ),
    )(xf, w1_bf, b1_f32, wc_bf, bc_pad)

    return out_padded[:B, :N_CLS]


def init_params(key):
    """Deterministic synthetic parameters matching the module's shapes."""
    k1, k2, k3, k4, k5, k6 = jax.random.split(key, 6)
    d_attn = 10
    # weights stored already transposed (in, out) relative to nn.Linear's (out, in)
    w1 = jax.random.normal(k1, (D_IN, D_H), jnp.float32) * (1.0 / jnp.sqrt(D_IN))
    b1 = jax.random.normal(k2, (1, D_H), jnp.float32) * 0.01
    v = jax.random.normal(k3, (D_H, d_attn), jnp.float32) * (1.0 / jnp.sqrt(D_H))
    wq = jax.random.normal(k4, (d_attn, 1), jnp.float32) * (1.0 / jnp.sqrt(d_attn))
    wc = jax.random.normal(k5, (D_H, N_CLS), jnp.float32) * (1.0 / jnp.sqrt(D_H))
    bc = jax.random.normal(k6, (1, N_CLS), jnp.float32) * 0.01
    return (w1, b1, v, wq, wc, bc)


if __name__ == "__main__":
    key = jax.random.PRNGKey(0)
    kx, kp = jax.random.split(key)

    B = 8
    x = jax.random.normal(kx, (B, 3, 32, 32), jnp.float32)  # CIFAR-10-shaped NCHW
    params = init_params(kp)

    logits = pool1_forward(x, params)
    jax.block_until_ready(logits)

    assert logits.shape == (B, N_CLS) and logits.dtype == jnp.float32

    # Sanity check against a pure-JAX reference with matching bf16/f32 math.
    w1, b1, v, wq, wc, bc = params
    xf = x.reshape(B, D_IN).astype(jnp.bfloat16)
    h = jnp.dot(xf, w1.astype(jnp.bfloat16),
                preferred_element_type=jnp.float32) + b1
    # pool1 with a single-instance bag: softmax weight == 1 -> pooled == h
    ref = jnp.dot(h.astype(jnp.bfloat16), wc.astype(jnp.bfloat16),
                  preferred_element_type=jnp.float32) + bc
    assert jnp.allclose(logits, ref, atol=1e-2, rtol=1e-2)

    print("KERNEL_OK")
</pallas_src>

<mosaic_0001>
module attributes {stable_mosaic.version = 11 : i64} {
  func.func @_pool1_kernel(%arg0: i32, %arg1: memref<8x3072xf32, #tpu.memory_space<vmem>>, %arg2: memref<3072x512xbf16, #tpu.memory_space<vmem>>, %arg3: memref<1x512xf32, #tpu.memory_space<vmem>>, %arg4: memref<512x128xbf16, #tpu.memory_space<vmem>>, %arg5: memref<1x128xf32, #tpu.memory_space<vmem>>, %arg6: memref<8x128xf32, #tpu.memory_space<vmem>>) attributes {dimension_semantics = [#tpu.dimension_semantics<parallel>], iteration_bounds = array<i64: 1>, scalar_prefetch = 0 : i64, scratch_operands = 0 : i64, tpu.core_type = #tpu.core_type<tc>, window_params = [{transform_indices = @transform_0, window_bounds = array<i64: 8, 3072>}, {pipeline_mode = #tpu.pipeline_mode<synchronous>, transform_indices = @transform_1, window_bounds = array<i64: 3072, 512>}, {pipeline_mode = #tpu.pipeline_mode<synchronous>, transform_indices = @transform_2, window_bounds = array<i64: 1, 512>}, {pipeline_mode = #tpu.pipeline_mode<synchronous>, transform_indices = @transform_3, window_bounds = array<i64: 512, 128>}, {pipeline_mode = #tpu.pipeline_mode<synchronous>, transform_indices = @transform_4, window_bounds = array<i64: 1, 128>}, {transform_indices = @transform_5, window_bounds = array<i64: 8, 128>}]} {
    %c0 = arith.constant 0 : index
    %c0_0 = arith.constant 0 : index
    %0 = vector.load %arg1[%c0, %c0_0] : memref<8x3072xf32, #tpu.memory_space<vmem>>, vector<8x3072xf32>
    %1 = arith.truncf %0 : vector<8x3072xf32> to vector<8x3072xbf16>
    %c0_1 = arith.constant 0 : index
    %c0_2 = arith.constant 0 : index
    %2 = vector.load %arg2[%c0_1, %c0_2] : memref<3072x512xbf16, #tpu.memory_space<vmem>>, vector<3072x512xbf16>
    %cst = arith.constant dense<0.000000e+00> : vector<8x512xf32>
    %3 = tpu.matmul %1, %2, %cst {dimension_numbers = #tpu.dot_dimension_numbers<[1], [0], [0], [1], [0, 0, 1, 1], [], []>} : vector<8x3072xbf16>, vector<3072x512xbf16>, vector<8x512xf32> -> vector<8x512xf32>
    %c0_3 = arith.constant 0 : index
    %c0_4 = arith.constant 0 : index
    %4 = vector.load %arg3[%c0_3, %c0_4] : memref<1x512xf32, #tpu.memory_space<vmem>>, vector<1x512xf32>
    %5 = vector.broadcast %4 : vector<1x512xf32> to vector<8x512xf32>
    %6 = arith.addf %3, %5 : vector<8x512xf32>
    %7 = arith.truncf %6 : vector<8x512xf32> to vector<8x512xbf16>
    %c0_5 = arith.constant 0 : index
    %c0_6 = arith.constant 0 : index
    %8 = vector.load %arg4[%c0_5, %c0_6] : memref<512x128xbf16, #tpu.memory_space<vmem>>, vector<512x128xbf16>
    %cst_7 = arith.constant dense<0.000000e+00> : vector<8x128xf32>
    %9 = tpu.matmul %7, %8, %cst_7 {dimension_numbers = #tpu.dot_dimension_numbers<[1], [0], [0], [1], [0, 0, 1, 1], [], []>} : vector<8x512xbf16>, vector<512x128xbf16>, vector<8x128xf32> -> vector<8x128xf32>
    %c0_8 = arith.constant 0 : index
    %c0_9 = arith.constant 0 : index
    %10 = vector.load %arg5[%c0_8, %c0_9] : memref<1x128xf32, #tpu.memory_space<vmem>>, vector<1x128xf32>
    %11 = vector.broadcast %10 : vector<1x128xf32> to vector<8x128xf32>
    %12 = arith.addf %9, %11 : vector<8x128xf32>
    %c0_10 = arith.constant 0 : index
    %c0_11 = arith.constant 0 : index
    %13 = vector.load %arg6[%c0_10, %c0_11] : memref<8x128xf32, #tpu.memory_space<vmem>>, vector<8x128xf32>
    tpu.vector_store %arg6[%c0_10, %c0_11], %12 {strides = array<i32>} : memref<8x128xf32, #tpu.memory_space<vmem>>, vector<8x128xf32>,
    return
  }
  func.func @transform_0(%arg0: i32) -> (i32, i32) {
    %c0_i32 = arith.constant 0 : i32
    %c0_i32_0 = arith.constant 0 : i32
    return %arg0, %c0_i32 : i32, i32
  }
  func.func @transform_1(%arg0: i32) -> (i32, i32) {
    %c0_i32 = arith.constant 0 : i32
    %c0_i32_0 = arith.constant 0 : i32
    %c0_i32_1 = arith.constant 0 : i32
    return %c0_i32, %c0_i32_0 : i32, i32
  }
  func.func @transform_2(%arg0: i32) -> (i32, i32) {
    %c0_i32 = arith.constant 0 : i32
    %c0_i32_0 = arith.constant 0 : i32
    %c0_i32_1 = arith.constant 0 : i32
    return %c0_i32, %c0_i32_0 : i32, i32
  }
  func.func @transform_3(%arg0: i32) -> (i32, i32) {
    %c0_i32 = arith.constant 0 : i32
    %c0_i32_0 = arith.constant 0 : i32
    %c0_i32_1 = arith.constant 0 : i32
    return %c0_i32, %c0_i32_0 : i32, i32
  }
  func.func @transform_4(%arg0: i32) -> (i32, i32) {
    %c0_i32 = arith.constant 0 : i32
    %c0_i32_0 = arith.constant 0 : i32
    %c0_i32_1 = arith.constant 0 : i32
    return %c0_i32, %c0_i32_0 : i32, i32
  }
  func.func @transform_5(%arg0: i32) -> (i32, i32) {
    %c0_i32 = arith.constant 0 : i32
    %c0_i32_0 = arith.constant 0 : i32
    return %arg0, %c0_i32 : i32, i32
  }
}

</mosaic_0001>

<llo_original>
// kernel: tpu_custom_call.1
$region0: #{tpu_custom_call.1}
  #allocation0 [shape = 'u32[]', space=smem, size = 0x4, offset = 0x4, fixed_abs, tag = 'smem constant byte address 0x4 - core index']
  #allocation1 [shape = 'u32[144,128]{1,0:T(1,128)}', space=vmem, size = 0x12000, scoped, tag = 'internal scratch']
  %s0 = inlined_call_operand.hbm [shape: f32[8,3072], index: 0, kind: input, shape index: {}]
  %s1 = inlined_call_operand.hbm [shape: bf16[3072,512], index: 1, kind: input, shape index: {}]
  %s2 = inlined_call_operand.hbm [shape: f32[1,512], index: 2, kind: input, shape index: {}]
  %s3 = inlined_call_operand.hbm [shape: bf16[512,128], index: 3, kind: input, shape index: {}]
  %s4 = inlined_call_operand.hbm [shape: f32[1,128], index: 4, kind: input, shape index: {}]
  %s5 = inlined_call_operand.hbm [shape: f32[8,128], index: 5, kind: output, shape index: {}]
  %s6 = sld [smem:[#allocation0]]
  $region50: #{tpu_custom_call.1} parent=0
    _
  %s8 = ssub.s32 1, %s6
  %s9 = scalar_select 0, %s8, %s6
  $region1: #{tpu_custom_call.1} parent=0
    #allocation2 [shape = 'u8[98304]{0}', space=vmem, size = 0x18000, scoped, tag = 'input window, operand 0, single buffered']
    #allocation3 [shape = 's32[1]{0}', space=sflag, size = 0x4, scoped, tag = 'scoped memory for tpu_custom_call.1']
    #allocation4 [shape = 's32[1]{0}', space=sflag, size = 0x4, scoped, tag = 'scoped memory for tpu_custom_call.1']
    #allocation5 [shape = 'u8[3145728]{0}', space=vmem, size = 0x300000, scoped, tag = 'input window, operand 1, single buffered']
    #allocation6 [shape = 's32[1]{0}', space=sflag, size = 0x4, scoped, tag = 'scoped memory for tpu_custom_call.1']
    #allocation7 [shape = 'u8[2048]{0}', space=vmem, size = 0x800, scoped, tag = 'input window, operand 2, single buffered']
    #allocation8 [shape = 'u8[131072]{0}', space=vmem, size = 0x20000, scoped, tag = 'input window, operand 3, single buffered']
    #allocation9 [shape = 's32[1]{0}', space=sflag, size = 0x4, scoped, tag = 'scoped memory for tpu_custom_call.1']
    #allocation10 [shape = 'u8[512]{0}', space=vmem, size = 0x400, scoped, tag = 'input window, operand 4, single buffered']
    #allocation11 [shape = 'u8[4096]{0}', space=vmem, size = 0x1000, scoped, tag = 'output window, operand 0, single buffered']
    %10 = vsyncpa [#allocation3], 0
    %11 = vsyncpa [#allocation6], 0
    %12 = vsyncpa [#allocation9], 0
    %13 = vsyncpa [#allocation4], 0
    // Predicated region
    $region2: #{tpu_custom_call.1} parent=1 // pred_check
      _
    $region3: #{tpu_custom_call.1} parent=1 // pred_check_branch
      %15 = sbr.rel (0) target = $region5
    $region4: #{tpu_custom_call.1} parent=1 // pred_region
      %s17 = ssub.s32 3072, 3072
      %18 = vsyncadd [#allocation3], %s17
      %s20 = sshll.u32 [#allocation2], 4
      %s21 = int_to_ptr.vmem [resolvable:$true] %s20
      %23 = dma.hbm_to_vmem [thread:$0]  %s0, 3072, %s21, [#allocation3]
    $region5: #{tpu_custom_call.1} parent=1 // pred_fallthru
      _
    // Predicated region
    $region6: #{tpu_custom_call.1} parent=1 // pred_check
      _
    $region7: #{tpu_custom_call.1} parent=1 // pred_check_branch
      %25 = sbr.rel (0) target = $region9
    $region8: #{tpu_custom_call.1} parent=1 // pred_region
      %s27 = ssub.s32 98304, 98304
      %28 = vsyncadd [#allocation6], %s27
      %s29 = sshll.u32 [#allocation5], 4
      %s30 = int_to_ptr.vmem [resolvable:$true] %s29
      %35 = dma.hbm_to_vmem [thread:$0]  %s1, 98304, %s30, [#allocation6], 256, 256, 16
    $region9: #{tpu_custom_call.1} parent=1 // pred_fallthru
      _
    // Predicated region
    $region10: #{tpu_custom_call.1} parent=1 // pred_check
      _
    $region11: #{tpu_custom_call.1} parent=1 // pred_check_branch
      %37 = sbr.rel (0) target = $region13
    $region12: #{tpu_custom_call.1} parent=1 // pred_region
      %s39 = ssub.s32 64, 64
      %40 = vsyncadd [#allocation6], %s39
      %s42 = sshll.u32 [#allocation7], 4
      %s43 = int_to_ptr.vmem [resolvable:$true] %s42
      %45 = dma.hbm_to_vmem [thread:$0]  %s2, 64, %s43, [#allocation6]
    $region13: #{tpu_custom_call.1} parent=1 // pred_fallthru
      _
    // Predicated region
    $region14: #{tpu_custom_call.1} parent=1 // pred_check
      _
    $region15: #{tpu_custom_call.1} parent=1 // pred_check_branch
      %47 = sbr.rel (0) target = $region17
    $region16: #{tpu_custom_call.1} parent=1 // pred_region
      %s49 = ssub.s32 4096, 4096
      %50 = vsyncadd [#allocation9], %s49
      %s51 = sshll.u32 [#allocation8], 4
      %s52 = int_to_ptr.vmem [resolvable:$true] %s51
      %57 = dma.hbm_to_vmem [thread:$0]  %s3, 4096, %s52, [#allocation9], 64, 64, 4
    $region17: #{tpu_custom_call.1} parent=1 // pred_fallthru
      _
    // Predicated region
    $region18: #{tpu_custom_call.1} parent=1 // pred_check
      _
    $region19: #{tpu_custom_call.1} parent=1 // pred_check_branch
      %59 = sbr.rel (0) target = $region21
    $region20: #{tpu_custom_call.1} parent=1 // pred_region
      %s61 = ssub.s32 16, 16
      %62 = vsyncadd [#allocation9], %s61
      %s64 = sshll.u32 [#allocation10], 4
      %s65 = int_to_ptr.vmem [resolvable:$true] %s64
      %67 = dma.hbm_to_vmem [thread:$0]  %s4, 16, %s65, [#allocation9]
    $region21: #{tpu_custom_call.1} parent=1 // pred_fallthru
      _
    // Predicated region
    $region22: #{tpu_custom_call.1} parent=1 // pred_check
      _
    $region23: #{tpu_custom_call.1} parent=1 // pred_check_branch
      %69 = sbr.rel (0) target = $region25
    $region24: #{tpu_custom_call.1} parent=1 // pred_region
      %70 = dma.done [#allocation3], 3072
    $region25: #{tpu_custom_call.1} parent=1 // pred_fallthru
      _
    // Predicated region
    $region26: #{tpu_custom_call.1} parent=1 // pred_check
      _
    $region27: #{tpu_custom_call.1} parent=1 // pred_check_branch
      %72 = sbr.rel (0) target = $region29
    $region28: #{tpu_custom_call.1} parent=1 // pred_region
      %73 = dma.done [#allocation6], 98304
    $region29: #{tpu_custom_call.1} parent=1 // pred_fallthru
      _
    // Predicated region
    $region30: #{tpu_custom_call.1} parent=1 // pred_check
      _
    $region31: #{tpu_custom_call.1} parent=1 // pred_check_branch
      %75 = sbr.rel (0) target = $region33
    $region32: #{tpu_custom_call.1} parent=1 // pred_region
      %76 = dma.done [#allocation6], 64
    $region33: #{tpu_custom_call.1} parent=1 // pred_fallthru
      _
    // Predicated region
    $region34: #{tpu_custom_call.1} parent=1 // pred_check
      _
    $region35: #{tpu_custom_call.1} parent=1 // pred_check_branch
      %78 = sbr.rel (0) target = $region37
    $region36: #{tpu_custom_call.1} parent=1 // pred_region
      %79 = dma.done [#allocation9], 4096
    $region37: #{tpu_custom_call.1} parent=1 // pred_fallthru
      _
    // Predicated region
    $region38: #{tpu_custom_call.1} parent=1 // pred_check
      _
    $region39: #{tpu_custom_call.1} parent=1 // pred_check_branch
      %81 = sbr.rel (0) target = $region41
    $region40: #{tpu_custom_call.1} parent=1 // pred_region
      %82 = dma.done [#allocation9], 16
    $region41: #{tpu_custom_call.1} parent=1 // pred_fallthru
      _
    %v84 = vld [vmem:[#allocation2] sm:$0xff]
    %v85 = vld [vmem:[#allocation2 + $0x8] sm:$0xff]
    %v86 = vld [vmem:[#allocation2 + $0x10] sm:$0xff]
    %v87 = vld [vmem:[#allocation2 + $0x18] sm:$0xff]
    %v88 = vld [vmem:[#allocation2 + $0x20] sm:$0xff]
    %v89 = vld [vmem:[#allocation2 + $0x28] sm:$0xff]
    %v90 = vld [vmem:[#allocation2 + $0x30] sm:$0xff]
    %v91 = vld [vmem:[#allocation2 + $0x38] sm:$0xff]
    %v92 = vld [vmem:[#allocation2 + $0x40] sm:$0xff]
    %v93 = vld [vmem:[#allocation2 + $0x48] sm:$0xff]
    %v94 = vld [vmem:[#allocation2 + $0x50] sm:$0xff]
    %v95 = vld [vmem:[#allocation2 + $0x58] sm:$0xff]
    %v96 = vld [vmem:[#allocation2 + $0x60] sm:$0xff]
    %v97 = vld [vmem:[#allocation2 + $0x68] sm:$0xff]
    %v98 = vld [vmem:[#allocation2 + $0x70] sm:$0xff]
    %v99 = vld [vmem:[#allocation2 + $0x78] sm:$0xff]
    %v100 = vld [vmem:[#allocation2 + $0x80] sm:$0xff]
    %v101 = vld [vmem:[#allocation2 + $0x88] sm:$0xff]
    %v102 = vld [vmem:[#allocation2 + $0x90] sm:$0xff]
    %v103 = vld [vmem:[#allocation2 + $0x98] sm:$0xff]
    %v104 = vld [vmem:[#allocation2 + $0xa0] sm:$0xff]
    %v105 = vld [vmem:[#allocation2 + $0xa8] sm:$0xff]
    %v106 = vld [vmem:[#allocation2 + $0xb0] sm:$0xff]
    %v107 = vld [vmem:[#allocation2 + $0xb8] sm:$0xff]
    %v108 = vpack.c.bf16 %v84, %v84
    %v109 = vpack.c.bf16 %v85, %v85
    %v110 = vpack.c.bf16 %v86, %v86
    %v111 = vpack.c.bf16 %v87, %v87
    %v112 = vpack.c.bf16 %v88, %v88
    %v113 = vpack.c.bf16 %v89, %v89
    %v114 = vpack.c.bf16 %v90, %v90
    %v115 = vpack.c.bf16 %v91, %v91
    %v116 = vpack.c.bf16 %v92, %v92
    %v117 = vpack.c.bf16 %v93, %v93
    %v118 = vpack.c.bf16 %v94, %v94
    %v119 = vpack.c.bf16 %v95, %v95
    %v120 = vpack.c.bf16 %v96, %v96
    %v121 = vpack.c.bf16 %v97, %v97
    %v122 = vpack.c.bf16 %v98, %v98
    %v123 = vpack.c.bf16 %v99, %v99
    %v124 = vpack.c.bf16 %v100, %v100
    %v125 = vpack.c.bf16 %v101, %v101
    %v126 = vpack.c.bf16 %v102, %v102
    %v127 = vpack.c.bf16 %v103, %v103
    %v128 = vpack.c.bf16 %v104, %v104
    %v129 = vpack.c.bf16 %v105, %v105
    %v130 = vpack.c.bf16 %v106, %v106
    %v131 = vpack.c.bf16 %v107, %v107
    %v132 = vld [vmem:[#allocation5] sm:$0xff]
    %v133 = vld [vmem:[#allocation5 + $0x8] sm:$0xff]
    %v134 = vld [vmem:[#allocation5 + $0x10] sm:$0xff]
    %v135 = vld [vmem:[#allocation5 + $0x18] sm:$0xff]
    %v136 = vld [vmem:[#allocation5 + $0x20] sm:$0xff]
    %v137 = vld [vmem:[#allocation5 + $0x28] sm:$0xff]
    %v138 = vld [vmem:[#allocation5 + $0x30] sm:$0xff]
    %v139 = vld [vmem:[#allocation5 + $0x38] sm:$0xff]
    %v140 = vld [vmem:[#allocation5 + $0x40] sm:$0xff]
    %v141 = vld [vmem:[#allocation5 + $0x48] sm:$0xff]
    %v142 = vld [vmem:[#allocation5 + $0x50] sm:$0xff]
    %v143 = vld [vmem:[#allocation5 + $0x58] sm:$0xff]
    %v144 = vld [vmem:[#allocation5 + $0x60] sm:$0xff]
    %v145 = vld [vmem:[#allocation5 + $0x68] sm:$0xff]
    %v146 = vld [vmem:[#allocation5 + $0x70] sm:$0xff]
    %v147 = vld [vmem:[#allocation5 + $0x78] sm:$0xff]
    %v148 = vld [vmem:[#allocation5 + $0x80] sm:$0xff]
    %v149 = vld [vmem:[#allocation5 + $0x88] sm:$0xff]
    %v150 = vld [vmem:[#allocation5 + $0x90] sm:$0xff]
    %v151 = vld [vmem:[#allocation5 + $0x98] sm:$0xff]
    %v152 = vld [vmem:[#allocation5 + $0xa0] sm:$0xff]
    %v153 = vld [vmem:[#allocation5 + $0xa8] sm:$0xff]
    %v154 = vld [vmem:[#allocation5 + $0xb0] sm:$0xff]
    %v155 = vld [vmem:[#allocation5 + $0xb8] sm:$0xff]
    %v156 = vld [vmem:[#allocation5 + $0xc0] sm:$0xff]
    %v157 = vld [vmem:[#allocation5 + $0xc8] sm:$0xff]
    %v158 = vld [vmem:[#allocation5 + $0xd0] sm:$0xff]
    %v159 = vld [vmem:[#allocation5 + $0xd8] sm:$0xff]
    %v160 = vld [vmem:[#allocation5 + $0xe0] sm:$0xff]
    %v161 = vld [vmem:[#allocation5 + $0xe8] sm:$0xff]
    %v162 = vld [vmem:[#allocation5 + $0xf0] sm:$0xff]
    %v163 = vld [vmem:[#allocation5 + $0xf8] sm:$0xff]
    %v164 = vld [vmem:[#allocation5 + $0x100] sm:$0xff]
    %v165 = vld [vmem:[#allocation5 + $0x108] sm:$0xff]
    %v166 = vld [vmem:[#allocation5 + $0x110] sm:$0xff]
    %v167 = vld [vmem:[#allocation5 + $0x118] sm:$0xff]
    %v168 = vld [vmem:[#allocation5 + $0x120] sm:$0xff]
    %v169 = vld [vmem:[#allocation5 + $0x128] sm:$0xff]
    %v170 = vld [vmem:[#allocation5 + $0x130] sm:$0xff]
    %v171 = vld [vmem:[#allocation5 + $0x138] sm:$0xff]
    %v172 = vld [vmem:[#allocation5 + $0x140] sm:$0xff]
    %v173 = vld [vmem:[#allocation5 + $0x148] sm:$0xff]
    %v174 = vld [vmem:[#allocation5 + $0x150] sm:$0xff]
    %v175 = vld [vmem:[#allocation5 + $0x158] sm:$0xff]
    %v176 = vld [vmem:[#allocation5 + $0x160] sm:$0xff]
    %v177 = vld [vmem:[#allocation5 + $0x168] sm:$0xff]
    %v178 = vld [vmem:[#allocation5 + $0x170] sm:$0xff]
    %v179 = vld [vmem:[#allocation5 + $0x178] sm:$0xff]
    %v180 = vld [vmem:[#allocation5 + $0x180] sm:$0xff]
    %v181 = vld [vmem:[#allocation5 + $0x188] sm:$0xff]
    %v182 = vld [vmem:[#allocation5 + $0x190] sm:$0xff]
    %v183 = vld [vmem:[#allocation5 + $0x198] sm:$0xff]
    %v184 = vld [vmem:[#allocation5 + $0x1a0] sm:$0xff]
    %v185 = vld [vmem:[#allocation5 + $0x1a8] sm:$0xff]
    %v186 = vld [vmem:[#allocation5 + $0x1b0] sm:$0xff]
    %v187 = vld [vmem:[#allocation5 + $0x1b8] sm:$0xff]
    %v188 = vld [vmem:[#allocation5 + $0x1c0] sm:$0xff]
    %v189 = vld [vmem:[#allocation5 + $0x1c8] sm:$0xff]
    %v190 = vld [vmem:[#allocation5 + $0x1d0] sm:$0xff]
    %v191 = vld [vmem:[#allocation5 + $0x1d8] sm:$0xff]
    %v192 = vld [vmem:[#allocation5 + $0x1e0] sm:$0xff]
    %v193 = vld [vmem:[#allocation5 + $0x1e8] sm:$0xff]
    %v194 = vld [vmem:[#allocation5 + $0x1f0] sm:$0xff]
    %v195 = vld [vmem:[#allocation5 + $0x1f8] sm:$0xff]
    %v196 = vld [vmem:[#allocation5 + $0x200] sm:$0xff]
    %v197 = vld [vmem:[#allocation5 + $0x208] sm:$0xff]
    %v198 = vld [vmem:[#allocation5 + $0x210] sm:$0xff]
    %v199 = vld [vmem:[#allocation5 + $0x218] sm:$0xff]
    %v200 = vld [vmem:[#allocation5 + $0x220] sm:$0xff]
    %v201 = vld [vmem:[#allocation5 + $0x228] sm:$0xff]
    %v202 = vld [vmem:[#allocation5 + $0x230] sm:$0xff]
    %v203 = vld [vmem:[#allocation5 + $0x238] sm:$0xff]
    %v204 = vld [vmem:[#allocation5 + $0x240] sm:$0xff]
    %v205 = vld [vmem:[#allocation5 + $0x248] sm:$0xff]
    %v206 = vld [vmem:[#allocation5 + $0x250] sm:$0xff]
    %v207 = vld [vmem:[#allocation5 + $0x258] sm:$0xff]
    %v208 = vld [vmem:[#allocation5 + $0x260] sm:$0xff]
    %v209 = vld [vmem:[#allocation5 + $0x268] sm:$0xff]
    %v210 = vld [vmem:[#allocation5 + $0x270] sm:$0xff]
    %v211 = vld [vmem:[#allocation5 + $0x278] sm:$0xff]
    %v212 = vld [vmem:[#allocation5 + $0x280] sm:$0xff]
    %v213 = vld [vmem:[#allocation5 + $0x288] sm:$0xff]
    %v214 = vld [vmem:[#allocation5 + $0x290] sm:$0xff]
    %v215 = vld [vmem:[#allocation5 + $0x298] sm:$0xff]
    %v216 = vld [vmem:[#allocation5 + $0x2a0] sm:$0xff]
    %v217 = vld [vmem:[#allocation5 + $0x2a8] sm:$0xff]
    %v218 = vld [vmem:[#allocation5 + $0x2b0] sm:$0xff]
    %v219 = vld [vmem:[#allocation5 + $0x2b8] sm:$0xff]
    %v220 = vld [vmem:[#allocation5 + $0x2c0] sm:$0xff]
    %v221 = vld [vmem:[#allocation5 + $0x2c8] sm:$0xff]
    %v222 = vld [vmem:[#allocation5 + $0x2d0] sm:$0xff]
    %v223 = vld [vmem:[#allocation5 + $0x2d8] sm:$0xff]
    %v224 = vld [vmem:[#allocation5 + $0x2e0] sm:$0xff]
    %v225 = vld [vmem:[#allocation5 + $0x2e8] sm:$0xff]
    %v226 = vld [vmem:[#allocation5 + $0x2f0] sm:$0xff]
    %v227 = vld [vmem:[#allocation5 + $0x2f8] sm:$0xff]
    %v228 = vld [vmem:[#allocation5 + $0x300] sm:$0xff]
    %v229 = vld [vmem:[#allocation5 + $0x308] sm:$0xff]
    %v230 = vld [vmem:[#allocation5 + $0x310] sm:$0xff]
    %v231 = vld [vmem:[#allocation5 + $0x318] sm:$0xff]
    %v232 = vld [vmem:[#allocation5 + $0x320] sm:$0xff]
    %v233 = vld [vmem:[#allocation5 + $0x328] sm:$0xff]
    %v234 = vld [vmem:[#allocation5 + $0x330] sm:$0xff]
    %v235 = vld [vmem:[#allocation5 + $0x338] sm:$0xff]
    %v236 = vld [vmem:[#allocation5 + $0x340] sm:$0xff]
    %v237 = vld [vmem:[#allocation5 + $0x348] sm:$0xff]
    %v238 = vld [vmem:[#allocation5 + $0x350] sm:$0xff]
    %v239 = vld [vmem:[#allocation5 + $0x358] sm:$0xff]
    %v240 = vld [vmem:[#allocation5 + $0x360] sm:$0xff]
    %v241 = vld [vmem:[#allocation5 + $0x368] sm:$0xff]
    %v242 = vld [vmem:[#allocation5 + $0x370] sm:$0xff]
    %v243 = vld [vmem:[#allocation5 + $0x378] sm:$0xff]
    %v244 = vld [vmem:[#allocation5 + $0x380] sm:$0xff]
    %v245 = vld [vmem:[#allocation5 + $0x388] sm:$0xff]
    %v246 = vld [vmem:[#allocation5 + $0x390] sm:$0xff]
    %v247 = vld [vmem:[#allocation5 + $0x398] sm:$0xff]
    %v248 = vld [vmem:[#allocation5 + $0x3a0] sm:$0xff]
    %v249 = vld [vmem:[#allocation5 + $0x3a8] sm:$0xff]
    %v250 = vld [vmem:[#allocation5 + $0x3b0] sm:$0xff]
    %v251 = vld [vmem:[#allocation5 + $0x3b8] sm:$0xff]
    %v252 = vld [vmem:[#allocation5 + $0x3c0] sm:$0xff]
    %v253 = vld [vmem:[#allocation5 + $0x3c8] sm:$0xff]
    %v254 = vld [vmem:[#allocation5 + $0x3d0] sm:$0xff]
    %v255 = vld [vmem:[#allocation5 + $0x3d8] sm:$0xff]
    %v256 = vld [vmem:[#allocation5 + $0x3e0] sm:$0xff]
    %v257 = vld [vmem:[#allocation5 + $0x3e8] sm:$0xff]
    %v258 = vld [vmem:[#allocation5 + $0x3f0] sm:$0xff]
    %v259 = vld [vmem:[#allocation5 + $0x3f8] sm:$0xff]
    %v260 = vld [vmem:[#allocation5 + $0x400] sm:$0xff]
    %v261 = vld [vmem:[#allocation5 + $0x408] sm:$0xff]
    %v262 = vld [vmem:[#allocation5 + $0x410] sm:$0xff]
    %v263 = vld [vmem:[#allocation5 + $0x418] sm:$0xff]
    %v264 = vld [vmem:[#allocation5 + $0x420] sm:$0xff]
    %v265 = vld [vmem:[#allocation5 + $0x428] sm:$0xff]
    %v266 = vld [vmem:[#allocation5 + $0x430] sm:$0xff]
    %v267 = vld [vmem:[#allocation5 + $0x438] sm:$0xff]
    %v268 = vld [vmem:[#allocation5 + $0x440] sm:$0xff]
    %v269 = vld [vmem:[#allocation5 + $0x448] sm:$0xff]
    %v270 = vld [vmem:[#allocation5 + $0x450] sm:$0xff]
    %v271 = vld [vmem:[#allocation5 + $0x458] sm:$0xff]
    %v272 = vld [vmem:[#allocation5 + $0x460] sm:$0xff]
    %v273 = vld [vmem:[#allocation5 + $0x468] sm:$0xff]
    %v274 = vld [vmem:[#allocation5 + $0x470] sm:$0xff]
    %v275 = vld [vmem:[#allocation5 + $0x478] sm:$0xff]
    %v276 = vld [vmem:[#allocation5 + $0x480] sm:$0xff]
    %v277 = vld [vmem:[#allocation5 + $0x488] sm:$0xff]
    %v278 = vld [vmem:[#allocation5 + $0x490] sm:$0xff]
    %v279 = vld [vmem:[#allocation5 + $0x498] sm:$0xff]
    %v280 = vld [vmem:[#allocation5 + $0x4a0] sm:$0xff]
    %v281 = vld [vmem:[#allocation5 + $0x4a8] sm:$0xff]
    %v282 = vld [vmem:[#allocation5 + $0x4b0] sm:$0xff]
    %v283 = vld [vmem:[#allocation5 + $0x4b8] sm:$0xff]
    %v284 = vld [vmem:[#allocation5 + $0x4c0] sm:$0xff]
    %v285 = vld [vmem:[#allocation5 + $0x4c8] sm:$0xff]
    %v286 = vld [vmem:[#allocation5 + $0x4d0] sm:$0xff]
    %v287 = vld [vmem:[#allocation5 + $0x4d8] sm:$0xff]
    %v288 = vld [vmem:[#allocation5 + $0x4e0] sm:$0xff]
    %v289 = vld [vmem:[#allocation5 + $0x4e8] sm:$0xff]
    %v290 = vld [vmem:[#allocation5 + $0x4f0] sm:$0xff]
    %v291 = vld [vmem:[#allocation5 + $0x4f8] sm:$0xff]
    %v292 = vld [vmem:[#allocation5 + $0x500] sm:$0xff]
    %v293 = vld [vmem:[#allocation5 + $0x508] sm:$0xff]
    %v294 = vld [vmem:[#allocation5 + $0x510] sm:$0xff]
    %v295 = vld [vmem:[#allocation5 + $0x518] sm:$0xff]
    %v296 = vld [vmem:[#allocation5 + $0x520] sm:$0xff]
    %v297 = vld [vmem:[#allocation5 + $0x528] sm:$0xff]
    %v298 = vld [vmem:[#allocation5 + $0x530] sm:$0xff]
    %v299 = vld [vmem:[#allocation5 + $0x538] sm:$0xff]
    %v300 = vld [vmem:[#allocation5 + $0x540] sm:$0xff]
    %v301 = vld [vmem:[#allocation5 + $0x548] sm:$0xff]
    %v302 = vld [vmem:[#allocation5 + $0x550] sm:$0xff]
    %v303 = vld [vmem:[#allocation5 + $0x558] sm:$0xff]
    %v304 = vld [vmem:[#allocation5 + $0x560] sm:$0xff]
    %v305 = vld [vmem:[#allocation5 + $0x568] sm:$0xff]
    %v306 = vld [vmem:[#allocation5 + $0x570] sm:$0xff]
    %v307 = vld [vmem:[#allocation5 + $0x578] sm:$0xff]
    %v308 = vld [vmem:[#allocation5 + $0x580] sm:$0xff]
    %v309 = vld [vmem:[#allocation5 + $0x588] sm:$0xff]
    %v310 = vld [vmem:[#allocation5 + $0x590] sm:$0xff]
    %v311 = vld [vmem:[#allocation5 + $0x598] sm:$0xff]
    %v312 = vld [vmem:[#allocation5 + $0x5a0] sm:$0xff]
    %v313 = vld [vmem:[#allocation5 + $0x5a8] sm:$0xff]
    %v314 = vld [vmem:[#allocation5 + $0x5b0] sm:$0xff]
    %v315 = vld [vmem:[#allocation5 + $0x5b8] sm:$0xff]
    %v316 = vld [vmem:[#allocation5 + $0x5c0] sm:$0xff]
    %v317 = vld [vmem:[#allocation5 + $0x5c8] sm:$0xff]
    %v318 = vld [vmem:[#allocation5 + $0x5d0] sm:$0xff]
    %v319 = vld [vmem:[#allocation5 + $0x5d8] sm:$0xff]
    %v320 = vld [vmem:[#allocation5 + $0x5e0] sm:$0xff]
    %v321 = vld [vmem:[#allocation5 + $0x5e8] sm:$0xff]
    %v322 = vld [vmem:[#allocation5 + $0x5f0] sm:$0xff]
    %v323 = vld [vmem:[#allocation5 + $0x5f8] sm:$0xff]
    %v324 = vld [vmem:[#allocation5 + $0x600] sm:$0xff]
    %v325 = vld [vmem:[#allocation5 + $0x608] sm:$0xff]
    %v326 = vld [vmem:[#allocation5 + $0x610] sm:$0xff]
    %v327 = vld [vmem:[#allocation5 + $0x618] sm:$0xff]
    %v328 = vld [vmem:[#allocation5 + $0x620] sm:$0xff]
    %v329 = vld [vmem:[#allocation5 + $0x628] sm:$0xff]
    %v330 = vld [vmem:[#allocation5 + $0x630] sm:$0xff]
    %v331 = vld [vmem:[#allocation5 + $0x638] sm:$0xff]
    %v332 = vld [vmem:[#allocation5 + $0x640] sm:$0xff]
    %v333 = vld [vmem:[#allocation5 + $0x648] sm:$0xff]
    %v334 = vld [vmem:[#allocation5 + $0x650] sm:$0xff]
    %v335 = vld [vmem:[#allocation5 + $0x658] sm:$0xff]
    %v336 = vld [vmem:[#allocation5 + $0x660] sm:$0xff]
    %v337 = vld [vmem:[#allocation5 + $0x668] sm:$0xff]
    %v338 = vld [vmem:[#allocation5 + $0x670] sm:$0xff]
    %v339 = vld [vmem:[#allocation5 + $0x678] sm:$0xff]
    %v340 = vld [vmem:[#allocation5 + $0x680] sm:$0xff]
    %v341 = vld [vmem:[#allocation5 + $0x688] sm:$0xff]
    %v342 = vld [vmem:[#allocation5 + $0x690] sm:$0xff]
    %v343 = vld [vmem:[#allocation5 + $0x698] sm:$0xff]
    %v344 = vld [vmem:[#allocation5 + $0x6a0] sm:$0xff]
    %v345 = vld [vmem:[#allocation5 + $0x6a8] sm:$0xff]
    %v346 = vld [vmem:[#allocation5 + $0x6b0] sm:$0xff]
    %v347 = vld [vmem:[#allocation5 + $0x6b8] sm:$0xff]
    %v348 = vld [vmem:[#allocation5 + $0x6c0] sm:$0xff]
    %v349 = vld [vmem:[#allocation5 + $0x6c8] sm:$0xff]
    %v350 = vld [vmem:[#allocation5 + $0x6d0] sm:$0xff]
    %v351 = vld [vmem:[#allocation5 + $0x6d8] sm:$0xff]
    %v352 = vld [vmem:[#allocation5 + $0x6e0] sm:$0xff]
    %v353 = vld [vmem:[#allocation5 + $0x6e8] sm:$0xff]
    %v354 = vld [vmem:[#allocation5 + $0x6f0] sm:$0xff]
    %v355 = vld [vmem:[#allocation5 + $0x6f8] sm:$0xff]
    %v356 = vld [vmem:[#allocation5 + $0x700] sm:$0xff]
    %v357 = vld [vmem:[#allocation5 + $0x708] sm:$0xff]
    %v358 = vld [vmem:[#allocation5 + $0x710] sm:$0xff]
    %v359 = vld [vmem:[#allocation5 + $0x718] sm:$0xff]
    %v360 = vld [vmem:[#allocation5 + $0x720] sm:$0xff]
    %v361 = vld [vmem:[#allocation5 + $0x728] sm:$0xff]
    %v362 = vld [vmem:[#allocation5 + $0x730] sm:$0xff]
    %v363 = vld [vmem:[#allocation5 + $0x738] sm:$0xff]
    %v364 = vld [vmem:[#allocation5 + $0x740] sm:$0xff]
    %v365 = vld [vmem:[#allocation5 + $0x748] sm:$0xff]
    %v366 = vld [vmem:[#allocation5 + $0x750] sm:$0xff]
    %v367 = vld [vmem:[#allocation5 + $0x758] sm:$0xff]
    %v368 = vld [vmem:[#allocation5 + $0x760] sm:$0xff]
    %v369 = vld [vmem:[#allocation5 + $0x768] sm:$0xff]
    %v370 = vld [vmem:[#allocation5 + $0x770] sm:$0xff]
    %v371 = vld [vmem:[#allocation5 + $0x778] sm:$0xff]
    %v372 = vld [vmem:[#allocation5 + $0x780] sm:$0xff]
    %v373 = vld [vmem:[#allocation5 + $0x788] sm:$0xff]
    %v374 = vld [vmem:[#allocation5 + $0x790] sm:$0xff]
    %v375 = vld [vmem:[#allocation5 + $0x798] sm:$0xff]
    %v376 = vld [vmem:[#allocation5 + $0x7a0] sm:$0xff]
    %v377 = vld [vmem:[#allocation5 + $0x7a8] sm:$0xff]
    %v378 = vld [vmem:[#allocation5 + $0x7b0] sm:$0xff]
    %v379 = vld [vmem:[#allocation5 + $0x7b8] sm:$0xff]
    %v380 = vld [vmem:[#allocation5 + $0x7c0] sm:$0xff]
    %v381 = vld [vmem:[#allocation5 + $0x7c8] sm:$0xff]
    %v382 = vld [vmem:[#allocation5 + $0x7d0] sm:$0xff]
    %v383 = vld [vmem:[#allocation5 + $0x7d8] sm:$0xff]
    %v384 = vld [vmem:[#allocation5 + $0x7e0] sm:$0xff]
    %v385 = vld [vmem:[#allocation5 + $0x7e8] sm:$0xff]
    %v386 = vld [vmem:[#allocation5 + $0x7f0] sm:$0xff]
    %v387 = vld [vmem:[#allocation5 + $0x7f8] sm:$0xff]
    %v388 = vld [vmem:[#allocation5 + $0x800] sm:$0xff]
    %v389 = vld [vmem:[#allocation5 + $0x808] sm:$0xff]
    %v390 = vld [vmem:[#allocation5 + $0x810] sm:$0xff]
    %v391 = vld [vmem:[#allocation5 + $0x818] sm:$0xff]
    %v392 = vld [vmem:[#allocation5 + $0x820] sm:$0xff]
    %v393 = vld [vmem:[#allocation5 + $0x828] sm:$0xff]
    %v394 = vld [vmem:[#allocation5 + $0x830] sm:$0xff]
    %v395 = vld [vmem:[#allocation5 + $0x838] sm:$0xff]
    %v396 = vld [vmem:[#allocation5 + $0x840] sm:$0xff]
    %v397 = vld [vmem:[#allocation5 + $0x848] sm:$0xff]
    %v398 = vld [vmem:[#allocation5 + $0x850] sm:$0xff]
    %v399 = vld [vmem:[#allocation5 + $0x858] sm:$0xff]
    %v400 = vld [vmem:[#allocation5 + $0x860] sm:$0xff]
    %v401 = vld [vmem:[#allocation5 + $0x868] sm:$0xff]
    %v402 = vld [vmem:[#allocation5 + $0x870] sm:$0xff]
    %v403 = vld [vmem:[#allocation5 + $0x878] sm:$0xff]
    %v404 = vld [vmem:[#allocation5 + $0x880] sm:$0xff]
    %v405 = vld [vmem:[#allocation5 + $0x888] sm:$0xff]
    %v406 = vld [vmem:[#allocation5 + $0x890] sm:$0xff]
    %v407 = vld [vmem:[#allocation5 + $0x898] sm:$0xff]
    %v408 = vld [vmem:[#allocation5 + $0x8a0] sm:$0xff]
    %v409 = vld [vmem:[#allocation5 + $0x8a8] sm:$0xff]
    %v410 = vld [vmem:[#allocation5 + $0x8b0] sm:$0xff]
    %v411 = vld [vmem:[#allocation5 + $0x8b8] sm:$0xff]
    %v412 = vld [vmem:[#allocation5 + $0x8c0] sm:$0xff]
    %v413 = vld [vmem:[#allocation5 + $0x8c8] sm:$0xff]
    %v414 = vld [vmem:[#allocation5 + $0x8d0] sm:$0xff]
    %v415 = vld [vmem:[#allocation5 + $0x8d8] sm:$0xff]
    %v416 = vld [vmem:[#allocation5 + $0x8e0] sm:$0xff]
    %v417 = vld [vmem:[#allocation5 + $0x8e8] sm:$0xff]
    %v418 = vld [vmem:[#allocation5 + $0x8f0] sm:$0xff]
    %v419 = vld [vmem:[#allocation5 + $0x8f8] sm:$0xff]
    %v420 = vld [vmem:[#allocation5 + $0x900] sm:$0xff]
    %v421 = vld [vmem:[#allocation5 + $0x908] sm:$0xff]
    %v422 = vld [vmem:[#allocation5 + $0x910] sm:$0xff]
    %v423 = vld [vmem:[#allocation5 + $0x918] sm:$0xff]
    %v424 = vld [vmem:[#allocation5 + $0x920] sm:$0xff]
    %v425 = vld [vmem:[#allocation5 + $0x928] sm:$0xff]
    %v426 = vld [vmem:[#allocation5 + $0x930] sm:$0xff]
    %v427 = vld [vmem:[#allocation5 + $0x938] sm:$0xff]
    %v428 = vld [vmem:[#allocation5 + $0x940] sm:$0xff]
    %v429 = vld [vmem:[#allocation5 + $0x948] sm:$0xff]
    %v430 = vld [vmem:[#allocation5 + $0x950] sm:$0xff]
    %v431 = vld [vmem:[#allocation5 + $0x958] sm:$0xff]
    %v432 = vld [vmem:[#allocation5 + $0x960] sm:$0xff]
    %v433 = vld [vmem:[#allocation5 + $0x968] sm:$0xff]
    %v434 = vld [vmem:[#allocation5 + $0x970] sm:$0xff]
    %v435 = vld [vmem:[#allocation5 + $0x978] sm:$0xff]
    %v436 = vld [vmem:[#allocation5 + $0x980] sm:$0xff]
    %v437 = vld [vmem:[#allocation5 + $0x988] sm:$0xff]
    %v438 = vld [vmem:[#allocation5 + $0x990] sm:$0xff]
    %v439 = vld [vmem:[#allocation5 + $0x998] sm:$0xff]
    %v440 = vld [vmem:[#allocation5 + $0x9a0] sm:$0xff]
    %v441 = vld [vmem:[#allocation5 + $0x9a8] sm:$0xff]
    %v442 = vld [vmem:[#allocation5 + $0x9b0] sm:$0xff]
    %v443 = vld [vmem:[#allocation5 + $0x9b8] sm:$0xff]
    %v444 = vld [vmem:[#allocation5 + $0x9c0] sm:$0xff]
    %v445 = vld [vmem:[#allocation5 + $0x9c8] sm:$0xff]
    %v446 = vld [vmem:[#allocation5 + $0x9d0] sm:$0xff]
    %v447 = vld [vmem:[#allocation5 + $0x9d8] sm:$0xff]
    %v448 = vld [vmem:[#allocation5 + $0x9e0] sm:$0xff]
    %v449 = vld [vmem:[#allocation5 + $0x9e8] sm:$0xff]
    %v450 = vld [vmem:[#allocation5 + $0x9f0] sm:$0xff]
    %v451 = vld [vmem:[#allocation5 + $0x9f8] sm:$0xff]
    %v452 = vld [vmem:[#allocation5 + $0xa00] sm:$0xff]
    %v453 = vld [vmem:[#allocation5 + $0xa08] sm:$0xff]
    %v454 = vld [vmem:[#allocation5 + $0xa10] sm:$0xff]
    %v455 = vld [vmem:[#allocation5 + $0xa18] sm:$0xff]
    %v456 = vld [vmem:[#allocation5 + $0xa20] sm:$0xff]
    %v457 = vld [vmem:[#allocation5 + $0xa28] sm:$0xff]
    %v458 = vld [vmem:[#allocation5 + $0xa30] sm:$0xff]
    %v459 = vld [vmem:[#allocation5 + $0xa38] sm:$0xff]
    %v460 = vld [vmem:[#allocation5 + $0xa40] sm:$0xff]
    %v461 = vld [vmem:[#allocation5 + $0xa48] sm:$0xff]
    %v462 = vld [vmem:[#allocation5 + $0xa50] sm:$0xff]
    %v463 = vld [vmem:[#allocation5 + $0xa58] sm:$0xff]
    %v464 = vld [vmem:[#allocation5 + $0xa60] sm:$0xff]
    %v465 = vld [vmem:[#allocation5 + $0xa68] sm:$0xff]
    %v466 = vld [vmem:[#allocation5 + $0xa70] sm:$0xff]
    %v467 = vld [vmem:[#allocation5 + $0xa78] sm:$0xff]
    %v468 = vld [vmem:[#allocation5 + $0xa80] sm:$0xff]
    %v469 = vld [vmem:[#allocation5 + $0xa88] sm:$0xff]
    %v470 = vld [vmem:[#allocation5 + $0xa90] sm:$0xff]
    %v471 = vld [vmem:[#allocation5 + $0xa98] sm:$0xff]
    %v472 = vld [vmem:[#allocation5 + $0xaa0] sm:$0xff]
    %v473 = vld [vmem:[#allocation5 + $0xaa8] sm:$0xff]
    %v474 = vld [vmem:[#allocation5 + $0xab0] sm:$0xff]
    %v475 = vld [vmem:[#allocation5 + $0xab8] sm:$0xff]
    %v476 = vld [vmem:[#allocation5 + $0xac0] sm:$0xff]
    %v477 = vld [vmem:[#allocation5 + $0xac8] sm:$0xff]
    %v478 = vld [vmem:[#allocation5 + $0xad0] sm:$0xff]
    %v479 = vld [vmem:[#allocation5 + $0xad8] sm:$0xff]
    %v480 = vld [vmem:[#allocation5 + $0xae0] sm:$0xff]
    %v481 = vld [vmem:[#allocation5 + $0xae8] sm:$0xff]
    %v482 = vld [vmem:[#allocation5 + $0xaf0] sm:$0xff]
    %v483 = vld [vmem:[#allocation5 + $0xaf8] sm:$0xff]
    %v484 = vld [vmem:[#allocation5 + $0xb00] sm:$0xff]
    %v485 = vld [vmem:[#allocation5 + $0xb08] sm:$0xff]
    %v486 = vld [vmem:[#allocation5 + $0xb10] sm:$0xff]
    %v487 = vld [vmem:[#allocation5 + $0xb18] sm:$0xff]
    %v488 = vld [vmem:[#allocation5 + $0xb20] sm:$0xff]
    %v489 = vld [vmem:[#allocation5 + $0xb28] sm:$0xff]
    %v490 = vld [vmem:[#allocation5 + $0xb30] sm:$0xff]
    %v491 = vld [vmem:[#allocation5 + $0xb38] sm:$0xff]
    %v492 = vld [vmem:[#allocation5 + $0xb40] sm:$0xff]
    %v493 = vld [vmem:[#allocation5 + $0xb48] sm:$0xff]
    %v494 = vld [vmem:[#allocation5 + $0xb50] sm:$0xff]
    %v495 = vld [vmem:[#allocation5 + $0xb58] sm:$0xff]
    %v496 = vld [vmem:[#allocation5 + $0xb60] sm:$0xff]
    %v497 = vld [vmem:[#allocation5 + $0xb68] sm:$0xff]
    %v498 = vld [vmem:[#allocation5 + $0xb70] sm:$0xff]
    %v499 = vld [vmem:[#allocation5 + $0xb78] sm:$0xff]
    %v500 = vld [vmem:[#allocation5 + $0xb80] sm:$0xff]
    %v501 = vld [vmem:[#allocation5 + $0xb88] sm:$0xff]
    %v502 = vld [vmem:[#allocation5 + $0xb90] sm:$0xff]
    %v503 = vld [vmem:[#allocation5 + $0xb98] sm:$0xff]
    %v504 = vld [vmem:[#allocation5 + $0xba0] sm:$0xff]
    %v505 = vld [vmem:[#allocation5 + $0xba8] sm:$0xff]
    %v506 = vld [vmem:[#allocation5 + $0xbb0] sm:$0xff]
    %v507 = vld [vmem:[#allocation5 + $0xbb8] sm:$0xff]
    %v508 = vld [vmem:[#allocation5 + $0xbc0] sm:$0xff]
    %v509 = vld [vmem:[#allocation5 + $0xbc8] sm:$0xff]
    %v510 = vld [vmem:[#allocation5 + $0xbd0] sm:$0xff]
    %v511 = vld [vmem:[#allocation5 + $0xbd8] sm:$0xff]
    %v512 = vld [vmem:[#allocation5 + $0xbe0] sm:$0xff]
    %v513 = vld [vmem:[#allocation5 + $0xbe8] sm:$0xff]
    %v514 = vld [vmem:[#allocation5 + $0xbf0] sm:$0xff]
    %v515 = vld [vmem:[#allocation5 + $0xbf8] sm:$0xff]
    %v516 = vld [vmem:[#allocation5 + $0xc00] sm:$0xff]
    %v517 = vld [vmem:[#allocation5 + $0xc08] sm:$0xff]
    %v518 = vld [vmem:[#allocation5 + $0xc10] sm:$0xff]
    %v519 = vld [vmem:[#allocation5 + $0xc18] sm:$0xff]
    %v520 = vld [vmem:[#allocation5 + $0xc20] sm:$0xff]
    %v521 = vld [vmem:[#allocation5 + $0xc28] sm:$0xff]
    %v522 = vld [vmem:[#allocation5 + $0xc30] sm:$0xff]
    %v523 = vld [vmem:[#allocation5 + $0xc38] sm:$0xff]
    %v524 = vld [vmem:[#allocation5 + $0xc40] sm:$0xff]
    %v525 = vld [vmem:[#allocation5 + $0xc48] sm:$0xff]
    %v526 = vld [vmem:[#allocation5 + $0xc50] sm:$0xff]
    %v527 = vld [vmem:[#allocation5 + $0xc58] sm:$0xff]
    %v528 = vld [vmem:[#allocation5 + $0xc60] sm:$0xff]
    %v529 = vld [vmem:[#allocation5 + $0xc68] sm:$0xff]
    %v530 = vld [vmem:[#allocation5 + $0xc70] sm:$0xff]
    %v531 = vld [vmem:[#allocation5 + $0xc78] sm:$0xff]
    %v532 = vld [vmem:[#allocation5 + $0xc80] sm:$0xff]
    %v533 = vld [vmem:[#allocation5 + $0xc88] sm:$0xff]
    %v534 = vld [vmem:[#allocation5 + $0xc90] sm:$0xff]
    %v535 = vld [vmem:[#allocation5 + $0xc98] sm:$0xff]
    %v536 = vld [vmem:[#allocation5 + $0xca0] sm:$0xff]
    %v537 = vld [vmem:[#allocation5 + $0xca8] sm:$0xff]
    %v538 = vld [vmem:[#allocation5 + $0xcb0] sm:$0xff]
    %v539 = vld [vmem:[#allocation5 + $0xcb8] sm:$0xff]
    %v540 = vld [vmem:[#allocation5 + $0xcc0] sm:$0xff]
    %v541 = vld [vmem:[#allocation5 + $0xcc8] sm:$0xff]
    %v542 = vld [vmem:[#allocation5 + $0xcd0] sm:$0xff]
    %v543 = vld [vmem:[#allocation5 + $0xcd8] sm:$0xff]
    %v544 = vld [vmem:[#allocation5 + $0xce0] sm:$0xff]
    %v545 = vld [vmem:[#allocation5 + $0xce8] sm:$0xff]
    %v546 = vld [vmem:[#allocation5 + $0xcf0] sm:$0xff]
    %v547 = vld [vmem:[#allocation5 + $0xcf8] sm:$0xff]
    %v548 = vld [vmem:[#allocation5 + $0xd00] sm:$0xff]
    %v549 = vld [vmem:[#allocation5 + $0xd08] sm:$0xff]
    %v550 = vld [vmem:[#allocation5 + $0xd10] sm:$0xff]
    %v551 = vld [vmem:[#allocation5 + $0xd18] sm:$0xff]
    %v552 = vld [vmem:[#allocation5 + $0xd20] sm:$0xff]
    %v553 = vld [vmem:[#allocation5 + $0xd28] sm:$0xff]
    %v554 = vld [vmem:[#allocation5 + $0xd30] sm:$0xff]
    %v555 = vld [vmem:[#allocation5 + $0xd38] sm:$0xff]
    %v556 = vld [vmem:[#allocation5 + $0xd40] sm:$0xff]
    %v557 = vld [vmem:[#allocation5 + $0xd48] sm:$0xff]
    %v558 = vld [vmem:[#allocation5 + $0xd50] sm:$0xff]
    %v559 = vld [vmem:[#allocation5 + $0xd58] sm:$0xff]
    %v560 = vld [vmem:[#allocation5 + $0xd60] sm:$0xff]
    %v561 = vld [vmem:[#allocation5 + $0xd68] sm:$0xff]
    %v562 = vld [vmem:[#allocation5 + $0xd70] sm:$0xff]
    %v563 = vld [vmem:[#allocation5 + $0xd78] sm:$0xff]
    %v564 = vld [vmem:[#allocation5 + $0xd80] sm:$0xff]
    %v565 = vld [vmem:[#allocation5 + $0xd88] sm:$0xff]
    %v566 = vld [vmem:[#allocation5 + $0xd90] sm:$0xff]
    %v567 = vld [vmem:[#allocation5 + $0xd98] sm:$0xff]
    %v568 = vld [vmem:[#allocation5 + $0xda0] sm:$0xff]
    %v569 = vld [vmem:[#allocation5 + $0xda8] sm:$0xff]
    %v570 = vld [vmem:[#allocation5 + $0xdb0] sm:$0xff]
    %v571 = vld [vmem:[#allocation5 + $0xdb8] sm:$0xff]
    %v572 = vld [vmem:[#allocation5 + $0xdc0] sm:$0xff]
    %v573 = vld [vmem:[#allocation5 + $0xdc8] sm:$0xff]
    %v574 = vld [vmem:[#allocation5 + $0xdd0] sm:$0xff]
    %v575 = vld [vmem:[#allocation5 + $0xdd8] sm:$0xff]
    %v576 = vld [vmem:[#allocation5 + $0xde0] sm:$0xff]
    %v577 = vld [vmem:[#allocation5 + $0xde8] sm:$0xff]
    %v578 = vld [vmem:[#allocation5 + $0xdf0] sm:$0xff]
    %v579 = vld [vmem:[#allocation5 + $0xdf8] sm:$0xff]
    %v580 = vld [vmem:[#allocation5 + $0xe00] sm:$0xff]
    %v581 = vld [vmem:[#allocation5 + $0xe08] sm:$0xff]
    %v582 = vld [vmem:[#allocation5 + $0xe10] sm:$0xff]
    %v583 = vld [vmem:[#allocation5 + $0xe18] sm:$0xff]
    %v584 = vld [vmem:[#allocation5 + $0xe20] sm:$0xff]
    %v585 = vld [vmem:[#allocation5 + $0xe28] sm:$0xff]
    %v586 = vld [vmem:[#allocation5 + $0xe30] sm:$0xff]
    %v587 = vld [vmem:[#allocation5 + $0xe38] sm:$0xff]
    %v588 = vld [vmem:[#allocation5 + $0xe40] sm:$0xff]
    %v589 = vld [vmem:[#allocation5 + $0xe48] sm:$0xff]
    %v590 = vld [vmem:[#allocation5 + $0xe50] sm:$0xff]
    %v591 = vld [vmem:[#allocation5 + $0xe58] sm:$0xff]
    %v592 = vld [vmem:[#allocation5 + $0xe60] sm:$0xff]
    %v593 = vld [vmem:[#allocation5 + $0xe68] sm:$0xff]
    %v594 = vld [vmem:[#allocation5 + $0xe70] sm:$0xff]
    %v595 = vld [vmem:[#allocation5 + $0xe78] sm:$0xff]
    %v596 = vld [vmem:[#allocation5 + $0xe80] sm:$0xff]
    %v597 = vld [vmem:[#allocation5 + $0xe88] sm:$0xff]
    %v598 = vld [vmem:[#allocation5 + $0xe90] sm:$0xff]
    %v599 = vld [vmem:[#allocation5 + $0xe98] sm:$0xff]
    %v600 = vld [vmem:[#allocation5 + $0xea0] sm:$0xff]
    %v601 = vld [vmem:[#allocation5 + $0xea8] sm:$0xff]
    %v602 = vld [vmem:[#allocation5 + $0xeb0] sm:$0xff]
    %v603 = vld [vmem:[#allocation5 + $0xeb8] sm:$0xff]
    %v604 = vld [vmem:[#allocation5 + $0xec0] sm:$0xff]
    %v605 = vld [vmem:[#allocation5 + $0xec8] sm:$0xff]
    %v606 = vld [vmem:[#allocation5 + $0xed0] sm:$0xff]
    %v607 = vld [vmem:[#allocation5 + $0xed8] sm:$0xff]
    %v608 = vld [vmem:[#allocation5 + $0xee0] sm:$0xff]
    %v609 = vld [vmem:[#allocation5 + $0xee8] sm:$0xff]
    %v610 = vld [vmem:[#allocation5 + $0xef0] sm:$0xff]
    %v611 = vld [vmem:[#allocation5 + $0xef8] sm:$0xff]
    %v612 = vld [vmem:[#allocation5 + $0xf00] sm:$0xff]
    %v613 = vld [vmem:[#allocation5 + $0xf08] sm:$0xff]
    %v614 = vld [vmem:[#allocation5 + $0xf10] sm:$0xff]
    %v615 = vld [vmem:[#allocation5 + $0xf18] sm:$0xff]
    %v616 = vld [vmem:[#allocation5 + $0xf20] sm:$0xff]
    %v617 = vld [vmem:[#allocation5 + $0xf28] sm:$0xff]
    %v618 = vld [vmem:[#allocation5 + $0xf30] sm:$0xff]
    %v619 = vld [vmem:[#allocation5 + $0xf38] sm:$0xff]
    %v620 = vld [vmem:[#allocation5 + $0xf40] sm:$0xff]
    %v621 = vld [vmem:[#allocation5 + $0xf48] sm:$0xff]
    %v622 = vld [vmem:[#allocation5 + $0xf50] sm:$0xff]
    %v623 = vld [vmem:[#allocation5 + $0xf58] sm:$0xff]
    %v624 = vld [vmem:[#allocation5 + $0xf60] sm:$0xff]
    %v625 = vld [vmem:[#allocation5 + $0xf68] sm:$0xff]
    %v626 = vld [vmem:[#allocation5 + $0xf70] sm:$0xff]
    %v627 = vld [vmem:[#allocation5 + $0xf78] sm:$0xff]
    %v628 = vld [vmem:[#allocation5 + $0xf80] sm:$0xff]
    %v629 = vld [vmem:[#allocation5 + $0xf88] sm:$0xff]
    %v630 = vld [vmem:[#allocation5 + $0xf90] sm:$0xff]
    %v631 = vld [vmem:[#allocation5 + $0xf98] sm:$0xff]
    %v632 = vld [vmem:[#allocation5 + $0xfa0] sm:$0xff]
    %v633 = vld [vmem:[#allocation5 + $0xfa8] sm:$0xff]
    %v634 = vld [vmem:[#allocation5 + $0xfb0] sm:$0xff]
    %v635 = vld [vmem:[#allocation5 + $0xfb8] sm:$0xff]
    %v636 = vld [vmem:[#allocation5 + $0xfc0] sm:$0xff]
    %v637 = vld [vmem:[#allocation5 + $0xfc8] sm:$0xff]
    %v638 = vld [vmem:[#allocation5 + $0xfd0] sm:$0xff]
    %v639 = vld [vmem:[#allocation5 + $0xfd8] sm:$0xff]
    %v640 = vld [vmem:[#allocation5 + $0xfe0] sm:$0xff]
    %v641 = vld [vmem:[#allocation5 + $0xfe8] sm:$0xff]
    %v642 = vld [vmem:[#allocation5 + $0xff0] sm:$0xff]
    %v643 = vld [vmem:[#allocation5 + $0xff8] sm:$0xff]
    %v644 = vld [vmem:[#allocation5 + $0x1000] sm:$0xff]
    %v645 = vld [vmem:[#allocation5 + $0x1008] sm:$0xff]
    %v646 = vld [vmem:[#allocation5 + $0x1010] sm:$0xff]
    %v647 = vld [vmem:[#allocation5 + $0x1018] sm:$0xff]
    %v648 = vld [vmem:[#allocation5 + $0x1020] sm:$0xff]
    %v649 = vld [vmem:[#allocation5 + $0x1028] sm:$0xff]
    %v650 = vld [vmem:[#allocation5 + $0x1030] sm:$0xff]
    %v651 = vld [vmem:[#allocation5 + $0x1038] sm:$0xff]
    %v652 = vld [vmem:[#allocation5 + $0x1040] sm:$0xff]
    %v653 = vld [vmem:[#allocation5 + $0x1048] sm:$0xff]
    %v654 = vld [vmem:[#allocation5 + $0x1050] sm:$0xff]
    %v655 = vld [vmem:[#allocation5 + $0x1058] sm:$0xff]
    %v656 = vld [vmem:[#allocation5 + $0x1060] sm:$0xff]
    %v657 = vld [vmem:[#allocation5 + $0x1068] sm:$0xff]
    %v658 = vld [vmem:[#allocation5 + $0x1070] sm:$0xff]
    %v659 = vld [vmem:[#allocation5 + $0x1078] sm:$0xff]
    %v660 = vld [vmem:[#allocation5 + $0x1080] sm:$0xff]
    %v661 = vld [vmem:[#allocation5 + $0x1088] sm:$0xff]
    %v662 = vld [vmem:[#allocation5 + $0x1090] sm:$0xff]
    %v663 = vld [vmem:[#allocation5 + $0x1098] sm:$0xff]
    %v664 = vld [vmem:[#allocation5 + $0x10a0] sm:$0xff]
    %v665 = vld [vmem:[#allocation5 + $0x10a8] sm:$0xff]
    %v666 = vld [vmem:[#allocation5 + $0x10b0] sm:$0xff]
    %v667 = vld [vmem:[#allocation5 + $0x10b8] sm:$0xff]
    %v668 = vld [vmem:[#allocation5 + $0x10c0] sm:$0xff]
    %v669 = vld [vmem:[#allocation5 + $0x10c8] sm:$0xff]
    %v670 = vld [vmem:[#allocation5 + $0x10d0] sm:$0xff]
    %v671 = vld [vmem:[#allocation5 + $0x10d8] sm:$0xff]
    %v672 = vld [vmem:[#allocation5 + $0x10e0] sm:$0xff]
    %v673 = vld [vmem:[#allocation5 + $0x10e8] sm:$0xff]
    %v674 = vld [vmem:[#allocation5 + $0x10f0] sm:$0xff]
    %v675 = vld [vmem:[#allocation5 + $0x10f8] sm:$0xff]
    %v676 = vld [vmem:[#allocation5 + $0x1100] sm:$0xff]
    %v677 = vld [vmem:[#allocation5 + $0x1108] sm:$0xff]
    %v678 = vld [vmem:[#allocation5 + $0x1110] sm:$0xff]
    %v679 = vld [vmem:[#allocation5 + $0x1118] sm:$0xff]
    %v680 = vld [vmem:[#allocation5 + $0x1120] sm:$0xff]
    %v681 = vld [vmem:[#allocation5 + $0x1128] sm:$0xff]
    %v682 = vld [vmem:[#allocation5 + $0x1130] sm:$0xff]
    %v683 = vld [vmem:[#allocation5 + $0x1138] sm:$0xff]
    %v684 = vld [vmem:[#allocation5 + $0x1140] sm:$0xff]
    %v685 = vld [vmem:[#allocation5 + $0x1148] sm:$0xff]
    %v686 = vld [vmem:[#allocation5 + $0x1150] sm:$0xff]
    %v687 = vld [vmem:[#allocation5 + $0x1158] sm:$0xff]
    %v688 = vld [vmem:[#allocation5 + $0x1160] sm:$0xff]
    %v689 = vld [vmem:[#allocation5 + $0x1168] sm:$0xff]
    %v690 = vld [vmem:[#allocation5 + $0x1170] sm:$0xff]
    %v691 = vld [vmem:[#allocation5 + $0x1178] sm:$0xff]
    %v692 = vld [vmem:[#allocation5 + $0x1180] sm:$0xff]
    %v693 = vld [vmem:[#allocation5 + $0x1188] sm:$0xff]
    %v694 = vld [vmem:[#allocation5 + $0x1190] sm:$0xff]
    %v695 = vld [vmem:[#allocation5 + $0x1198] sm:$0xff]
    %v696 = vld [vmem:[#allocation5 + $0x11a0] sm:$0xff]
    %v697 = vld [vmem:[#allocation5 + $0x11a8] sm:$0xff]
    %v698 = vld [vmem:[#allocation5 + $0x11b0] sm:$0xff]
    %v699 = vld [vmem:[#allocation5 + $0x11b8] sm:$0xff]
    %v700 = vld [vmem:[#allocation5 + $0x11c0] sm:$0xff]
    %v701 = vld [vmem:[#allocation5 + $0x11c8] sm:$0xff]
    %v702 = vld [vmem:[#allocation5 + $0x11d0] sm:$0xff]
    %v703 = vld [vmem:[#allocation5 + $0x11d8] sm:$0xff]
    %v704 = vld [vmem:[#allocation5 + $0x11e0] sm:$0xff]
    %v705 = vld [vmem:[#allocation5 + $0x11e8] sm:$0xff]
    %v706 = vld [vmem:[#allocation5 + $0x11f0] sm:$0xff]
    %v707 = vld [vmem:[#allocation5 + $0x11f8] sm:$0xff]
    %v708 = vld [vmem:[#allocation5 + $0x1200] sm:$0xff]
    %v709 = vld [vmem:[#allocation5 + $0x1208] sm:$0xff]
    %v710 = vld [vmem:[#allocation5 + $0x1210] sm:$0xff]
    %v711 = vld [vmem:[#allocation5 + $0x1218] sm:$0xff]
    %v712 = vld [vmem:[#allocation5 + $0x1220] sm:$0xff]
    %v713 = vld [vmem:[#allocation5 + $0x1228] sm:$0xff]
    %v714 = vld [vmem:[#allocation5 + $0x1230] sm:$0xff]
    %v715 = vld [vmem:[#allocation5 + $0x1238] sm:$0xff]
    %v716 = vld [vmem:[#allocation5 + $0x1240] sm:$0xff]
    %v717 = vld [vmem:[#allocation5 + $0x1248] sm:$0xff]
    %v718 = vld [vmem:[#allocation5 + $0x1250] sm:$0xff]
    %v719 = vld [vmem:[#allocation5 + $0x1258] sm:$0xff]
    %v720 = vld [vmem:[#allocation5 + $0x1260] sm:$0xff]
    %v721 = vld [vmem:[#allocation5 + $0x1268] sm:$0xff]
    %v722 = vld [vmem:[#allocation5 + $0x1270] sm:$0xff]
    %v723 = vld [vmem:[#allocation5 + $0x1278] sm:$0xff]
    %v724 = vld [vmem:[#allocation5 + $0x1280] sm:$0xff]
    %v725 = vld [vmem:[#allocation5 + $0x1288] sm:$0xff]
    %v726 = vld [vmem:[#allocation5 + $0x1290] sm:$0xff]
    %v727 = vld [vmem:[#allocation5 + $0x1298] sm:$0xff]
    %v728 = vld [vmem:[#allocation5 + $0x12a0] sm:$0xff]
    %v729 = vld [vmem:[#allocation5 + $0x12a8] sm:$0xff]
    %v730 = vld [vmem:[#allocation5 + $0x12b0] sm:$0xff]
    %v731 = vld [vmem:[#allocation5 + $0x12b8] sm:$0xff]
    %v732 = vld [vmem:[#allocation5 + $0x12c0] sm:$0xff]
    %v733 = vld [vmem:[#allocation5 + $0x12c8] sm:$0xff]
    %v734 = vld [vmem:[#allocation5 + $0x12d0] sm:$0xff]
    %v735 = vld [vmem:[#allocation5 + $0x12d8] sm:$0xff]
    %v736 = vld [vmem:[#allocation5 + $0x12e0] sm:$0xff]
    %v737 = vld [vmem:[#allocation5 + $0x12e8] sm:$0xff]
    %v738 = vld [vmem:[#allocation5 + $0x12f0] sm:$0xff]
    %v739 = vld [vmem:[#allocation5 + $0x12f8] sm:$0xff]
    %v740 = vld [vmem:[#allocation5 + $0x1300] sm:$0xff]
    %v741 = vld [vmem:[#allocation5 + $0x1308] sm:$0xff]
    %v742 = vld [vmem:[#allocation5 + $0x1310] sm:$0xff]
    %v743 = vld [vmem:[#allocation5 + $0x1318] sm:$0xff]
    %v744 = vld [vmem:[#allocation5 + $0x1320] sm:$0xff]
    %v745 = vld [vmem:[#allocation5 + $0x1328] sm:$0xff]
    %v746 = vld [vmem:[#allocation5 + $0x1330] sm:$0xff]
    %v747 = vld [vmem:[#allocation5 + $0x1338] sm:$0xff]
    %v748 = vld [vmem:[#allocation5 + $0x1340] sm:$0xff]
    %v749 = vld [vmem:[#allocation5 + $0x1348] sm:$0xff]
    %v750 = vld [vmem:[#allocation5 + $0x1350] sm:$0xff]
    %v751 = vld [vmem:[#allocation5 + $0x1358] sm:$0xff]
    %v752 = vld [vmem:[#allocation5 + $0x1360] sm:$0xff]
    %v753 = vld [vmem:[#allocation5 + $0x1368] sm:$0xff]
    %v754 = vld [vmem:[#allocation5 + $0x1370] sm:$0xff]
    %v755 = vld [vmem:[#allocation5 + $0x1378] sm:$0xff]
    %v756 = vld [vmem:[#allocation5 + $0x1380] sm:$0xff]
    %v757 = vld [vmem:[#allocation5 + $0x1388] sm:$0xff]
    %v758 = vld [vmem:[#allocation5 + $0x1390] sm:$0xff]
    %v759 = vld [vmem:[#allocation5 + $0x1398] sm:$0xff]
    %v760 = vld [vmem:[#allocation5 + $0x13a0] sm:$0xff]
    %v761 = vld [vmem:[#allocation5 + $0x13a8] sm:$0xff]
    %v762 = vld [vmem:[#allocation5 + $0x13b0] sm:$0xff]
    %v763 = vld [vmem:[#allocation5 + $0x13b8] sm:$0xff]
    %v764 = vld [vmem:[#allocation5 + $0x13c0] sm:$0xff]
    %v765 = vld [vmem:[#allocation5 + $0x13c8] sm:$0xff]
    %v766 = vld [vmem:[#allocation5 + $0x13d0] sm:$0xff]
    %v767 = vld [vmem:[#allocation5 + $0x13d8] sm:$0xff]
    %v768 = vld [vmem:[#allocation5 + $0x13e0] sm:$0xff]
    %v769 = vld [vmem:[#allocation5 + $0x13e8] sm:$0xff]
    %v770 = vld [vmem:[#allocation5 + $0x13f0] sm:$0xff]
    %v771 = vld [vmem:[#allocation5 + $0x13f8] sm:$0xff]
    %v772 = vld [vmem:[#allocation5 + $0x1400] sm:$0xff]
    %v773 = vld [vmem:[#allocation5 + $0x1408] sm:$0xff]
    %v774 = vld [vmem:[#allocation5 + $0x1410] sm:$0xff]
    %v775 = vld [vmem:[#allocation5 + $0x1418] sm:$0xff]
    %v776 = vld [vmem:[#allocation5 + $0x1420] sm:$0xff]
    %v777 = vld [vmem:[#allocation5 + $0x1428] sm:$0xff]
    %v778 = vld [vmem:[#allocation5 + $0x1430] sm:$0xff]
    %v779 = vld [vmem:[#allocation5 + $0x1438] sm:$0xff]
    %v780 = vld [vmem:[#allocation5 + $0x1440] sm:$0xff]
    %v781 = vld [vmem:[#allocation5 + $0x1448] sm:$0xff]
    %v782 = vld [vmem:[#allocation5 + $0x1450] sm:$0xff]
    %v783 = vld [vmem:[#allocation5 + $0x1458] sm:$0xff]
    %v784 = vld [vmem:[#allocation5 + $0x1460] sm:$0xff]
    %v785 = vld [vmem:[#allocation5 + $0x1468] sm:$0xff]
    %v786 = vld [vmem:[#allocation5 + $0x1470] sm:$0xff]
    %v787 = vld [vmem:[#allocation5 + $0x1478] sm:$0xff]
    %v788 = vld [vmem:[#allocation5 + $0x1480] sm:$0xff]
    %v789 = vld [vmem:[#allocation5 + $0x1488] sm:$0xff]
    %v790 = vld [vmem:[#allocation5 + $0x1490] sm:$0xff]
    %v791 = vld [vmem:[#allocation5 + $0x1498] sm:$0xff]
    %v792 = vld [vmem:[#allocation5 + $0x14a0] sm:$0xff]
    %v793 = vld [vmem:[#allocation5 + $0x14a8] sm:$0xff]
    %v794 = vld [vmem:[#allocation5 + $0x14b0] sm:$0xff]
    %v795 = vld [vmem:[#allocation5 + $0x14b8] sm:$0xff]
    %v796 = vld [vmem:[#allocation5 + $0x14c0] sm:$0xff]
    %v797 = vld [vmem:[#allocation5 + $0x14c8] sm:$0xff]
    %v798 = vld [vmem:[#allocation5 + $0x14d0] sm:$0xff]
    %v799 = vld [vmem:[#allocation5 + $0x14d8] sm:$0xff]
    %v800 = vld [vmem:[#allocation5 + $0x14e0] sm:$0xff]
    %v801 = vld [vmem:[#allocation5 + $0x14e8] sm:$0xff]
    %v802 = vld [vmem:[#allocation5 + $0x14f0] sm:$0xff]
    %v803 = vld [vmem:[#allocation5 + $0x14f8] sm:$0xff]
    %v804 = vld [vmem:[#allocation5 + $0x1500] sm:$0xff]
    %v805 = vld [vmem:[#allocation5 + $0x1508] sm:$0xff]
    %v806 = vld [vmem:[#allocation5 + $0x1510] sm:$0xff]
    %v807 = vld [vmem:[#allocation5 + $0x1518] sm:$0xff]
    %v808 = vld [vmem:[#allocation5 + $0x1520] sm:$0xff]
    %v809 = vld [vmem:[#allocation5 + $0x1528] sm:$0xff]
    %v810 = vld [vmem:[#allocation5 + $0x1530] sm:$0xff]
    %v811 = vld [vmem:[#allocation5 + $0x1538] sm:$0xff]
    %v812 = vld [vmem:[#allocation5 + $0x1540] sm:$0xff]
    %v813 = vld [vmem:[#allocation5 + $0x1548] sm:$0xff]
    %v814 = vld [vmem:[#allocation5 + $0x1550] sm:$0xff]
    %v815 = vld [vmem:[#allocation5 + $0x1558] sm:$0xff]
    %v816 = vld [vmem:[#allocation5 + $0x1560] sm:$0xff]
    %v817 = vld [vmem:[#allocation5 + $0x1568] sm:$0xff]
    %v818 = vld [vmem:[#allocation5 + $0x1570] sm:$0xff]
    %v819 = vld [vmem:[#allocation5 + $0x1578] sm:$0xff]
    %v820 = vld [vmem:[#allocation5 + $0x1580] sm:$0xff]
    %v821 = vld [vmem:[#allocation5 + $0x1588] sm:$0xff]
    %v822 = vld [vmem:[#allocation5 + $0x1590] sm:$0xff]
    %v823 = vld [vmem:[#allocation5 + $0x1598] sm:$0xff]
    %v824 = vld [vmem:[#allocation5 + $0x15a0] sm:$0xff]
    %v825 = vld [vmem:[#allocation5 + $0x15a8] sm:$0xff]
    %v826 = vld [vmem:[#allocation5 + $0x15b0] sm:$0xff]
    %v827 = vld [vmem:[#allocation5 + $0x15b8] sm:$0xff]
    %v828 = vld [vmem:[#allocation5 + $0x15c0] sm:$0xff]
    %v829 = vld [vmem:[#allocation5 + $0x15c8] sm:$0xff]
    %v830 = vld [vmem:[#allocation5 + $0x15d0] sm:$0xff]
    %v831 = vld [vmem:[#allocation5 + $0x15d8] sm:$0xff]
    %v832 = vld [vmem:[#allocation5 + $0x15e0] sm:$0xff]
    %v833 = vld [vmem:[#allocation5 + $0x15e8] sm:$0xff]
    %v834 = vld [vmem:[#allocation5 + $0x15f0] sm:$0xff]
    %v835 = vld [vmem:[#allocation5 + $0x15f8] sm:$0xff]
    %v836 = vld [vmem:[#allocation5 + $0x1600] sm:$0xff]
    %v837 = vld [vmem:[#allocation5 + $0x1608] sm:$0xff]
    %v838 = vld [vmem:[#allocation5 + $0x1610] sm:$0xff]
    %v839 = vld [vmem:[#allocation5 + $0x1618] sm:$0xff]
    %v840 = vld [vmem:[#allocation5 + $0x1620] sm:$0xff]
    %v841 = vld [vmem:[#allocation5 + $0x1628] sm:$0xff]
    %v842 = vld [vmem:[#allocation5 + $0x1630] sm:$0xff]
    %v843 = vld [vmem:[#allocation5 + $0x1638] sm:$0xff]
    %v844 = vld [vmem:[#allocation5 + $0x1640] sm:$0xff]
    %v845 = vld [vmem:[#allocation5 + $0x1648] sm:$0xff]
    %v846 = vld [vmem:[#allocation5 + $0x1650] sm:$0xff]
    %v847 = vld [vmem:[#allocation5 + $0x1658] sm:$0xff]
    %v848 = vld [vmem:[#allocation5 + $0x1660] sm:$0xff]
    %v849 = vld [vmem:[#allocation5 + $0x1668] sm:$0xff]
    %v850 = vld [vmem:[#allocation5 + $0x1670] sm:$0xff]
    %v851 = vld [vmem:[#allocation5 + $0x1678] sm:$0xff]
    %v852 = vld [vmem:[#allocation5 + $0x1680] sm:$0xff]
    %v853 = vld [vmem:[#allocation5 + $0x1688] sm:$0xff]
    %v854 = vld [vmem:[#allocation5 + $0x1690] sm:$0xff]
    %v855 = vld [vmem:[#allocation5 + $0x1698] sm:$0xff]
    %v856 = vld [vmem:[#allocation5 + $0x16a0] sm:$0xff]
    %v857 = vld [vmem:[#allocation5 + $0x16a8] sm:$0xff]
    %v858 = vld [vmem:[#allocation5 + $0x16b0] sm:$0xff]
    %v859 = vld [vmem:[#allocation5 + $0x16b8] sm:$0xff]
    %v860 = vld [vmem:[#allocation5 + $0x16c0] sm:$0xff]
    %v861 = vld [vmem:[#allocation5 + $0x16c8] sm:$0xff]
    %v862 = vld [vmem:[#allocation5 + $0x16d0] sm:$0xff]
    %v863 = vld [vmem:[#allocation5 + $0x16d8] sm:$0xff]
    %v864 = vld [vmem:[#allocation5 + $0x16e0] sm:$0xff]
    %v865 = vld [vmem:[#allocation5 + $0x16e8] sm:$0xff]
    %v866 = vld [vmem:[#allocation5 + $0x16f0] sm:$0xff]
    %v867 = vld [vmem:[#allocation5 + $0x16f8] sm:$0xff]
    %v868 = vld [vmem:[#allocation5 + $0x1700] sm:$0xff]
    %v869 = vld [vmem:[#allocation5 + $0x1708] sm:$0xff]
    %v870 = vld [vmem:[#allocation5 + $0x1710] sm:$0xff]
    %v871 = vld [vmem:[#allocation5 + $0x1718] sm:$0xff]
    %v872 = vld [vmem:[#allocation5 + $0x1720] sm:$0xff]
    %v873 = vld [vmem:[#allocation5 + $0x1728] sm:$0xff]
    %v874 = vld [vmem:[#allocation5 + $0x1730] sm:$0xff]
    %v875 = vld [vmem:[#allocation5 + $0x1738] sm:$0xff]
    %v876 = vld [vmem:[#allocation5 + $0x1740] sm:$0xff]
    %v877 = vld [vmem:[#allocation5 + $0x1748] sm:$0xff]
    %v878 = vld [vmem:[#allocation5 + $0x1750] sm:$0xff]
    %v879 = vld [vmem:[#allocation5 + $0x1758] sm:$0xff]
    %v880 = vld [vmem:[#allocation5 + $0x1760] sm:$0xff]
    %v881 = vld [vmem:[#allocation5 + $0x1768] sm:$0xff]
    %v882 = vld [vmem:[#allocation5 + $0x1770] sm:$0xff]
    %v883 = vld [vmem:[#allocation5 + $0x1778] sm:$0xff]
    %v884 = vld [vmem:[#allocation5 + $0x1780] sm:$0xff]
    %v885 = vld [vmem:[#allocation5 + $0x1788] sm:$0xff]
    %v886 = vld [vmem:[#allocation5 + $0x1790] sm:$0xff]
    %v887 = vld [vmem:[#allocation5 + $0x1798] sm:$0xff]
    %v888 = vld [vmem:[#allocation5 + $0x17a0] sm:$0xff]
    %v889 = vld [vmem:[#allocation5 + $0x17a8] sm:$0xff]
    %v890 = vld [vmem:[#allocation5 + $0x17b0] sm:$0xff]
    %v891 = vld [vmem:[#allocation5 + $0x17b8] sm:$0xff]
    %v892 = vld [vmem:[#allocation5 + $0x17c0] sm:$0xff]
    %v893 = vld [vmem:[#allocation5 + $0x17c8] sm:$0xff]
    %v894 = vld [vmem:[#allocation5 + $0x17d0] sm:$0xff]
    %v895 = vld [vmem:[#allocation5 + $0x17d8] sm:$0xff]
    %v896 = vld [vmem:[#allocation5 + $0x17e0] sm:$0xff]
    %v897 = vld [vmem:[#allocation5 + $0x17e8] sm:$0xff]
    %v898 = vld [vmem:[#allocation5 + $0x17f0] sm:$0xff]
    %v899 = vld [vmem:[#allocation5 + $0x17f8] sm:$0xff]
    %v900 = vld [vmem:[#allocation7] sm:$0xf]
    %v902 = vlaneseq
    %v903 = vshrl.u32 %v902, 7
    %v904 = vsub.s32 0, %v903
    %v905 = vrot.slane %v900, %v904
    %v906 = vlaneseq
    %v907 = vshrl.u32 %v906, 7
    %v908 = vsub.s32 1, %v907
    %v909 = vrot.slane %v900, %v908
    %v910 = vlaneseq
    %v911 = vshrl.u32 %v910, 7
    %v912 = vsub.s32 2, %v911
    %v913 = vrot.slane %v900, %v912
    %v914 = vlaneseq
    %v915 = vshrl.u32 %v914, 7
    %v916 = vsub.s32 3, %v915
    %v917 = vrot.slane %v900, %v916
    %v1690 = vunpack.c.l.b16 %v132
    %v1691 = vunpack.c.h.b16 %v132
    %v1692 = vunpack.c.l.b16 %v133
    %v1693 = vunpack.c.h.b16 %v133
    %v1694 = vunpack.c.l.b16 %v134
    %v1695 = vunpack.c.h.b16 %v134
    %v1696 = vunpack.c.l.b16 %v135
    %v1697 = vunpack.c.h.b16 %v135
    %v1698 = vunpack.c.l.b16 %v136
    %v1699 = vunpack.c.h.b16 %v136
    %v1700 = vunpack.c.l.b16 %v137
    %v1701 = vunpack.c.h.b16 %v137
    %v1702 = vunpack.c.l.b16 %v138
    %v1703 = vunpack.c.h.b16 %v138
    %v1704 = vunpack.c.l.b16 %v139
    %v1705 = vunpack.c.h.b16 %v139
    %v1706 = vunpack.c.l.b16 %v140
    %v1707 = vunpack.c.h.b16 %v140
    %v1708 = vunpack.c.l.b16 %v141
    %v1709 = vunpack.c.h.b16 %v141
    %v1710 = vunpack.c.l.b16 %v142
    %v1711 = vunpack.c.h.b16 %v142
    %v1712 = vunpack.c.l.b16 %v143
    %v1713 = vunpack.c.h.b16 %v143
    %v1714 = vunpack.c.l.b16 %v144
    %v1715 = vunpack.c.h.b16 %v144
    %v1716 = vunpack.c.l.b16 %v145
    %v1717 = vunpack.c.h.b16 %v145
    %v1718 = vunpack.c.l.b16 %v146
    %v1719 = vunpack.c.h.b16 %v146
    %v1720 = vunpack.c.l.b16 %v147
    %v1721 = vunpack.c.h.b16 %v147
    %v1722 = vunpack.c.l.b16 %v148
    %v1723 = vunpack.c.h.b16 %v148
    %v1724 = vunpack.c.l.b16 %v149
    %v1725 = vunpack.c.h.b16 %v149
    %v1726 = vunpack.c.l.b16 %v150
    %v1727 = vunpack.c.h.b16 %v150
    %v1728 = vunpack.c.l.b16 %v151
    %v1729 = vunpack.c.h.b16 %v151
    %v1730 = vunpack.c.l.b16 %v152
    %v1731 = vunpack.c.h.b16 %v152
    %v1732 = vunpack.c.l.b16 %v153
    %v1733 = vunpack.c.h.b16 %v153
    %v1734 = vunpack.c.l.b16 %v154
    %v1735 = vunpack.c.h.b16 %v154
    %v1736 = vunpack.c.l.b16 %v155
    %v1737 = vunpack.c.h.b16 %v155
    %v1738 = vunpack.c.l.b16 %v156
    %v1739 = vunpack.c.h.b16 %v156
    %v1740 = vunpack.c.l.b16 %v157
    %v1741 = vunpack.c.h.b16 %v157
    %v1742 = vunpack.c.l.b16 %v158
    %v1743 = vunpack.c.h.b16 %v158
    %v1744 = vunpack.c.l.b16 %v159
    %v1745 = vunpack.c.h.b16 %v159
    %v1746 = vunpack.c.l.b16 %v160
    %v1747 = vunpack.c.h.b16 %v160
    %v1748 = vunpack.c.l.b16 %v161
    %v1749 = vunpack.c.h.b16 %v161
    %v1750 = vunpack.c.l.b16 %v162
    %v1751 = vunpack.c.h.b16 %v162
    %v1752 = vunpack.c.l.b16 %v163
    %v1753 = vunpack.c.h.b16 %v163
    %v1754 = vunpack.c.l.b16 %v164
    %v1755 = vunpack.c.h.b16 %v164
    %v1756 = vunpack.c.l.b16 %v165
    %v1757 = vunpack.c.h.b16 %v165
    %v1758 = vunpack.c.l.b16 %v166
    %v1759 = vunpack.c.h.b16 %v166
    %v1760 = vunpack.c.l.b16 %v167
    %v1761 = vunpack.c.h.b16 %v167
    %v1762 = vunpack.c.l.b16 %v168
    %v1763 = vunpack.c.h.b16 %v168
    %v1764 = vunpack.c.l.b16 %v169
    %v1765 = vunpack.c.h.b16 %v169
    %v1766 = vunpack.c.l.b16 %v170
    %v1767 = vunpack.c.h.b16 %v170
    %v1768 = vunpack.c.l.b16 %v171
    %v1769 = vunpack.c.h.b16 %v171
    %v1770 = vunpack.c.l.b16 %v172
    %v1771 = vunpack.c.h.b16 %v172
    %v1772 = vunpack.c.l.b16 %v173
    %v1773 = vunpack.c.h.b16 %v173
    %v1774 = vunpack.c.l.b16 %v174
    %v1775 = vunpack.c.h.b16 %v174
    %v1776 = vunpack.c.l.b16 %v175
    %v1777 = vunpack.c.h.b16 %v175
    %v1778 = vunpack.c.l.b16 %v176
    %v1779 = vunpack.c.h.b16 %v176
    %v1780 = vunpack.c.l.b16 %v177
    %v1781 = vunpack.c.h.b16 %v177
    %v1782 = vunpack.c.l.b16 %v178
    %v1783 = vunpack.c.h.b16 %v178
    %v1784 = vunpack.c.l.b16 %v179
    %v1785 = vunpack.c.h.b16 %v179
    %v1786 = vunpack.c.l.b16 %v180
    %v1787 = vunpack.c.h.b16 %v180
    %v1788 = vunpack.c.l.b16 %v181
    %v1789 = vunpack.c.h.b16 %v181
    %v1790 = vunpack.c.l.b16 %v182
    %v1791 = vunpack.c.h.b16 %v182
    %v1792 = vunpack.c.l.b16 %v183
    %v1793 = vunpack.c.h.b16 %v183
    %v1794 = vunpack.c.l.b16 %v184
    %v1795 = vunpack.c.h.b16 %v184
    %v1796 = vunpack.c.l.b16 %v185
    %v1797 = vunpack.c.h.b16 %v185
    %v1798 = vunpack.c.l.b16 %v186
    %v1799 = vunpack.c.h.b16 %v186
    %v1800 = vunpack.c.l.b16 %v187
    %v1801 = vunpack.c.h.b16 %v187
    %v1802 = vunpack.c.l.b16 %v188
    %v1803 = vunpack.c.h.b16 %v188
    %v1804 = vunpack.c.l.b16 %v189
    %v1805 = vunpack.c.h.b16 %v189
    %v1806 = vunpack.c.l.b16 %v190
    %v1807 = vunpack.c.h.b16 %v190
    %v1808 = vunpack.c.l.b16 %v191
    %v1809 = vunpack.c.h.b16 %v191
    %v1810 = vunpack.c.l.b16 %v192
    %v1811 = vunpack.c.h.b16 %v192
    %v1812 = vunpack.c.l.b16 %v193
    %v1813 = vunpack.c.h.b16 %v193
    %v1814 = vunpack.c.l.b16 %v194
    %v1815 = vunpack.c.h.b16 %v194
    %v1816 = vunpack.c.l.b16 %v195
    %v1817 = vunpack.c.h.b16 %v195
    %v1818 = vunpack.c.l.b16 %v196
    %v1819 = vunpack.c.h.b16 %v196
    %v1820 = vunpack.c.l.b16 %v197
    %v1821 = vunpack.c.h.b16 %v197
    %v1822 = vunpack.c.l.b16 %v198
    %v1823 = vunpack.c.h.b16 %v198
    %v1824 = vunpack.c.l.b16 %v199
    %v1825 = vunpack.c.h.b16 %v199
    %v1826 = vunpack.c.l.b16 %v200
    %v1827 = vunpack.c.h.b16 %v200
    %v1828 = vunpack.c.l.b16 %v201
    %v1829 = vunpack.c.h.b16 %v201
    %v1830 = vunpack.c.l.b16 %v202
    %v1831 = vunpack.c.h.b16 %v202
    %v1832 = vunpack.c.l.b16 %v203
    %v1833 = vunpack.c.h.b16 %v203
    %v1834 = vunpack.c.l.b16 %v204
    %v1835 = vunpack.c.h.b16 %v204
    %v1836 = vunpack.c.l.b16 %v205
    %v1837 = vunpack.c.h.b16 %v205
    %v1838 = vunpack.c.l.b16 %v206
    %v1839 = vunpack.c.h.b16 %v206
    %v1840 = vunpack.c.l.b16 %v207
    %v1841 = vunpack.c.h.b16 %v207
    %v1842 = vunpack.c.l.b16 %v208
    %v1843 = vunpack.c.h.b16 %v208
    %v1844 = vunpack.c.l.b16 %v209
    %v1845 = vunpack.c.h.b16 %v209
    %v1846 = vunpack.c.l.b16 %v210
    %v1847 = vunpack.c.h.b16 %v210
    %v1848 = vunpack.c.l.b16 %v211
    %v1849 = vunpack.c.h.b16 %v211
    %v1850 = vunpack.c.l.b16 %v212
    %v1851 = vunpack.c.h.b16 %v212
    %v1852 = vunpack.c.l.b16 %v213
    %v1853 = vunpack.c.h.b16 %v213
    %v1854 = vunpack.c.l.b16 %v214
    %v1855 = vunpack.c.h.b16 %v214
    %v1856 = vunpack.c.l.b16 %v215
    %v1857 = vunpack.c.h.b16 %v215
    %v1858 = vunpack.c.l.b16 %v216
    %v1859 = vunpack.c.h.b16 %v216
    %v1860 = vunpack.c.l.b16 %v217
    %v1861 = vunpack.c.h.b16 %v217
    %v1862 = vunpack.c.l.b16 %v218
    %v1863 = vunpack.c.h.b16 %v218
    %v1864 = vunpack.c.l.b16 %v219
    %v1865 = vunpack.c.h.b16 %v219
    %v1866 = vunpack.c.l.b16 %v220
    %v1867 = vunpack.c.h.b16 %v220
    %v1868 = vunpack.c.l.b16 %v221
    %v1869 = vunpack.c.h.b16 %v221
    %v1870 = vunpack.c.l.b16 %v222
    %v1871 = vunpack.c.h.b16 %v222
    %v1872 = vunpack.c.l.b16 %v223
    %v1873 = vunpack.c.h.b16 %v223
    %v1874 = vunpack.c.l.b16 %v224
    %v1875 = vunpack.c.h.b16 %v224
    %v1876 = vunpack.c.l.b16 %v225
    %v1877 = vunpack.c.h.b16 %v225
    %v1878 = vunpack.c.l.b16 %v226
    %v1879 = vunpack.c.h.b16 %v226
    %v1880 = vunpack.c.l.b16 %v227
    %v1881 = vunpack.c.h.b16 %v227
    %v1882 = vunpack.c.l.b16 %v228
    %v1883 = vunpack.c.h.b16 %v228
    %v1884 = vunpack.c.l.b16 %v229
    %v1885 = vunpack.c.h.b16 %v229
    %v1886 = vunpack.c.l.b16 %v230
    %v1887 = vunpack.c.h.b16 %v230
    %v1888 = vunpack.c.l.b16 %v231
    %v1889 = vunpack.c.h.b16 %v231
    %v1890 = vunpack.c.l.b16 %v232
    %v1891 = vunpack.c.h.b16 %v232
    %v1892 = vunpack.c.l.b16 %v233
    %v1893 = vunpack.c.h.b16 %v233
    %v1894 = vunpack.c.l.b16 %v234
    %v1895 = vunpack.c.h.b16 %v234
    %v1896 = vunpack.c.l.b16 %v235
    %v1897 = vunpack.c.h.b16 %v235
    %v1898 = vunpack.c.l.b16 %v236
    %v1899 = vunpack.c.h.b16 %v236
    %v1900 = vunpack.c.l.b16 %v237
    %v1901 = vunpack.c.h.b16 %v237
    %v1902 = vunpack.c.l.b16 %v238
    %v1903 = vunpack.c.h.b16 %v238
    %v1904 = vunpack.c.l.b16 %v239
    %v1905 = vunpack.c.h.b16 %v239
    %v1906 = vunpack.c.l.b16 %v240
    %v1907 = vunpack.c.h.b16 %v240
    %v1908 = vunpack.c.l.b16 %v241
    %v1909 = vunpack.c.h.b16 %v241
    %v1910 = vunpack.c.l.b16 %v242
    %v1911 = vunpack.c.h.b16 %v242
    %v1912 = vunpack.c.l.b16 %v243
    %v1913 = vunpack.c.h.b16 %v243
    %v1914 = vunpack.c.l.b16 %v244
    %v1915 = vunpack.c.h.b16 %v244
    %v1916 = vunpack.c.l.b16 %v245
    %v1917 = vunpack.c.h.b16 %v245
    %v1918 = vunpack.c.l.b16 %v246
    %v1919 = vunpack.c.h.b16 %v246
    %v1920 = vunpack.c.l.b16 %v247
    %v1921 = vunpack.c.h.b16 %v247
    %v1922 = vunpack.c.l.b16 %v248
    %v1923 = vunpack.c.h.b16 %v248
    %v1924 = vunpack.c.l.b16 %v249
    %v1925 = vunpack.c.h.b16 %v249
    %v1926 = vunpack.c.l.b16 %v250
    %v1927 = vunpack.c.h.b16 %v250
    %v1928 = vunpack.c.l.b16 %v251
    %v1929 = vunpack.c.h.b16 %v251
    %v1930 = vunpack.c.l.b16 %v252
    %v1931 = vunpack.c.h.b16 %v252
    %v1932 = vunpack.c.l.b16 %v253
    %v1933 = vunpack.c.h.b16 %v253
    %v1934 = vunpack.c.l.b16 %v254
    %v1935 = vunpack.c.h.b16 %v254
    %v1936 = vunpack.c.l.b16 %v255
    %v1937 = vunpack.c.h.b16 %v255
    %v1938 = vunpack.c.l.b16 %v256
    %v1939 = vunpack.c.h.b16 %v256
    %v1940 = vunpack.c.l.b16 %v257
    %v1941 = vunpack.c.h.b16 %v257
    %v1942 = vunpack.c.l.b16 %v258
    %v1943 = vunpack.c.h.b16 %v258
    %v1944 = vunpack.c.l.b16 %v259
    %v1945 = vunpack.c.h.b16 %v259
    %v1946 = vunpack.c.l.b16 %v260
    %v1947 = vunpack.c.h.b16 %v260
    %v1948 = vunpack.c.l.b16 %v261
    %v1949 = vunpack.c.h.b16 %v261
    %v1950 = vunpack.c.l.b16 %v262
    %v1951 = vunpack.c.h.b16 %v262
    %v1952 = vunpack.c.l.b16 %v263
    %v1953 = vunpack.c.h.b16 %v263
    %v1954 = vunpack.c.l.b16 %v264
    %v1955 = vunpack.c.h.b16 %v264
    %v1956 = vunpack.c.l.b16 %v265
    %v1957 = vunpack.c.h.b16 %v265
    %v1958 = vunpack.c.l.b16 %v266
    %v1959 = vunpack.c.h.b16 %v266
    %v1960 = vunpack.c.l.b16 %v267
    %v1961 = vunpack.c.h.b16 %v267
    %v1962 = vunpack.c.l.b16 %v268
    %v1963 = vunpack.c.h.b16 %v268
    %v1964 = vunpack.c.l.b16 %v269
    %v1965 = vunpack.c.h.b16 %v269
    %v1966 = vunpack.c.l.b16 %v270
    %v1967 = vunpack.c.h.b16 %v270
    %v1968 = vunpack.c.l.b16 %v271
    %v1969 = vunpack.c.h.b16 %v271
    %v1970 = vunpack.c.l.b16 %v272
    %v1971 = vunpack.c.h.b16 %v272
    %v1972 = vunpack.c.l.b16 %v273
    %v1973 = vunpack.c.h.b16 %v273
    %v1974 = vunpack.c.l.b16 %v274
    %v1975 = vunpack.c.h.b16 %v274
    %v1976 = vunpack.c.l.b16 %v275
    %v1977 = vunpack.c.h.b16 %v275
    %v1978 = vunpack.c.l.b16 %v276
    %v1979 = vunpack.c.h.b16 %v276
    %v1980 = vunpack.c.l.b16 %v277
    %v1981 = vunpack.c.h.b16 %v277
    %v1982 = vunpack.c.l.b16 %v278
    %v1983 = vunpack.c.h.b16 %v278
    %v1984 = vunpack.c.l.b16 %v279
    %v1985 = vunpack.c.h.b16 %v279
    %v1986 = vunpack.c.l.b16 %v280
    %v1987 = vunpack.c.h.b16 %v280
    %v1988 = vunpack.c.l.b16 %v281
    %v1989 = vunpack.c.h.b16 %v281
    %v1990 = vunpack.c.l.b16 %v282
    %v1991 = vunpack.c.h.b16 %v282
    %v1992 = vunpack.c.l.b16 %v283
    %v1993 = vunpack.c.h.b16 %v283
    %v1994 = vunpack.c.l.b16 %v284
    %v1995 = vunpack.c.h.b16 %v284
    %v1996 = vunpack.c.l.b16 %v285
    %v1997 = vunpack.c.h.b16 %v285
    %v1998 = vunpack.c.l.b16 %v286
    %v1999 = vunpack.c.h.b16 %v286
    %v2000 = vunpack.c.l.b16 %v287
    %v2001 = vunpack.c.h.b16 %v287
    %v2002 = vunpack.c.l.b16 %v288
    %v2003 = vunpack.c.h.b16 %v288
    %v2004 = vunpack.c.l.b16 %v289
    %v2005 = vunpack.c.h.b16 %v289
    %v2006 = vunpack.c.l.b16 %v290
    %v2007 = vunpack.c.h.b16 %v290
    %v2008 = vunpack.c.l.b16 %v291
    %v2009 = vunpack.c.h.b16 %v291
    %v2010 = vunpack.c.l.b16 %v292
    %v2011 = vunpack.c.h.b16 %v292
    %v2012 = vunpack.c.l.b16 %v293
    %v2013 = vunpack.c.h.b16 %v293
    %v2014 = vunpack.c.l.b16 %v294
    %v2015 = vunpack.c.h.b16 %v294
    %v2016 = vunpack.c.l.b16 %v295
    %v2017 = vunpack.c.h.b16 %v295
    %v2018 = vunpack.c.l.b16 %v296
    %v2019 = vunpack.c.h.b16 %v296
    %v2020 = vunpack.c.l.b16 %v297
    %v2021 = vunpack.c.h.b16 %v297
    %v2022 = vunpack.c.l.b16 %v298
    %v2023 = vunpack.c.h.b16 %v298
    %v2024 = vunpack.c.l.b16 %v299
    %v2025 = vunpack.c.h.b16 %v299
    %v2026 = vunpack.c.l.b16 %v300
    %v2027 = vunpack.c.h.b16 %v300
    %v2028 = vunpack.c.l.b16 %v301
    %v2029 = vunpack.c.h.b16 %v301
    %v2030 = vunpack.c.l.b16 %v302
    %v2031 = vunpack.c.h.b16 %v302
    %v2032 = vunpack.c.l.b16 %v303
    %v2033 = vunpack.c.h.b16 %v303
    %v2034 = vunpack.c.l.b16 %v304
    %v2035 = vunpack.c.h.b16 %v304
    %v2036 = vunpack.c.l.b16 %v305
    %v2037 = vunpack.c.h.b16 %v305
    %v2038 = vunpack.c.l.b16 %v306
    %v2039 = vunpack.c.h.b16 %v306
    %v2040 = vunpack.c.l.b16 %v307
    %v2041 = vunpack.c.h.b16 %v307
    %v2042 = vunpack.c.l.b16 %v308
    %v2043 = vunpack.c.h.b16 %v308
    %v2044 = vunpack.c.l.b16 %v309
    %v2045 = vunpack.c.h.b16 %v309
    %v2046 = vunpack.c.l.b16 %v310
    %v2047 = vunpack.c.h.b16 %v310
    %v2048 = vunpack.c.l.b16 %v311
    %v2049 = vunpack.c.h.b16 %v311
    %v2050 = vunpack.c.l.b16 %v312
    %v2051 = vunpack.c.h.b16 %v312
    %v2052 = vunpack.c.l.b16 %v313
    %v2053 = vunpack.c.h.b16 %v313
    %v2054 = vunpack.c.l.b16 %v314
    %v2055 = vunpack.c.h.b16 %v314
    %v2056 = vunpack.c.l.b16 %v315
    %v2057 = vunpack.c.h.b16 %v315
    %v2058 = vunpack.c.l.b16 %v316
    %v2059 = vunpack.c.h.b16 %v316
    %v2060 = vunpack.c.l.b16 %v317
    %v2061 = vunpack.c.h.b16 %v317
    %v2062 = vunpack.c.l.b16 %v318
    %v2063 = vunpack.c.h.b16 %v318
    %v2064 = vunpack.c.l.b16 %v319
    %v2065 = vunpack.c.h.b16 %v319
    %v2066 = vunpack.c.l.b16 %v320
    %v2067 = vunpack.c.h.b16 %v320
    %v2068 = vunpack.c.l.b16 %v321
    %v2069 = vunpack.c.h.b16 %v321
    %v2070 = vunpack.c.l.b16 %v322
    %v2071 = vunpack.c.h.b16 %v322
    %v2072 = vunpack.c.l.b16 %v323
    %v2073 = vunpack.c.h.b16 %v323
    %v2074 = vunpack.c.l.b16 %v324
    %v2075 = vunpack.c.h.b16 %v324
    %v2076 = vunpack.c.l.b16 %v325
    %v2077 = vunpack.c.h.b16 %v325
    %v2078 = vunpack.c.l.b16 %v326
    %v2079 = vunpack.c.h.b16 %v326
    %v2080 = vunpack.c.l.b16 %v327
    %v2081 = vunpack.c.h.b16 %v327
    %v2082 = vunpack.c.l.b16 %v328
    %v2083 = vunpack.c.h.b16 %v328
    %v2084 = vunpack.c.l.b16 %v329
    %v2085 = vunpack.c.h.b16 %v329
    %v2086 = vunpack.c.l.b16 %v330
    %v2087 = vunpack.c.h.b16 %v330
    %v2088 = vunpack.c.l.b16 %v331
    %v2089 = vunpack.c.h.b16 %v331
    %v2090 = vunpack.c.l.b16 %v332
    %v2091 = vunpack.c.h.b16 %v332
    %v2092 = vunpack.c.l.b16 %v333
    %v2093 = vunpack.c.h.b16 %v333
    %v2094 = vunpack.c.l.b16 %v334
    %v2095 = vunpack.c.h.b16 %v334
    %v2096 = vunpack.c.l.b16 %v335
    %v2097 = vunpack.c.h.b16 %v335
    %v2098 = vunpack.c.l.b16 %v336
    %v2099 = vunpack.c.h.b16 %v336
    %v2100 = vunpack.c.l.b16 %v337
    %v2101 = vunpack.c.h.b16 %v337
    %v2102 = vunpack.c.l.b16 %v338
    %v2103 = vunpack.c.h.b16 %v338
    %v2104 = vunpack.c.l.b16 %v339
    %v2105 = vunpack.c.h.b16 %v339
    %v2106 = vunpack.c.l.b16 %v340
    %v2107 = vunpack.c.h.b16 %v340
    %v2108 = vunpack.c.l.b16 %v341
    %v2109 = vunpack.c.h.b16 %v341
    %v2110 = vunpack.c.l.b16 %v342
    %v2111 = vunpack.c.h.b16 %v342
    %v2112 = vunpack.c.l.b16 %v343
    %v2113 = vunpack.c.h.b16 %v343
    %v2114 = vunpack.c.l.b16 %v344
    %v2115 = vunpack.c.h.b16 %v344
    %v2116 = vunpack.c.l.b16 %v345
    %v2117 = vunpack.c.h.b16 %v345
    %v2118 = vunpack.c.l.b16 %v346
    %v2119 = vunpack.c.h.b16 %v346
    %v2120 = vunpack.c.l.b16 %v347
    %v2121 = vunpack.c.h.b16 %v347
    %v2122 = vunpack.c.l.b16 %v348
    %v2123 = vunpack.c.h.b16 %v348
    %v2124 = vunpack.c.l.b16 %v349
    %v2125 = vunpack.c.h.b16 %v349
    %v2126 = vunpack.c.l.b16 %v350
    %v2127 = vunpack.c.h.b16 %v350
    %v2128 = vunpack.c.l.b16 %v351
    %v2129 = vunpack.c.h.b16 %v351
    %v2130 = vunpack.c.l.b16 %v352
    %v2131 = vunpack.c.h.b16 %v352
    %v2132 = vunpack.c.l.b16 %v353
    %v2133 = vunpack.c.h.b16 %v353
    %v2134 = vunpack.c.l.b16 %v354
    %v2135 = vunpack.c.h.b16 %v354
    %v2136 = vunpack.c.l.b16 %v355
    %v2137 = vunpack.c.h.b16 %v355
    %v2138 = vunpack.c.l.b16 %v356
    %v2139 = vunpack.c.h.b16 %v356
    %v2140 = vunpack.c.l.b16 %v357
    %v2141 = vunpack.c.h.b16 %v357
    %v2142 = vunpack.c.l.b16 %v358
    %v2143 = vunpack.c.h.b16 %v358
    %v2144 = vunpack.c.l.b16 %v359
    %v2145 = vunpack.c.h.b16 %v359
    %v2146 = vunpack.c.l.b16 %v360
    %v2147 = vunpack.c.h.b16 %v360
    %v2148 = vunpack.c.l.b16 %v361
    %v2149 = vunpack.c.h.b16 %v361
    %v2150 = vunpack.c.l.b16 %v362
    %v2151 = vunpack.c.h.b16 %v362
    %v2152 = vunpack.c.l.b16 %v363
    %v2153 = vunpack.c.h.b16 %v363
    %v2154 = vunpack.c.l.b16 %v364
    %v2155 = vunpack.c.h.b16 %v364
    %v2156 = vunpack.c.l.b16 %v365
    %v2157 = vunpack.c.h.b16 %v365
    %v2158 = vunpack.c.l.b16 %v366
    %v2159 = vunpack.c.h.b16 %v366
    %v2160 = vunpack.c.l.b16 %v367
    %v2161 = vunpack.c.h.b16 %v367
    %v2162 = vunpack.c.l.b16 %v368
    %v2163 = vunpack.c.h.b16 %v368
    %v2164 = vunpack.c.l.b16 %v369
    %v2165 = vunpack.c.h.b16 %v369
    %v2166 = vunpack.c.l.b16 %v370
    %v2167 = vunpack.c.h.b16 %v370
    %v2168 = vunpack.c.l.b16 %v371
    %v2169 = vunpack.c.h.b16 %v371
    %v2170 = vunpack.c.l.b16 %v372
    %v2171 = vunpack.c.h.b16 %v372
    %v2172 = vunpack.c.l.b16 %v373
    %v2173 = vunpack.c.h.b16 %v373
    %v2174 = vunpack.c.l.b16 %v374
    %v2175 = vunpack.c.h.b16 %v374
    %v2176 = vunpack.c.l.b16 %v375
    %v2177 = vunpack.c.h.b16 %v375
    %v2178 = vunpack.c.l.b16 %v376
    %v2179 = vunpack.c.h.b16 %v376
    %v2180 = vunpack.c.l.b16 %v377
    %v2181 = vunpack.c.h.b16 %v377
    %v2182 = vunpack.c.l.b16 %v378
    %v2183 = vunpack.c.h.b16 %v378
    %v2184 = vunpack.c.l.b16 %v379
    %v2185 = vunpack.c.h.b16 %v379
    %v2186 = vunpack.c.l.b16 %v380
    %v2187 = vunpack.c.h.b16 %v380
    %v2188 = vunpack.c.l.b16 %v381
    %v2189 = vunpack.c.h.b16 %v381
    %v2190 = vunpack.c.l.b16 %v382
    %v2191 = vunpack.c.h.b16 %v382
    %v2192 = vunpack.c.l.b16 %v383
    %v2193 = vunpack.c.h.b16 %v383
    %v2194 = vunpack.c.l.b16 %v384
    %v2195 = vunpack.c.h.b16 %v384
    %v2196 = vunpack.c.l.b16 %v385
    %v2197 = vunpack.c.h.b16 %v385
    %v2198 = vunpack.c.l.b16 %v386
    %v2199 = vunpack.c.h.b16 %v386
    %v2200 = vunpack.c.l.b16 %v387
    %v2201 = vunpack.c.h.b16 %v387
    %v2202 = vunpack.c.l.b16 %v388
    %v2203 = vunpack.c.h.b16 %v388
    %v2204 = vunpack.c.l.b16 %v389
    %v2205 = vunpack.c.h.b16 %v389
    %v2206 = vunpack.c.l.b16 %v390
    %v2207 = vunpack.c.h.b16 %v390
    %v2208 = vunpack.c.l.b16 %v391
    %v2209 = vunpack.c.h.b16 %v391
    %v2210 = vunpack.c.l.b16 %v392
    %v2211 = vunpack.c.h.b16 %v392
    %v2212 = vunpack.c.l.b16 %v393
    %v2213 = vunpack.c.h.b16 %v393
    %v2214 = vunpack.c.l.b16 %v394
    %v2215 = vunpack.c.h.b16 %v394
    %v2216 = vunpack.c.l.b16 %v395
    %v2217 = vunpack.c.h.b16 %v395
    %v2218 = vunpack.c.l.b16 %v396
    %v2219 = vunpack.c.h.b16 %v396
    %v2220 = vunpack.c.l.b16 %v397
    %v2221 = vunpack.c.h.b16 %v397
    %v2222 = vunpack.c.l.b16 %v398
    %v2223 = vunpack.c.h.b16 %v398
    %v2224 = vunpack.c.l.b16 %v399
    %v2225 = vunpack.c.h.b16 %v399
    %v2226 = vunpack.c.l.b16 %v400
    %v2227 = vunpack.c.h.b16 %v400
    %v2228 = vunpack.c.l.b16 %v401
    %v2229 = vunpack.c.h.b16 %v401
    %v2230 = vunpack.c.l.b16 %v402
    %v2231 = vunpack.c.h.b16 %v402
    %v2232 = vunpack.c.l.b16 %v403
    %v2233 = vunpack.c.h.b16 %v403
    %v2234 = vunpack.c.l.b16 %v404
    %v2235 = vunpack.c.h.b16 %v404
    %v2236 = vunpack.c.l.b16 %v405
    %v2237 = vunpack.c.h.b16 %v405
    %v2238 = vunpack.c.l.b16 %v406
    %v2239 = vunpack.c.h.b16 %v406
    %v2240 = vunpack.c.l.b16 %v407
    %v2241 = vunpack.c.h.b16 %v407
    %v2242 = vunpack.c.l.b16 %v408
    %v2243 = vunpack.c.h.b16 %v408
    %v2244 = vunpack.c.l.b16 %v409
    %v2245 = vunpack.c.h.b16 %v409
    %v2246 = vunpack.c.l.b16 %v410
    %v2247 = vunpack.c.h.b16 %v410
    %v2248 = vunpack.c.l.b16 %v411
    %v2249 = vunpack.c.h.b16 %v411
    %v2250 = vunpack.c.l.b16 %v412
    %v2251 = vunpack.c.h.b16 %v412
    %v2252 = vunpack.c.l.b16 %v413
    %v2253 = vunpack.c.h.b16 %v413
    %v2254 = vunpack.c.l.b16 %v414
    %v2255 = vunpack.c.h.b16 %v414
    %v2256 = vunpack.c.l.b16 %v415
    %v2257 = vunpack.c.h.b16 %v415
    %v2258 = vunpack.c.l.b16 %v416
    %v2259 = vunpack.c.h.b16 %v416
    %v2260 = vunpack.c.l.b16 %v417
    %v2261 = vunpack.c.h.b16 %v417
    %v2262 = vunpack.c.l.b16 %v418
    %v2263 = vunpack.c.h.b16 %v418
    %v2264 = vunpack.c.l.b16 %v419
    %v2265 = vunpack.c.h.b16 %v419
    %v2266 = vunpack.c.l.b16 %v420
    %v2267 = vunpack.c.h.b16 %v420
    %v2268 = vunpack.c.l.b16 %v421
    %v2269 = vunpack.c.h.b16 %v421
    %v2270 = vunpack.c.l.b16 %v422
    %v2271 = vunpack.c.h.b16 %v422
    %v2272 = vunpack.c.l.b16 %v423
    %v2273 = vunpack.c.h.b16 %v423
    %v2274 = vunpack.c.l.b16 %v424
    %v2275 = vunpack.c.h.b16 %v424
    %v2276 = vunpack.c.l.b16 %v425
    %v2277 = vunpack.c.h.b16 %v425
    %v2278 = vunpack.c.l.b16 %v426
    %v2279 = vunpack.c.h.b16 %v426
    %v2280 = vunpack.c.l.b16 %v427
    %v2281 = vunpack.c.h.b16 %v427
    %v2282 = vunpack.c.l.b16 %v428
    %v2283 = vunpack.c.h.b16 %v428
    %v2284 = vunpack.c.l.b16 %v429
    %v2285 = vunpack.c.h.b16 %v429
    %v2286 = vunpack.c.l.b16 %v430
    %v2287 = vunpack.c.h.b16 %v430
    %v2288 = vunpack.c.l.b16 %v431
    %v2289 = vunpack.c.h.b16 %v431
    %v2290 = vunpack.c.l.b16 %v432
    %v2291 = vunpack.c.h.b16 %v432
    %v2292 = vunpack.c.l.b16 %v433
    %v2293 = vunpack.c.h.b16 %v433
    %v2294 = vunpack.c.l.b16 %v434
    %v2295 = vunpack.c.h.b16 %v434
    %v2296 = vunpack.c.l.b16 %v435
    %v2297 = vunpack.c.h.b16 %v435
    %v2298 = vunpack.c.l.b16 %v436
    %v2299 = vunpack.c.h.b16 %v436
    %v2300 = vunpack.c.l.b16 %v437
    %v2301 = vunpack.c.h.b16 %v437
    %v2302 = vunpack.c.l.b16 %v438
    %v2303 = vunpack.c.h.b16 %v438
    %v2304 = vunpack.c.l.b16 %v439
    %v2305 = vunpack.c.h.b16 %v439
    %v2306 = vunpack.c.l.b16 %v440
    %v2307 = vunpack.c.h.b16 %v440
    %v2308 = vunpack.c.l.b16 %v441
    %v2309 = vunpack.c.h.b16 %v441
    %v2310 = vunpack.c.l.b16 %v442
    %v2311 = vunpack.c.h.b16 %v442
    %v2312 = vunpack.c.l.b16 %v443
    %v2313 = vunpack.c.h.b16 %v443
    %v2314 = vunpack.c.l.b16 %v444
    %v2315 = vunpack.c.h.b16 %v444
    %v2316 = vunpack.c.l.b16 %v445
    %v2317 = vunpack.c.h.b16 %v445
    %v2318 = vunpack.c.l.b16 %v446
    %v2319 = vunpack.c.h.b16 %v446
    %v2320 = vunpack.c.l.b16 %v447
    %v2321 = vunpack.c.h.b16 %v447
    %v2322 = vunpack.c.l.b16 %v448
    %v2323 = vunpack.c.h.b16 %v448
    %v2324 = vunpack.c.l.b16 %v449
    %v2325 = vunpack.c.h.b16 %v449
    %v2326 = vunpack.c.l.b16 %v450
    %v2327 = vunpack.c.h.b16 %v450
    %v2328 = vunpack.c.l.b16 %v451
    %v2329 = vunpack.c.h.b16 %v451
    %v2330 = vunpack.c.l.b16 %v452
    %v2331 = vunpack.c.h.b16 %v452
    %v2332 = vunpack.c.l.b16 %v453
    %v2333 = vunpack.c.h.b16 %v453
    %v2334 = vunpack.c.l.b16 %v454
    %v2335 = vunpack.c.h.b16 %v454
    %v2336 = vunpack.c.l.b16 %v455
    %v2337 = vunpack.c.h.b16 %v455
    %v2338 = vunpack.c.l.b16 %v456
    %v2339 = vunpack.c.h.b16 %v456
    %v2340 = vunpack.c.l.b16 %v457
    %v2341 = vunpack.c.h.b16 %v457
    %v2342 = vunpack.c.l.b16 %v458
    %v2343 = vunpack.c.h.b16 %v458
    %v2344 = vunpack.c.l.b16 %v459
    %v2345 = vunpack.c.h.b16 %v459
    %v2346 = vunpack.c.l.b16 %v460
    %v2347 = vunpack.c.h.b16 %v460
    %v2348 = vunpack.c.l.b16 %v461
    %v2349 = vunpack.c.h.b16 %v461
    %v2350 = vunpack.c.l.b16 %v462
    %v2351 = vunpack.c.h.b16 %v462
    %v2352 = vunpack.c.l.b16 %v463
    %v2353 = vunpack.c.h.b16 %v463
    %v2354 = vunpack.c.l.b16 %v464
    %v2355 = vunpack.c.h.b16 %v464
    %v2356 = vunpack.c.l.b16 %v465
    %v2357 = vunpack.c.h.b16 %v465
    %v2358 = vunpack.c.l.b16 %v466
    %v2359 = vunpack.c.h.b16 %v466
    %v2360 = vunpack.c.l.b16 %v467
    %v2361 = vunpack.c.h.b16 %v467
    %v2362 = vunpack.c.l.b16 %v468
    %v2363 = vunpack.c.h.b16 %v468
    %v2364 = vunpack.c.l.b16 %v469
    %v2365 = vunpack.c.h.b16 %v469
    %v2366 = vunpack.c.l.b16 %v470
    %v2367 = vunpack.c.h.b16 %v470
    %v2368 = vunpack.c.l.b16 %v471
    %v2369 = vunpack.c.h.b16 %v471
    %v2370 = vunpack.c.l.b16 %v472
    %v2371 = vunpack.c.h.b16 %v472
    %v2372 = vunpack.c.l.b16 %v473
    %v2373 = vunpack.c.h.b16 %v473
    %v2374 = vunpack.c.l.b16 %v474
    %v2375 = vunpack.c.h.b16 %v474
    %v2376 = vunpack.c.l.b16 %v475
    %v2377 = vunpack.c.h.b16 %v475
    %v2378 = vunpack.c.l.b16 %v476
    %v2379 = vunpack.c.h.b16 %v476
    %v2380 = vunpack.c.l.b16 %v477
    %v2381 = vunpack.c.h.b16 %v477
    %v2382 = vunpack.c.l.b16 %v478
    %v2383 = vunpack.c.h.b16 %v478
    %v2384 = vunpack.c.l.b16 %v479
    %v2385 = vunpack.c.h.b16 %v479
    %v2386 = vunpack.c.l.b16 %v480
    %v2387 = vunpack.c.h.b16 %v480
    %v2388 = vunpack.c.l.b16 %v481
    %v2389 = vunpack.c.h.b16 %v481
    %v2390 = vunpack.c.l.b16 %v482
    %v2391 = vunpack.c.h.b16 %v482
    %v2392 = vunpack.c.l.b16 %v483
    %v2393 = vunpack.c.h.b16 %v483
    %v2394 = vunpack.c.l.b16 %v484
    %v2395 = vunpack.c.h.b16 %v484
    %v2396 = vunpack.c.l.b16 %v485
    %v2397 = vunpack.c.h.b16 %v485
    %v2398 = vunpack.c.l.b16 %v486
    %v2399 = vunpack.c.h.b16 %v486
    %v2400 = vunpack.c.l.b16 %v487
    %v2401 = vunpack.c.h.b16 %v487
    %v2402 = vunpack.c.l.b16 %v488
    %v2403 = vunpack.c.h.b16 %v488
    %v2404 = vunpack.c.l.b16 %v489
    %v2405 = vunpack.c.h.b16 %v489
    %v2406 = vunpack.c.l.b16 %v490
    %v2407 = vunpack.c.h.b16 %v490
    %v2408 = vunpack.c.l.b16 %v491
    %v2409 = vunpack.c.h.b16 %v491
    %v2410 = vunpack.c.l.b16 %v492
    %v2411 = vunpack.c.h.b16 %v492
    %v2412 = vunpack.c.l.b16 %v493
    %v2413 = vunpack.c.h.b16 %v493
    %v2414 = vunpack.c.l.b16 %v494
    %v2415 = vunpack.c.h.b16 %v494
    %v2416 = vunpack.c.l.b16 %v495
    %v2417 = vunpack.c.h.b16 %v495
    %v2418 = vunpack.c.l.b16 %v496
    %v2419 = vunpack.c.h.b16 %v496
    %v2420 = vunpack.c.l.b16 %v497
    %v2421 = vunpack.c.h.b16 %v497
    %v2422 = vunpack.c.l.b16 %v498
    %v2423 = vunpack.c.h.b16 %v498
    %v2424 = vunpack.c.l.b16 %v499
    %v2425 = vunpack.c.h.b16 %v499
    %v2426 = vunpack.c.l.b16 %v500
    %v2427 = vunpack.c.h.b16 %v500
    %v2428 = vunpack.c.l.b16 %v501
    %v2429 = vunpack.c.h.b16 %v501
    %v2430 = vunpack.c.l.b16 %v502
    %v2431 = vunpack.c.h.b16 %v502
    %v2432 = vunpack.c.l.b16 %v503
    %v2433 = vunpack.c.h.b16 %v503
    %v2434 = vunpack.c.l.b16 %v504
    %v2435 = vunpack.c.h.b16 %v504
    %v2436 = vunpack.c.l.b16 %v505
    %v2437 = vunpack.c.h.b16 %v505
    %v2438 = vunpack.c.l.b16 %v506
    %v2439 = vunpack.c.h.b16 %v506
    %v2440 = vunpack.c.l.b16 %v507
    %v2441 = vunpack.c.h.b16 %v507
    %v2442 = vunpack.c.l.b16 %v508
    %v2443 = vunpack.c.h.b16 %v508
    %v2444 = vunpack.c.l.b16 %v509
    %v2445 = vunpack.c.h.b16 %v509
    %v2446 = vunpack.c.l.b16 %v510
    %v2447 = vunpack.c.h.b16 %v510
    %v2448 = vunpack.c.l.b16 %v511
    %v2449 = vunpack.c.h.b16 %v511
    %v2450 = vunpack.c.l.b16 %v512
    %v2451 = vunpack.c.h.b16 %v512
    %v2452 = vunpack.c.l.b16 %v513
    %v2453 = vunpack.c.h.b16 %v513
    %v2454 = vunpack.c.l.b16 %v514
    %v2455 = vunpack.c.h.b16 %v514
    %v2456 = vunpack.c.l.b16 %v515
    %v2457 = vunpack.c.h.b16 %v515
    %v2458 = vunpack.c.l.b16 %v516
    %v2459 = vunpack.c.h.b16 %v516
    %v2460 = vunpack.c.l.b16 %v517
    %v2461 = vunpack.c.h.b16 %v517
    %v2462 = vunpack.c.l.b16 %v518
    %v2463 = vunpack.c.h.b16 %v518
    %v2464 = vunpack.c.l.b16 %v519
    %v2465 = vunpack.c.h.b16 %v519
    %v2466 = vunpack.c.l.b16 %v520
    %v2467 = vunpack.c.h.b16 %v520
    %v2468 = vunpack.c.l.b16 %v521
    %v2469 = vunpack.c.h.b16 %v521
    %v2470 = vunpack.c.l.b16 %v522
    %v2471 = vunpack.c.h.b16 %v522
    %v2472 = vunpack.c.l.b16 %v523
    %v2473 = vunpack.c.h.b16 %v523
    %v2474 = vunpack.c.l.b16 %v524
    %v2475 = vunpack.c.h.b16 %v524
    %v2476 = vunpack.c.l.b16 %v525
    %v2477 = vunpack.c.h.b16 %v525
    %v2478 = vunpack.c.l.b16 %v526
    %v2479 = vunpack.c.h.b16 %v526
    %v2480 = vunpack.c.l.b16 %v527
    %v2481 = vunpack.c.h.b16 %v527
    %v2482 = vunpack.c.l.b16 %v528
    %v2483 = vunpack.c.h.b16 %v528
    %v2484 = vunpack.c.l.b16 %v529
    %v2485 = vunpack.c.h.b16 %v529
    %v2486 = vunpack.c.l.b16 %v530
    %v2487 = vunpack.c.h.b16 %v530
    %v2488 = vunpack.c.l.b16 %v531
    %v2489 = vunpack.c.h.b16 %v531
    %v2490 = vunpack.c.l.b16 %v532
    %v2491 = vunpack.c.h.b16 %v532
    %v2492 = vunpack.c.l.b16 %v533
    %v2493 = vunpack.c.h.b16 %v533
    %v2494 = vunpack.c.l.b16 %v534
    %v2495 = vunpack.c.h.b16 %v534
    %v2496 = vunpack.c.l.b16 %v535
    %v2497 = vunpack.c.h.b16 %v535
    %v2498 = vunpack.c.l.b16 %v536
    %v2499 = vunpack.c.h.b16 %v536
    %v2500 = vunpack.c.l.b16 %v537
    %v2501 = vunpack.c.h.b16 %v537
    %v2502 = vunpack.c.l.b16 %v538
    %v2503 = vunpack.c.h.b16 %v538
    %v2504 = vunpack.c.l.b16 %v539
    %v2505 = vunpack.c.h.b16 %v539
    %v2506 = vunpack.c.l.b16 %v540
    %v2507 = vunpack.c.h.b16 %v540
    %v2508 = vunpack.c.l.b16 %v541
    %v2509 = vunpack.c.h.b16 %v541
    %v2510 = vunpack.c.l.b16 %v542
    %v2511 = vunpack.c.h.b16 %v542
    %v2512 = vunpack.c.l.b16 %v543
    %v2513 = vunpack.c.h.b16 %v543
    %v2514 = vunpack.c.l.b16 %v544
    %v2515 = vunpack.c.h.b16 %v544
    %v2516 = vunpack.c.l.b16 %v545
    %v2517 = vunpack.c.h.b16 %v545
    %v2518 = vunpack.c.l.b16 %v546
    %v2519 = vunpack.c.h.b16 %v546
    %v2520 = vunpack.c.l.b16 %v547
    %v2521 = vunpack.c.h.b16 %v547
    %v2522 = vunpack.c.l.b16 %v548
    %v2523 = vunpack.c.h.b16 %v548
    %v2524 = vunpack.c.l.b16 %v549
    %v2525 = vunpack.c.h.b16 %v549
    %v2526 = vunpack.c.l.b16 %v550
    %v2527 = vunpack.c.h.b16 %v550
    %v2528 = vunpack.c.l.b16 %v551
    %v2529 = vunpack.c.h.b16 %v551
    %v2530 = vunpack.c.l.b16 %v552
    %v2531 = vunpack.c.h.b16 %v552
    %v2532 = vunpack.c.l.b16 %v553
    %v2533 = vunpack.c.h.b16 %v553
    %v2534 = vunpack.c.l.b16 %v554
    %v2535 = vunpack.c.h.b16 %v554
    %v2536 = vunpack.c.l.b16 %v555
    %v2537 = vunpack.c.h.b16 %v555
    %v2538 = vunpack.c.l.b16 %v556
    %v2539 = vunpack.c.h.b16 %v556
    %v2540 = vunpack.c.l.b16 %v557
    %v2541 = vunpack.c.h.b16 %v557
    %v2542 = vunpack.c.l.b16 %v558
    %v2543 = vunpack.c.h.b16 %v558
    %v2544 = vunpack.c.l.b16 %v559
    %v2545 = vunpack.c.h.b16 %v559
    %v2546 = vunpack.c.l.b16 %v560
    %v2547 = vunpack.c.h.b16 %v560
    %v2548 = vunpack.c.l.b16 %v561
    %v2549 = vunpack.c.h.b16 %v561
    %v2550 = vunpack.c.l.b16 %v562
    %v2551 = vunpack.c.h.b16 %v562
    %v2552 = vunpack.c.l.b16 %v563
    %v2553 = vunpack.c.h.b16 %v563
    %v2554 = vunpack.c.l.b16 %v564
    %v2555 = vunpack.c.h.b16 %v564
    %v2556 = vunpack.c.l.b16 %v565
    %v2557 = vunpack.c.h.b16 %v565
    %v2558 = vunpack.c.l.b16 %v566
    %v2559 = vunpack.c.h.b16 %v566
    %v2560 = vunpack.c.l.b16 %v567
    %v2561 = vunpack.c.h.b16 %v567
    %v2562 = vunpack.c.l.b16 %v568
    %v2563 = vunpack.c.h.b16 %v568
    %v2564 = vunpack.c.l.b16 %v569
    %v2565 = vunpack.c.h.b16 %v569
    %v2566 = vunpack.c.l.b16 %v570
    %v2567 = vunpack.c.h.b16 %v570
    %v2568 = vunpack.c.l.b16 %v571
    %v2569 = vunpack.c.h.b16 %v571
    %v2570 = vunpack.c.l.b16 %v572
    %v2571 = vunpack.c.h.b16 %v572
    %v2572 = vunpack.c.l.b16 %v573
    %v2573 = vunpack.c.h.b16 %v573
    %v2574 = vunpack.c.l.b16 %v574
    %v2575 = vunpack.c.h.b16 %v574
    %v2576 = vunpack.c.l.b16 %v575
    %v2577 = vunpack.c.h.b16 %v575
    %v2578 = vunpack.c.l.b16 %v576
    %v2579 = vunpack.c.h.b16 %v576
    %v2580 = vunpack.c.l.b16 %v577
    %v2581 = vunpack.c.h.b16 %v577
    %v2582 = vunpack.c.l.b16 %v578
    %v2583 = vunpack.c.h.b16 %v578
    %v2584 = vunpack.c.l.b16 %v579
    %v2585 = vunpack.c.h.b16 %v579
    %v2586 = vunpack.c.l.b16 %v580
    %v2587 = vunpack.c.h.b16 %v580
    %v2588 = vunpack.c.l.b16 %v581
    %v2589 = vunpack.c.h.b16 %v581
    %v2590 = vunpack.c.l.b16 %v582
    %v2591 = vunpack.c.h.b16 %v582
    %v2592 = vunpack.c.l.b16 %v583
    %v2593 = vunpack.c.h.b16 %v583
    %v2594 = vunpack.c.l.b16 %v584
    %v2595 = vunpack.c.h.b16 %v584
    %v2596 = vunpack.c.l.b16 %v585
    %v2597 = vunpack.c.h.b16 %v585
    %v2598 = vunpack.c.l.b16 %v586
    %v2599 = vunpack.c.h.b16 %v586
    %v2600 = vunpack.c.l.b16 %v587
    %v2601 = vunpack.c.h.b16 %v587
    %v2602 = vunpack.c.l.b16 %v588
    %v2603 = vunpack.c.h.b16 %v588
    %v2604 = vunpack.c.l.b16 %v589
    %v2605 = vunpack.c.h.b16 %v589
    %v2606 = vunpack.c.l.b16 %v590
    %v2607 = vunpack.c.h.b16 %v590
    %v2608 = vunpack.c.l.b16 %v591
    %v2609 = vunpack.c.h.b16 %v591
    %v2610 = vunpack.c.l.b16 %v592
    %v2611 = vunpack.c.h.b16 %v592
    %v2612 = vunpack.c.l.b16 %v593
    %v2613 = vunpack.c.h.b16 %v593
    %v2614 = vunpack.c.l.b16 %v594
    %v2615 = vunpack.c.h.b16 %v594
    %v2616 = vunpack.c.l.b16 %v595
    %v2617 = vunpack.c.h.b16 %v595
    %v2618 = vunpack.c.l.b16 %v596
    %v2619 = vunpack.c.h.b16 %v596
    %v2620 = vunpack.c.l.b16 %v597
    %v2621 = vunpack.c.h.b16 %v597
    %v2622 = vunpack.c.l.b16 %v598
    %v2623 = vunpack.c.h.b16 %v598
    %v2624 = vunpack.c.l.b16 %v599
    %v2625 = vunpack.c.h.b16 %v599
    %v2626 = vunpack.c.l.b16 %v600
    %v2627 = vunpack.c.h.b16 %v600
    %v2628 = vunpack.c.l.b16 %v601
    %v2629 = vunpack.c.h.b16 %v601
    %v2630 = vunpack.c.l.b16 %v602
    %v2631 = vunpack.c.h.b16 %v602
    %v2632 = vunpack.c.l.b16 %v603
    %v2633 = vunpack.c.h.b16 %v603
    %v2634 = vunpack.c.l.b16 %v604
    %v2635 = vunpack.c.h.b16 %v604
    %v2636 = vunpack.c.l.b16 %v605
    %v2637 = vunpack.c.h.b16 %v605
    %v2638 = vunpack.c.l.b16 %v606
    %v2639 = vunpack.c.h.b16 %v606
    %v2640 = vunpack.c.l.b16 %v607
    %v2641 = vunpack.c.h.b16 %v607
    %v2642 = vunpack.c.l.b16 %v608
    %v2643 = vunpack.c.h.b16 %v608
    %v2644 = vunpack.c.l.b16 %v609
    %v2645 = vunpack.c.h.b16 %v609
    %v2646 = vunpack.c.l.b16 %v610
    %v2647 = vunpack.c.h.b16 %v610
    %v2648 = vunpack.c.l.b16 %v611
    %v2649 = vunpack.c.h.b16 %v611
    %v2650 = vunpack.c.l.b16 %v612
    %v2651 = vunpack.c.h.b16 %v612
    %v2652 = vunpack.c.l.b16 %v613
    %v2653 = vunpack.c.h.b16 %v613
    %v2654 = vunpack.c.l.b16 %v614
    %v2655 = vunpack.c.h.b16 %v614
    %v2656 = vunpack.c.l.b16 %v615
    %v2657 = vunpack.c.h.b16 %v615
    %v2658 = vunpack.c.l.b16 %v616
    %v2659 = vunpack.c.h.b16 %v616
    %v2660 = vunpack.c.l.b16 %v617
    %v2661 = vunpack.c.h.b16 %v617
    %v2662 = vunpack.c.l.b16 %v618
    %v2663 = vunpack.c.h.b16 %v618
    %v2664 = vunpack.c.l.b16 %v619
    %v2665 = vunpack.c.h.b16 %v619
    %v2666 = vunpack.c.l.b16 %v620
    %v2667 = vunpack.c.h.b16 %v620
    %v2668 = vunpack.c.l.b16 %v621
    %v2669 = vunpack.c.h.b16 %v621
    %v2670 = vunpack.c.l.b16 %v622
    %v2671 = vunpack.c.h.b16 %v622
    %v2672 = vunpack.c.l.b16 %v623
    %v2673 = vunpack.c.h.b16 %v623
    %v2674 = vunpack.c.l.b16 %v624
    %v2675 = vunpack.c.h.b16 %v624
    %v2676 = vunpack.c.l.b16 %v625
    %v2677 = vunpack.c.h.b16 %v625
    %v2678 = vunpack.c.l.b16 %v626
    %v2679 = vunpack.c.h.b16 %v626
    %v2680 = vunpack.c.l.b16 %v627
    %v2681 = vunpack.c.h.b16 %v627
    %v2682 = vunpack.c.l.b16 %v628
    %v2683 = vunpack.c.h.b16 %v628
    %v2684 = vunpack.c.l.b16 %v629
    %v2685 = vunpack.c.h.b16 %v629
    %v2686 = vunpack.c.l.b16 %v630
    %v2687 = vunpack.c.h.b16 %v630
    %v2688 = vunpack.c.l.b16 %v631
    %v2689 = vunpack.c.h.b16 %v631
    %v2690 = vunpack.c.l.b16 %v632
    %v2691 = vunpack.c.h.b16 %v632
    %v2692 = vunpack.c.l.b16 %v633
    %v2693 = vunpack.c.h.b16 %v633
    %v2694 = vunpack.c.l.b16 %v634
    %v2695 = vunpack.c.h.b16 %v634
    %v2696 = vunpack.c.l.b16 %v635
    %v2697 = vunpack.c.h.b16 %v635
    %v2698 = vunpack.c.l.b16 %v636
    %v2699 = vunpack.c.h.b16 %v636
    %v2700 = vunpack.c.l.b16 %v637
    %v2701 = vunpack.c.h.b16 %v637
    %v2702 = vunpack.c.l.b16 %v638
    %v2703 = vunpack.c.h.b16 %v638
    %v2704 = vunpack.c.l.b16 %v639
    %v2705 = vunpack.c.h.b16 %v639
    %v2706 = vunpack.c.l.b16 %v640
    %v2707 = vunpack.c.h.b16 %v640
    %v2708 = vunpack.c.l.b16 %v641
    %v2709 = vunpack.c.h.b16 %v641
    %v2710 = vunpack.c.l.b16 %v642
    %v2711 = vunpack.c.h.b16 %v642
    %v2712 = vunpack.c.l.b16 %v643
    %v2713 = vunpack.c.h.b16 %v643
    %v2714 = vunpack.c.l.b16 %v644
    %v2715 = vunpack.c.h.b16 %v644
    %v2716 = vunpack.c.l.b16 %v645
    %v2717 = vunpack.c.h.b16 %v645
    %v2718 = vunpack.c.l.b16 %v646
    %v2719 = vunpack.c.h.b16 %v646
    %v2720 = vunpack.c.l.b16 %v647
    %v2721 = vunpack.c.h.b16 %v647
    %v2722 = vunpack.c.l.b16 %v648
    %v2723 = vunpack.c.h.b16 %v648
    %v2724 = vunpack.c.l.b16 %v649
    %v2725 = vunpack.c.h.b16 %v649
    %v2726 = vunpack.c.l.b16 %v650
    %v2727 = vunpack.c.h.b16 %v650
    %v2728 = vunpack.c.l.b16 %v651
    %v2729 = vunpack.c.h.b16 %v651
    %v2730 = vunpack.c.l.b16 %v652
    %v2731 = vunpack.c.h.b16 %v652
    %v2732 = vunpack.c.l.b16 %v653
    %v2733 = vunpack.c.h.b16 %v653
    %v2734 = vunpack.c.l.b16 %v654
    %v2735 = vunpack.c.h.b16 %v654
    %v2736 = vunpack.c.l.b16 %v655
    %v2737 = vunpack.c.h.b16 %v655
    %v2738 = vunpack.c.l.b16 %v656
    %v2739 = vunpack.c.h.b16 %v656
    %v2740 = vunpack.c.l.b16 %v657
    %v2741 = vunpack.c.h.b16 %v657
    %v2742 = vunpack.c.l.b16 %v658
    %v2743 = vunpack.c.h.b16 %v658
    %v2744 = vunpack.c.l.b16 %v659
    %v2745 = vunpack.c.h.b16 %v659
    %v2746 = vunpack.c.l.b16 %v660
    %v2747 = vunpack.c.h.b16 %v660
    %v2748 = vunpack.c.l.b16 %v661
    %v2749 = vunpack.c.h.b16 %v661
    %v2750 = vunpack.c.l.b16 %v662
    %v2751 = vunpack.c.h.b16 %v662
    %v2752 = vunpack.c.l.b16 %v663
    %v2753 = vunpack.c.h.b16 %v663
    %v2754 = vunpack.c.l.b16 %v664
    %v2755 = vunpack.c.h.b16 %v664
    %v2756 = vunpack.c.l.b16 %v665
    %v2757 = vunpack.c.h.b16 %v665
    %v2758 = vunpack.c.l.b16 %v666
    %v2759 = vunpack.c.h.b16 %v666
    %v2760 = vunpack.c.l.b16 %v667
    %v2761 = vunpack.c.h.b16 %v667
    %v2762 = vunpack.c.l.b16 %v668
    %v2763 = vunpack.c.h.b16 %v668
    %v2764 = vunpack.c.l.b16 %v669
    %v2765 = vunpack.c.h.b16 %v669
    %v2766 = vunpack.c.l.b16 %v670
    %v2767 = vunpack.c.h.b16 %v670
    %v2768 = vunpack.c.l.b16 %v671
    %v2769 = vunpack.c.h.b16 %v671
    %v2770 = vunpack.c.l.b16 %v672
    %v2771 = vunpack.c.h.b16 %v672
    %v2772 = vunpack.c.l.b16 %v673
    %v2773 = vunpack.c.h.b16 %v673
    %v2774 = vunpack.c.l.b16 %v674
    %v2775 = vunpack.c.h.b16 %v674
    %v2776 = vunpack.c.l.b16 %v675
    %v2777 = vunpack.c.h.b16 %v675
    %v2778 = vunpack.c.l.b16 %v676
    %v2779 = vunpack.c.h.b16 %v676
    %v2780 = vunpack.c.l.b16 %v677
    %v2781 = vunpack.c.h.b16 %v677
    %v2782 = vunpack.c.l.b16 %v678
    %v2783 = vunpack.c.h.b16 %v678
    %v2784 = vunpack.c.l.b16 %v679
    %v2785 = vunpack.c.h.b16 %v679
    %v2786 = vunpack.c.l.b16 %v680
    %v2787 = vunpack.c.h.b16 %v680
    %v2788 = vunpack.c.l.b16 %v681
    %v2789 = vunpack.c.h.b16 %v681
    %v2790 = vunpack.c.l.b16 %v682
    %v2791 = vunpack.c.h.b16 %v682
    %v2792 = vunpack.c.l.b16 %v683
    %v2793 = vunpack.c.h.b16 %v683
    %v2794 = vunpack.c.l.b16 %v684
    %v2795 = vunpack.c.h.b16 %v684
    %v2796 = vunpack.c.l.b16 %v685
    %v2797 = vunpack.c.h.b16 %v685
    %v2798 = vunpack.c.l.b16 %v686
    %v2799 = vunpack.c.h.b16 %v686
    %v2800 = vunpack.c.l.b16 %v687
    %v2801 = vunpack.c.h.b16 %v687
    %v2802 = vunpack.c.l.b16 %v688
    %v2803 = vunpack.c.h.b16 %v688
    %v2804 = vunpack.c.l.b16 %v689
    %v2805 = vunpack.c.h.b16 %v689
    %v2806 = vunpack.c.l.b16 %v690
    %v2807 = vunpack.c.h.b16 %v690
    %v2808 = vunpack.c.l.b16 %v691
    %v2809 = vunpack.c.h.b16 %v691
    %v2810 = vunpack.c.l.b16 %v692
    %v2811 = vunpack.c.h.b16 %v692
    %v2812 = vunpack.c.l.b16 %v693
    %v2813 = vunpack.c.h.b16 %v693
    %v2814 = vunpack.c.l.b16 %v694
    %v2815 = vunpack.c.h.b16 %v694
    %v2816 = vunpack.c.l.b16 %v695
    %v2817 = vunpack.c.h.b16 %v695
    %v2818 = vunpack.c.l.b16 %v696
    %v2819 = vunpack.c.h.b16 %v696
    %v2820 = vunpack.c.l.b16 %v697
    %v2821 = vunpack.c.h.b16 %v697
    %v2822 = vunpack.c.l.b16 %v698
    %v2823 = vunpack.c.h.b16 %v698
    %v2824 = vunpack.c.l.b16 %v699
    %v2825 = vunpack.c.h.b16 %v699
    %v2826 = vunpack.c.l.b16 %v700
    %v2827 = vunpack.c.h.b16 %v700
    %v2828 = vunpack.c.l.b16 %v701
    %v2829 = vunpack.c.h.b16 %v701
    %v2830 = vunpack.c.l.b16 %v702
    %v2831 = vunpack.c.h.b16 %v702
    %v2832 = vunpack.c.l.b16 %v703
    %v2833 = vunpack.c.h.b16 %v703
    %v2834 = vunpack.c.l.b16 %v704
    %v2835 = vunpack.c.h.b16 %v704
    %v2836 = vunpack.c.l.b16 %v705
    %v2837 = vunpack.c.h.b16 %v705
    %v2838 = vunpack.c.l.b16 %v706
    %v2839 = vunpack.c.h.b16 %v706
    %v2840 = vunpack.c.l.b16 %v707
    %v2841 = vunpack.c.h.b16 %v707
    %v2842 = vunpack.c.l.b16 %v708
    %v2843 = vunpack.c.h.b16 %v708
    %v2844 = vunpack.c.l.b16 %v709
    %v2845 = vunpack.c.h.b16 %v709
    %v2846 = vunpack.c.l.b16 %v710
    %v2847 = vunpack.c.h.b16 %v710
    %v2848 = vunpack.c.l.b16 %v711
    %v2849 = vunpack.c.h.b16 %v711
    %v2850 = vunpack.c.l.b16 %v712
    %v2851 = vunpack.c.h.b16 %v712
    %v2852 = vunpack.c.l.b16 %v713
    %v2853 = vunpack.c.h.b16 %v713
    %v2854 = vunpack.c.l.b16 %v714
    %v2855 = vunpack.c.h.b16 %v714
    %v2856 = vunpack.c.l.b16 %v715
    %v2857 = vunpack.c.h.b16 %v715
    %v2858 = vunpack.c.l.b16 %v716
    %v2859 = vunpack.c.h.b16 %v716
    %v2860 = vunpack.c.l.b16 %v717
    %v2861 = vunpack.c.h.b16 %v717
    %v2862 = vunpack.c.l.b16 %v718
    %v2863 = vunpack.c.h.b16 %v718
    %v2864 = vunpack.c.l.b16 %v719
    %v2865 = vunpack.c.h.b16 %v719
    %v2866 = vunpack.c.l.b16 %v720
    %v2867 = vunpack.c.h.b16 %v720
    %v2868 = vunpack.c.l.b16 %v721
    %v2869 = vunpack.c.h.b16 %v721
    %v2870 = vunpack.c.l.b16 %v722
    %v2871 = vunpack.c.h.b16 %v722
    %v2872 = vunpack.c.l.b16 %v723
    %v2873 = vunpack.c.h.b16 %v723
    %v2874 = vunpack.c.l.b16 %v724
    %v2875 = vunpack.c.h.b16 %v724
    %v2876 = vunpack.c.l.b16 %v725
    %v2877 = vunpack.c.h.b16 %v725
    %v2878 = vunpack.c.l.b16 %v726
    %v2879 = vunpack.c.h.b16 %v726
    %v2880 = vunpack.c.l.b16 %v727
    %v2881 = vunpack.c.h.b16 %v727
    %v2882 = vunpack.c.l.b16 %v728
    %v2883 = vunpack.c.h.b16 %v728
    %v2884 = vunpack.c.l.b16 %v729
    %v2885 = vunpack.c.h.b16 %v729
    %v2886 = vunpack.c.l.b16 %v730
    %v2887 = vunpack.c.h.b16 %v730
    %v2888 = vunpack.c.l.b16 %v731
    %v2889 = vunpack.c.h.b16 %v731
    %v2890 = vunpack.c.l.b16 %v732
    %v2891 = vunpack.c.h.b16 %v732
    %v2892 = vunpack.c.l.b16 %v733
    %v2893 = vunpack.c.h.b16 %v733
    %v2894 = vunpack.c.l.b16 %v734
    %v2895 = vunpack.c.h.b16 %v734
    %v2896 = vunpack.c.l.b16 %v735
    %v2897 = vunpack.c.h.b16 %v735
    %v2898 = vunpack.c.l.b16 %v736
    %v2899 = vunpack.c.h.b16 %v736
    %v2900 = vunpack.c.l.b16 %v737
    %v2901 = vunpack.c.h.b16 %v737
    %v2902 = vunpack.c.l.b16 %v738
    %v2903 = vunpack.c.h.b16 %v738
    %v2904 = vunpack.c.l.b16 %v739
    %v2905 = vunpack.c.h.b16 %v739
    %v2906 = vunpack.c.l.b16 %v740
    %v2907 = vunpack.c.h.b16 %v740
    %v2908 = vunpack.c.l.b16 %v741
    %v2909 = vunpack.c.h.b16 %v741
    %v2910 = vunpack.c.l.b16 %v742
    %v2911 = vunpack.c.h.b16 %v742
    %v2912 = vunpack.c.l.b16 %v743
    %v2913 = vunpack.c.h.b16 %v743
    %v2914 = vunpack.c.l.b16 %v744
    %v2915 = vunpack.c.h.b16 %v744
    %v2916 = vunpack.c.l.b16 %v745
    %v2917 = vunpack.c.h.b16 %v745
    %v2918 = vunpack.c.l.b16 %v746
    %v2919 = vunpack.c.h.b16 %v746
    %v2920 = vunpack.c.l.b16 %v747
    %v2921 = vunpack.c.h.b16 %v747
    %v2922 = vunpack.c.l.b16 %v748
    %v2923 = vunpack.c.h.b16 %v748
    %v2924 = vunpack.c.l.b16 %v749
    %v2925 = vunpack.c.h.b16 %v749
    %v2926 = vunpack.c.l.b16 %v750
    %v2927 = vunpack.c.h.b16 %v750
    %v2928 = vunpack.c.l.b16 %v751
    %v2929 = vunpack.c.h.b16 %v751
    %v2930 = vunpack.c.l.b16 %v752
    %v2931 = vunpack.c.h.b16 %v752
    %v2932 = vunpack.c.l.b16 %v753
    %v2933 = vunpack.c.h.b16 %v753
    %v2934 = vunpack.c.l.b16 %v754
    %v2935 = vunpack.c.h.b16 %v754
    %v2936 = vunpack.c.l.b16 %v755
    %v2937 = vunpack.c.h.b16 %v755
    %v2938 = vunpack.c.l.b16 %v756
    %v2939 = vunpack.c.h.b16 %v756
    %v2940 = vunpack.c.l.b16 %v757
    %v2941 = vunpack.c.h.b16 %v757
    %v2942 = vunpack.c.l.b16 %v758
    %v2943 = vunpack.c.h.b16 %v758
    %v2944 = vunpack.c.l.b16 %v759
    %v2945 = vunpack.c.h.b16 %v759
    %v2946 = vunpack.c.l.b16 %v760
    %v2947 = vunpack.c.h.b16 %v760
    %v2948 = vunpack.c.l.b16 %v761
    %v2949 = vunpack.c.h.b16 %v761
    %v2950 = vunpack.c.l.b16 %v762
    %v2951 = vunpack.c.h.b16 %v762
    %v2952 = vunpack.c.l.b16 %v763
    %v2953 = vunpack.c.h.b16 %v763
    %v2954 = vunpack.c.l.b16 %v764
    %v2955 = vunpack.c.h.b16 %v764
    %v2956 = vunpack.c.l.b16 %v765
    %v2957 = vunpack.c.h.b16 %v765
    %v2958 = vunpack.c.l.b16 %v766
    %v2959 = vunpack.c.h.b16 %v766
    %v2960 = vunpack.c.l.b16 %v767
    %v2961 = vunpack.c.h.b16 %v767
    %v2962 = vunpack.c.l.b16 %v768
    %v2963 = vunpack.c.h.b16 %v768
    %v2964 = vunpack.c.l.b16 %v769
    %v2965 = vunpack.c.h.b16 %v769
    %v2966 = vunpack.c.l.b16 %v770
    %v2967 = vunpack.c.h.b16 %v770
    %v2968 = vunpack.c.l.b16 %v771
    %v2969 = vunpack.c.h.b16 %v771
    %v2970 = vunpack.c.l.b16 %v772
    %v2971 = vunpack.c.h.b16 %v772
    %v2972 = vunpack.c.l.b16 %v773
    %v2973 = vunpack.c.h.b16 %v773
    %v2974 = vunpack.c.l.b16 %v774
    %v2975 = vunpack.c.h.b16 %v774
    %v2976 = vunpack.c.l.b16 %v775
    %v2977 = vunpack.c.h.b16 %v775
    %v2978 = vunpack.c.l.b16 %v776
    %v2979 = vunpack.c.h.b16 %v776
    %v2980 = vunpack.c.l.b16 %v777
    %v2981 = vunpack.c.h.b16 %v777
    %v2982 = vunpack.c.l.b16 %v778
    %v2983 = vunpack.c.h.b16 %v778
    %v2984 = vunpack.c.l.b16 %v779
    %v2985 = vunpack.c.h.b16 %v779
    %v2986 = vunpack.c.l.b16 %v780
    %v2987 = vunpack.c.h.b16 %v780
    %v2988 = vunpack.c.l.b16 %v781
    %v2989 = vunpack.c.h.b16 %v781
    %v2990 = vunpack.c.l.b16 %v782
    %v2991 = vunpack.c.h.b16 %v782
    %v2992 = vunpack.c.l.b16 %v783
    %v2993 = vunpack.c.h.b16 %v783
    %v2994 = vunpack.c.l.b16 %v784
    %v2995 = vunpack.c.h.b16 %v784
    %v2996 = vunpack.c.l.b16 %v785
    %v2997 = vunpack.c.h.b16 %v785
    %v2998 = vunpack.c.l.b16 %v786
    %v2999 = vunpack.c.h.b16 %v786
    %v3000 = vunpack.c.l.b16 %v787
    %v3001 = vunpack.c.h.b16 %v787
    %v3002 = vunpack.c.l.b16 %v788
    %v3003 = vunpack.c.h.b16 %v788
    %v3004 = vunpack.c.l.b16 %v789
    %v3005 = vunpack.c.h.b16 %v789
    %v3006 = vunpack.c.l.b16 %v790
    %v3007 = vunpack.c.h.b16 %v790
    %v3008 = vunpack.c.l.b16 %v791
    %v3009 = vunpack.c.h.b16 %v791
    %v3010 = vunpack.c.l.b16 %v792
    %v3011 = vunpack.c.h.b16 %v792
    %v3012 = vunpack.c.l.b16 %v793
    %v3013 = vunpack.c.h.b16 %v793
    %v3014 = vunpack.c.l.b16 %v794
    %v3015 = vunpack.c.h.b16 %v794
    %v3016 = vunpack.c.l.b16 %v795
    %v3017 = vunpack.c.h.b16 %v795
    %v3018 = vunpack.c.l.b16 %v796
    %v3019 = vunpack.c.h.b16 %v796
    %v3020 = vunpack.c.l.b16 %v797
    %v3021 = vunpack.c.h.b16 %v797
    %v3022 = vunpack.c.l.b16 %v798
    %v3023 = vunpack.c.h.b16 %v798
    %v3024 = vunpack.c.l.b16 %v799
    %v3025 = vunpack.c.h.b16 %v799
    %v3026 = vunpack.c.l.b16 %v800
    %v3027 = vunpack.c.h.b16 %v800
    %v3028 = vunpack.c.l.b16 %v801
    %v3029 = vunpack.c.h.b16 %v801
    %v3030 = vunpack.c.l.b16 %v802
    %v3031 = vunpack.c.h.b16 %v802
    %v3032 = vunpack.c.l.b16 %v803
    %v3033 = vunpack.c.h.b16 %v803
    %v3034 = vunpack.c.l.b16 %v804
    %v3035 = vunpack.c.h.b16 %v804
    %v3036 = vunpack.c.l.b16 %v805
    %v3037 = vunpack.c.h.b16 %v805
    %v3038 = vunpack.c.l.b16 %v806
    %v3039 = vunpack.c.h.b16 %v806
    %v3040 = vunpack.c.l.b16 %v807
    %v3041 = vunpack.c.h.b16 %v807
    %v3042 = vunpack.c.l.b16 %v808
    %v3043 = vunpack.c.h.b16 %v808
    %v3044 = vunpack.c.l.b16 %v809
    %v3045 = vunpack.c.h.b16 %v809
    %v3046 = vunpack.c.l.b16 %v810
    %v3047 = vunpack.c.h.b16 %v810
    %v3048 = vunpack.c.l.b16 %v811
    %v3049 = vunpack.c.h.b16 %v811
    %v3050 = vunpack.c.l.b16 %v812
    %v3051 = vunpack.c.h.b16 %v812
    %v3052 = vunpack.c.l.b16 %v813
    %v3053 = vunpack.c.h.b16 %v813
    %v3054 = vunpack.c.l.b16 %v814
    %v3055 = vunpack.c.h.b16 %v814
    %v3056 = vunpack.c.l.b16 %v815
    %v3057 = vunpack.c.h.b16 %v815
    %v3058 = vunpack.c.l.b16 %v816
    %v3059 = vunpack.c.h.b16 %v816
    %v3060 = vunpack.c.l.b16 %v817
    %v3061 = vunpack.c.h.b16 %v817
    %v3062 = vunpack.c.l.b16 %v818
    %v3063 = vunpack.c.h.b16 %v818
    %v3064 = vunpack.c.l.b16 %v819
    %v3065 = vunpack.c.h.b16 %v819
    %v3066 = vunpack.c.l.b16 %v820
    %v3067 = vunpack.c.h.b16 %v820
    %v3068 = vunpack.c.l.b16 %v821
    %v3069 = vunpack.c.h.b16 %v821
    %v3070 = vunpack.c.l.b16 %v822
    %v3071 = vunpack.c.h.b16 %v822
    %v3072 = vunpack.c.l.b16 %v823
    %v3073 = vunpack.c.h.b16 %v823
    %v3074 = vunpack.c.l.b16 %v824
    %v3075 = vunpack.c.h.b16 %v824
    %v3076 = vunpack.c.l.b16 %v825
    %v3077 = vunpack.c.h.b16 %v825
    %v3078 = vunpack.c.l.b16 %v826
    %v3079 = vunpack.c.h.b16 %v826
    %v3080 = vunpack.c.l.b16 %v827
    %v3081 = vunpack.c.h.b16 %v827
    %v3082 = vunpack.c.l.b16 %v828
    %v3083 = vunpack.c.h.b16 %v828
    %v3084 = vunpack.c.l.b16 %v829
    %v3085 = vunpack.c.h.b16 %v829
    %v3086 = vunpack.c.l.b16 %v830
    %v3087 = vunpack.c.h.b16 %v830
    %v3088 = vunpack.c.l.b16 %v831
    %v3089 = vunpack.c.h.b16 %v831
    %v3090 = vunpack.c.l.b16 %v832
    %v3091 = vunpack.c.h.b16 %v832
    %v3092 = vunpack.c.l.b16 %v833
    %v3093 = vunpack.c.h.b16 %v833
    %v3094 = vunpack.c.l.b16 %v834
    %v3095 = vunpack.c.h.b16 %v834
    %v3096 = vunpack.c.l.b16 %v835
    %v3097 = vunpack.c.h.b16 %v835
    %v3098 = vunpack.c.l.b16 %v836
    %v3099 = vunpack.c.h.b16 %v836
    %v3100 = vunpack.c.l.b16 %v837
    %v3101 = vunpack.c.h.b16 %v837
    %v3102 = vunpack.c.l.b16 %v838
    %v3103 = vunpack.c.h.b16 %v838
    %v3104 = vunpack.c.l.b16 %v839
    %v3105 = vunpack.c.h.b16 %v839
    %v3106 = vunpack.c.l.b16 %v840
    %v3107 = vunpack.c.h.b16 %v840
    %v3108 = vunpack.c.l.b16 %v841
    %v3109 = vunpack.c.h.b16 %v841
    %v3110 = vunpack.c.l.b16 %v842
    %v3111 = vunpack.c.h.b16 %v842
    %v3112 = vunpack.c.l.b16 %v843
    %v3113 = vunpack.c.h.b16 %v843
    %v3114 = vunpack.c.l.b16 %v844
    %v3115 = vunpack.c.h.b16 %v844
    %v3116 = vunpack.c.l.b16 %v845
    %v3117 = vunpack.c.h.b16 %v845
    %v3118 = vunpack.c.l.b16 %v846
    %v3119 = vunpack.c.h.b16 %v846
    %v3120 = vunpack.c.l.b16 %v847
    %v3121 = vunpack.c.h.b16 %v847
    %v3122 = vunpack.c.l.b16 %v848
    %v3123 = vunpack.c.h.b16 %v848
    %v3124 = vunpack.c.l.b16 %v849
    %v3125 = vunpack.c.h.b16 %v849
    %v3126 = vunpack.c.l.b16 %v850
    %v3127 = vunpack.c.h.b16 %v850
    %v3128 = vunpack.c.l.b16 %v851
    %v3129 = vunpack.c.h.b16 %v851
    %v3130 = vunpack.c.l.b16 %v852
    %v3131 = vunpack.c.h.b16 %v852
    %v3132 = vunpack.c.l.b16 %v853
    %v3133 = vunpack.c.h.b16 %v853
    %v3134 = vunpack.c.l.b16 %v854
    %v3135 = vunpack.c.h.b16 %v854
    %v3136 = vunpack.c.l.b16 %v855
    %v3137 = vunpack.c.h.b16 %v855
    %v3138 = vunpack.c.l.b16 %v856
    %v3139 = vunpack.c.h.b16 %v856
    %v3140 = vunpack.c.l.b16 %v857
    %v3141 = vunpack.c.h.b16 %v857
    %v3142 = vunpack.c.l.b16 %v858
    %v3143 = vunpack.c.h.b16 %v858
    %v3144 = vunpack.c.l.b16 %v859
    %v3145 = vunpack.c.h.b16 %v859
    %v3146 = vunpack.c.l.b16 %v860
    %v3147 = vunpack.c.h.b16 %v860
    %v3148 = vunpack.c.l.b16 %v861
    %v3149 = vunpack.c.h.b16 %v861
    %v3150 = vunpack.c.l.b16 %v862
    %v3151 = vunpack.c.h.b16 %v862
    %v3152 = vunpack.c.l.b16 %v863
    %v3153 = vunpack.c.h.b16 %v863
    %v3154 = vunpack.c.l.b16 %v864
    %v3155 = vunpack.c.h.b16 %v864
    %v3156 = vunpack.c.l.b16 %v865
    %v3157 = vunpack.c.h.b16 %v865
    %v3158 = vunpack.c.l.b16 %v866
    %v3159 = vunpack.c.h.b16 %v866
    %v3160 = vunpack.c.l.b16 %v867
    %v3161 = vunpack.c.h.b16 %v867
    %v3162 = vunpack.c.l.b16 %v868
    %v3163 = vunpack.c.h.b16 %v868
    %v3164 = vunpack.c.l.b16 %v869
    %v3165 = vunpack.c.h.b16 %v869
    %v3166 = vunpack.c.l.b16 %v870
    %v3167 = vunpack.c.h.b16 %v870
    %v3168 = vunpack.c.l.b16 %v871
    %v3169 = vunpack.c.h.b16 %v871
    %v3170 = vunpack.c.l.b16 %v872
    %v3171 = vunpack.c.h.b16 %v872
    %v3172 = vunpack.c.l.b16 %v873
    %v3173 = vunpack.c.h.b16 %v873
    %v3174 = vunpack.c.l.b16 %v874
    %v3175 = vunpack.c.h.b16 %v874
    %v3176 = vunpack.c.l.b16 %v875
    %v3177 = vunpack.c.h.b16 %v875
    %v3178 = vunpack.c.l.b16 %v876
    %v3179 = vunpack.c.h.b16 %v876
    %v3180 = vunpack.c.l.b16 %v877
    %v3181 = vunpack.c.h.b16 %v877
    %v3182 = vunpack.c.l.b16 %v878
    %v3183 = vunpack.c.h.b16 %v878
    %v3184 = vunpack.c.l.b16 %v879
    %v3185 = vunpack.c.h.b16 %v879
    %v3186 = vunpack.c.l.b16 %v880
    %v3187 = vunpack.c.h.b16 %v880
    %v3188 = vunpack.c.l.b16 %v881
    %v3189 = vunpack.c.h.b16 %v881
    %v3190 = vunpack.c.l.b16 %v882
    %v3191 = vunpack.c.h.b16 %v882
    %v3192 = vunpack.c.l.b16 %v883
    %v3193 = vunpack.c.h.b16 %v883
    %v3194 = vunpack.c.l.b16 %v884
    %v3195 = vunpack.c.h.b16 %v884
    %v3196 = vunpack.c.l.b16 %v885
    %v3197 = vunpack.c.h.b16 %v885
    %v3198 = vunpack.c.l.b16 %v886
    %v3199 = vunpack.c.h.b16 %v886
    %v3200 = vunpack.c.l.b16 %v887
    %v3201 = vunpack.c.h.b16 %v887
    %v3202 = vunpack.c.l.b16 %v888
    %v3203 = vunpack.c.h.b16 %v888
    %v3204 = vunpack.c.l.b16 %v889
    %v3205 = vunpack.c.h.b16 %v889
    %v3206 = vunpack.c.l.b16 %v890
    %v3207 = vunpack.c.h.b16 %v890
    %v3208 = vunpack.c.l.b16 %v891
    %v3209 = vunpack.c.h.b16 %v891
    %v3210 = vunpack.c.l.b16 %v892
    %v3211 = vunpack.c.h.b16 %v892
    %v3212 = vunpack.c.l.b16 %v893
    %v3213 = vunpack.c.h.b16 %v893
    %v3214 = vunpack.c.l.b16 %v894
    %v3215 = vunpack.c.h.b16 %v894
    %v3216 = vunpack.c.l.b16 %v895
    %v3217 = vunpack.c.h.b16 %v895
    %v3218 = vunpack.c.l.b16 %v896
    %v3219 = vunpack.c.h.b16 %v896
    %v3220 = vunpack.c.l.b16 %v897
    %v3221 = vunpack.c.h.b16 %v897
    %v3222 = vunpack.c.l.b16 %v898
    %v3223 = vunpack.c.h.b16 %v898
    %v3224 = vunpack.c.l.b16 %v899
    %v3225 = vunpack.c.h.b16 %v899
    %v3226 = vpack.c.b16 %v1694, %v1690
    %v3227 = vpack.c.b16 %v1695, %v1691
    %v3228 = vpack.c.b16 %v1696, %v1692
    %v3229 = vpack.c.b16 %v1697, %v1693
    %v3230 = vpack.c.b16 %v1702, %v1698
    %v3231 = vpack.c.b16 %v1703, %v1699
    %v3232 = vpack.c.b16 %v1704, %v1700
    %v3233 = vpack.c.b16 %v1705, %v1701
    %v3234 = vpack.c.b16 %v1710, %v1706
    %v3235 = vpack.c.b16 %v1711, %v1707
    %v3236 = vpack.c.b16 %v1712, %v1708
    %v3237 = vpack.c.b16 %v1713, %v1709
    %v3238 = vpack.c.b16 %v1718, %v1714
    %v3239 = vpack.c.b16 %v1719, %v1715
    %v3240 = vpack.c.b16 %v1720, %v1716
    %v3241 = vpack.c.b16 %v1721, %v1717
    %v3242 = vpack.c.b16 %v1726, %v1722
    %v3243 = vpack.c.b16 %v1727, %v1723
    %v3244 = vpack.c.b16 %v1728, %v1724
    %v3245 = vpack.c.b16 %v1729, %v1725
    %v3246 = vpack.c.b16 %v1734, %v1730
    %v3247 = vpack.c.b16 %v1735, %v1731
    %v3248 = vpack.c.b16 %v1736, %v1732
    %v3249 = vpack.c.b16 %v1737, %v1733
    %v3250 = vpack.c.b16 %v1742, %v1738
    %v3251 = vpack.c.b16 %v1743, %v1739
    %v3252 = vpack.c.b16 %v1744, %v1740
    %v3253 = vpack.c.b16 %v1745, %v1741
    %v3254 = vpack.c.b16 %v1750, %v1746
    %v3255 = vpack.c.b16 %v1751, %v1747
    %v3256 = vpack.c.b16 %v1752, %v1748
    %v3257 = vpack.c.b16 %v1753, %v1749
    %v3258 = vpack.c.b16 %v1758, %v1754
    %v3259 = vpack.c.b16 %v1759, %v1755
    %v3260 = vpack.c.b16 %v1760, %v1756
    %v3261 = vpack.c.b16 %v1761, %v1757
    %v3262 = vpack.c.b16 %v1766, %v1762
    %v3263 = vpack.c.b16 %v1767, %v1763
    %v3264 = vpack.c.b16 %v1768, %v1764
    %v3265 = vpack.c.b16 %v1769, %v1765
    %v3266 = vpack.c.b16 %v1774, %v1770
    %v3267 = vpack.c.b16 %v1775, %v1771
    %v3268 = vpack.c.b16 %v1776, %v1772
    %v3269 = vpack.c.b16 %v1777, %v1773
    %v3270 = vpack.c.b16 %v1782, %v1778
    %v3271 = vpack.c.b16 %v1783, %v1779
    %v3272 = vpack.c.b16 %v1784, %v1780
    %v3273 = vpack.c.b16 %v1785, %v1781
    %v3274 = vpack.c.b16 %v1790, %v1786
    %v3275 = vpack.c.b16 %v1791, %v1787
    %v3276 = vpack.c.b16 %v1792, %v1788
    %v3277 = vpack.c.b16 %v1793, %v1789
    %v3278 = vpack.c.b16 %v1798, %v1794
    %v3279 = vpack.c.b16 %v1799, %v1795
    %v3280 = vpack.c.b16 %v1800, %v1796
    %v3281 = vpack.c.b16 %v1801, %v1797
    %v3282 = vpack.c.b16 %v1806, %v1802
    %v3283 = vpack.c.b16 %v1807, %v1803
    %v3284 = vpack.c.b16 %v1808, %v1804
    %v3285 = vpack.c.b16 %v1809, %v1805
    %v3286 = vpack.c.b16 %v1814, %v1810
    %v3287 = vpack.c.b16 %v1815, %v1811
    %v3288 = vpack.c.b16 %v1816, %v1812
    %v3289 = vpack.c.b16 %v1817, %v1813
    %v3290 = vpack.c.b16 %v1822, %v1818
    %v3291 = vpack.c.b16 %v1823, %v1819
    %v3292 = vpack.c.b16 %v1824, %v1820
    %v3293 = vpack.c.b16 %v1825, %v1821
    %v3294 = vpack.c.b16 %v1830, %v1826
    %v3295 = vpack.c.b16 %v1831, %v1827
    %v3296 = vpack.c.b16 %v1832, %v1828
    %v3297 = vpack.c.b16 %v1833, %v1829
    %v3298 = vpack.c.b16 %v1838, %v1834
    %v3299 = vpack.c.b16 %v1839, %v1835
    %v3300 = vpack.c.b16 %v1840, %v1836
    %v3301 = vpack.c.b16 %v1841, %v1837
    %v3302 = vpack.c.b16 %v1846, %v1842
    %v3303 = vpack.c.b16 %v1847, %v1843
    %v3304 = vpack.c.b16 %v1848, %v1844
    %v3305 = vpack.c.b16 %v1849, %v1845
    %v3306 = vpack.c.b16 %v1854, %v1850
    %v3307 = vpack.c.b16 %v1855, %v1851
    %v3308 = vpack.c.b16 %v1856, %v1852
    %v3309 = vpack.c.b16 %v1857, %v1853
    %v3310 = vpack.c.b16 %v1862, %v1858
    %v3311 = vpack.c.b16 %v1863, %v1859
    %v3312 = vpack.c.b16 %v1864, %v1860
    %v3313 = vpack.c.b16 %v1865, %v1861
    %v3314 = vpack.c.b16 %v1870, %v1866
    %v3315 = vpack.c.b16 %v1871, %v1867
    %v3316 = vpack.c.b16 %v1872, %v1868
    %v3317 = vpack.c.b16 %v1873, %v1869
    %v3318 = vpack.c.b16 %v1878, %v1874
    %v3319 = vpack.c.b16 %v1879, %v1875
    %v3320 = vpack.c.b16 %v1880, %v1876
    %v3321 = vpack.c.b16 %v1881, %v1877
    %v3322 = vpack.c.b16 %v1886, %v1882
    %v3323 = vpack.c.b16 %v1887, %v1883
    %v3324 = vpack.c.b16 %v1888, %v1884
    %v3325 = vpack.c.b16 %v1889, %v1885
    %v3326 = vpack.c.b16 %v1894, %v1890
    %v3327 = vpack.c.b16 %v1895, %v1891
    %v3328 = vpack.c.b16 %v1896, %v1892
    %v3329 = vpack.c.b16 %v1897, %v1893
    %v3330 = vpack.c.b16 %v1902, %v1898
    %v3331 = vpack.c.b16 %v1903, %v1899
    %v3332 = vpack.c.b16 %v1904, %v1900
    %v3333 = vpack.c.b16 %v1905, %v1901
    %v3334 = vpack.c.b16 %v1910, %v1906
    %v3335 = vpack.c.b16 %v1911, %v1907
    %v3336 = vpack.c.b16 %v1912, %v1908
    %v3337 = vpack.c.b16 %v1913, %v1909
    %v3338 = vpack.c.b16 %v1918, %v1914
    %v3339 = vpack.c.b16 %v1919, %v1915
    %v3340 = vpack.c.b16 %v1920, %v1916
    %v3341 = vpack.c.b16 %v1921, %v1917
    %v3342 = vpack.c.b16 %v1926, %v1922
    %v3343 = vpack.c.b16 %v1927, %v1923
    %v3344 = vpack.c.b16 %v1928, %v1924
    %v3345 = vpack.c.b16 %v1929, %v1925
    %v3346 = vpack.c.b16 %v1934, %v1930
    %v3347 = vpack.c.b16 %v1935, %v1931
    %v3348 = vpack.c.b16 %v1936, %v1932
    %v3349 = vpack.c.b16 %v1937, %v1933
    %v3350 = vpack.c.b16 %v1942, %v1938
    %v3351 = vpack.c.b16 %v1943, %v1939
    %v3352 = vpack.c.b16 %v1944, %v1940
    %v3353 = vpack.c.b16 %v1945, %v1941
    %v3354 = vpack.c.b16 %v1950, %v1946
    %v3355 = vpack.c.b16 %v1951, %v1947
    %v3356 = vpack.c.b16 %v1952, %v1948
    %v3357 = vpack.c.b16 %v1953, %v1949
    %v3358 = vpack.c.b16 %v1958, %v1954
    %v3359 = vpack.c.b16 %v1959, %v1955
    %v3360 = vpack.c.b16 %v1960, %v1956
    %v3361 = vpack.c.b16 %v1961, %v1957
    %v3362 = vpack.c.b16 %v1966, %v1962
    %v3363 = vpack.c.b16 %v1967, %v1963
    %v3364 = vpack.c.b16 %v1968, %v1964
    %v3365 = vpack.c.b16 %v1969, %v1965
    %v3366 = vpack.c.b16 %v1974, %v1970
    %v3367 = vpack.c.b16 %v1975, %v1971
    %v3368 = vpack.c.b16 %v1976, %v1972
    %v3369 = vpack.c.b16 %v1977, %v1973
    %v3370 = vpack.c.b16 %v1982, %v1978
    %v3371 = vpack.c.b16 %v1983, %v1979
    %v3372 = vpack.c.b16 %v1984, %v1980
    %v3373 = vpack.c.b16 %v1985, %v1981
    %v3374 = vpack.c.b16 %v1990, %v1986
    %v3375 = vpack.c.b16 %v1991, %v1987
    %v3376 = vpack.c.b16 %v1992, %v1988
    %v3377 = vpack.c.b16 %v1993, %v1989
    %v3378 = vpack.c.b16 %v1998, %v1994
    %v3379 = vpack.c.b16 %v1999, %v1995
    %v3380 = vpack.c.b16 %v2000, %v1996
    %v3381 = vpack.c.b16 %v2001, %v1997
    %v3382 = vpack.c.b16 %v2006, %v2002
    %v3383 = vpack.c.b16 %v2007, %v2003
    %v3384 = vpack.c.b16 %v2008, %v2004
    %v3385 = vpack.c.b16 %v2009, %v2005
    %v3386 = vpack.c.b16 %v2014, %v2010
    %v3387 = vpack.c.b16 %v2015, %v2011
    %v3388 = vpack.c.b16 %v2016, %v2012
    %v3389 = vpack.c.b16 %v2017, %v2013
    %v3390 = vpack.c.b16 %v2022, %v2018
    %v3391 = vpack.c.b16 %v2023, %v2019
    %v3392 = vpack.c.b16 %v2024, %v2020
    %v3393 = vpack.c.b16 %v2025, %v2021
    %v3394 = vpack.c.b16 %v2030, %v2026
    %v3395 = vpack.c.b16 %v2031, %v2027
    %v3396 = vpack.c.b16 %v2032, %v2028
    %v3397 = vpack.c.b16 %v2033, %v2029
    %v3398 = vpack.c.b16 %v2038, %v2034
    %v3399 = vpack.c.b16 %v2039, %v2035
    %v3400 = vpack.c.b16 %v2040, %v2036
    %v3401 = vpack.c.b16 %v2041, %v2037
    %v3402 = vpack.c.b16 %v2046, %v2042
    %v3403 = vpack.c.b16 %v2047, %v2043
    %v3404 = vpack.c.b16 %v2048, %v2044
    %v3405 = vpack.c.b16 %v2049, %v2045
    %v3406 = vpack.c.b16 %v2054, %v2050
    %v3407 = vpack.c.b16 %v2055, %v2051
    %v3408 = vpack.c.b16 %v2056, %v2052
    %v3409 = vpack.c.b16 %v2057, %v2053
    %v3410 = vpack.c.b16 %v2062, %v2058
    %v3411 = vpack.c.b16 %v2063, %v2059
    %v3412 = vpack.c.b16 %v2064, %v2060
    %v3413 = vpack.c.b16 %v2065, %v2061
    %v3414 = vpack.c.b16 %v2070, %v2066
    %v3415 = vpack.c.b16 %v2071, %v2067
    %v3416 = vpack.c.b16 %v2072, %v2068
    %v3417 = vpack.c.b16 %v2073, %v2069
    %v3418 = vpack.c.b16 %v2078, %v2074
    %v3419 = vpack.c.b16 %v2079, %v2075
    %v3420 = vpack.c.b16 %v2080, %v2076
    %v3421 = vpack.c.b16 %v2081, %v2077
    %v3422 = vpack.c.b16 %v2086, %v2082
    %v3423 = vpack.c.b16 %v2087, %v2083
    %v3424 = vpack.c.b16 %v2088, %v2084
    %v3425 = vpack.c.b16 %v2089, %v2085
    %v3426 = vpack.c.b16 %v2094, %v2090
    %v3427 = vpack.c.b16 %v2095, %v2091
    %v3428 = vpack.c.b16 %v2096, %v2092
    %v3429 = vpack.c.b16 %v2097, %v2093
    %v3430 = vpack.c.b16 %v2102, %v2098
    %v3431 = vpack.c.b16 %v2103, %v2099
    %v3432 = vpack.c.b16 %v2104, %v2100
    %v3433 = vpack.c.b16 %v2105, %v2101
    %v3434 = vpack.c.b16 %v2110, %v2106
    %v3435 = vpack.c.b16 %v2111, %v2107
    %v3436 = vpack.c.b16 %v2112, %v2108
    %v3437 = vpack.c.b16 %v2113, %v2109
    %v3438 = vpack.c.b16 %v2118, %v2114
    %v3439 = vpack.c.b16 %v2119, %v2115
    %v3440 = vpack.c.b16 %v2120, %v2116
    %v3441 = vpack.c.b16 %v2121, %v2117
    %v3442 = vpack.c.b16 %v2126, %v2122
    %v3443 = vpack.c.b16 %v2127, %v2123
    %v3444 = vpack.c.b16 %v2128, %v2124
    %v3445 = vpack.c.b16 %v2129, %v2125
    %v3446 = vpack.c.b16 %v2134, %v2130
    %v3447 = vpack.c.b16 %v2135, %v2131
    %v3448 = vpack.c.b16 %v2136, %v2132
    %v3449 = vpack.c.b16 %v2137, %v2133
    %v3450 = vpack.c.b16 %v2142, %v2138
    %v3451 = vpack.c.b16 %v2143, %v2139
    %v3452 = vpack.c.b16 %v2144, %v2140
    %v3453 = vpack.c.b16 %v2145, %v2141
    %v3454 = vpack.c.b16 %v2150, %v2146
    %v3455 = vpack.c.b16 %v2151, %v2147
    %v3456 = vpack.c.b16 %v2152, %v2148
    %v3457 = vpack.c.b16 %v2153, %v2149
    %v3458 = vpack.c.b16 %v2158, %v2154
    %v3459 = vpack.c.b16 %v2159, %v2155
    %v3460 = vpack.c.b16 %v2160, %v2156
    %v3461 = vpack.c.b16 %v2161, %v2157
    %v3462 = vpack.c.b16 %v2166, %v2162
    %v3463 = vpack.c.b16 %v2167, %v2163
    %v3464 = vpack.c.b16 %v2168, %v2164
    %v3465 = vpack.c.b16 %v2169, %v2165
    %v3466 = vpack.c.b16 %v2174, %v2170
    %v3467 = vpack.c.b16 %v2175, %v2171
    %v3468 = vpack.c.b16 %v2176, %v2172
    %v3469 = vpack.c.b16 %v2177, %v2173
    %v3470 = vpack.c.b16 %v2182, %v2178
    %v3471 = vpack.c.b16 %v2183, %v2179
    %v3472 = vpack.c.b16 %v2184, %v2180
    %v3473 = vpack.c.b16 %v2185, %v2181
    %v3474 = vpack.c.b16 %v2190, %v2186
    %v3475 = vpack.c.b16 %v2191, %v2187
    %v3476 = vpack.c.b16 %v2192, %v2188
    %v3477 = vpack.c.b16 %v2193, %v2189
    %v3478 = vpack.c.b16 %v2198, %v2194
    %v3479 = vpack.c.b16 %v2199, %v2195
    %v3480 = vpack.c.b16 %v2200, %v2196
    %v3481 = vpack.c.b16 %v2201, %v2197
    %v3482 = vpack.c.b16 %v2206, %v2202
    %v3483 = vpack.c.b16 %v2207, %v2203
    %v3484 = vpack.c.b16 %v2208, %v2204
    %v3485 = vpack.c.b16 %v2209, %v2205
    %v3486 = vpack.c.b16 %v2214, %v2210
    %v3487 = vpack.c.b16 %v2215, %v2211
    %v3488 = vpack.c.b16 %v2216, %v2212
    %v3489 = vpack.c.b16 %v2217, %v2213
    %v3490 = vpack.c.b16 %v2222, %v2218
    %v3491 = vpack.c.b16 %v2223, %v2219
    %v3492 = vpack.c.b16 %v2224, %v2220
    %v3493 = vpack.c.b16 %v2225, %v2221
    %v3494 = vpack.c.b16 %v2230, %v2226
    %v3495 = vpack.c.b16 %v2231, %v2227
    %v3496 = vpack.c.b16 %v2232, %v2228
    %v3497 = vpack.c.b16 %v2233, %v2229
    %v3498 = vpack.c.b16 %v2238, %v2234
    %v3499 = vpack.c.b16 %v2239, %v2235
    %v3500 = vpack.c.b16 %v2240, %v2236
    %v3501 = vpack.c.b16 %v2241, %v2237
    %v3502 = vpack.c.b16 %v2246, %v2242
    %v3503 = vpack.c.b16 %v2247, %v2243
    %v3504 = vpack.c.b16 %v2248, %v2244
    %v3505 = vpack.c.b16 %v2249, %v2245
    %v3506 = vpack.c.b16 %v2254, %v2250
    %v3507 = vpack.c.b16 %v2255, %v2251
    %v3508 = vpack.c.b16 %v2256, %v2252
    %v3509 = vpack.c.b16 %v2257, %v2253
    %v3510 = vpack.c.b16 %v2262, %v2258
    %v3511 = vpack.c.b16 %v2263, %v2259
    %v3512 = vpack.c.b16 %v2264, %v2260
    %v3513 = vpack.c.b16 %v2265, %v2261
    %v3514 = vpack.c.b16 %v2270, %v2266
    %v3515 = vpack.c.b16 %v2271, %v2267
    %v3516 = vpack.c.b16 %v2272, %v2268
    %v3517 = vpack.c.b16 %v2273, %v2269
    %v3518 = vpack.c.b16 %v2278, %v2274
    %v3519 = vpack.c.b16 %v2279, %v2275
    %v3520 = vpack.c.b16 %v2280, %v2276
    %v3521 = vpack.c.b16 %v2281, %v2277
    %v3522 = vpack.c.b16 %v2286, %v2282
    %v3523 = vpack.c.b16 %v2287, %v2283
    %v3524 = vpack.c.b16 %v2288, %v2284
    %v3525 = vpack.c.b16 %v2289, %v2285
    %v3526 = vpack.c.b16 %v2294, %v2290
    %v3527 = vpack.c.b16 %v2295, %v2291
    %v3528 = vpack.c.b16 %v2296, %v2292
    %v3529 = vpack.c.b16 %v2297, %v2293
    %v3530 = vpack.c.b16 %v2302, %v2298
    %v3531 = vpack.c.b16 %v2303, %v2299
    %v3532 = vpack.c.b16 %v2304, %v2300
    %v3533 = vpack.c.b16 %v2305, %v2301
    %v3534 = vpack.c.b16 %v2310, %v2306
    %v3535 = vpack.c.b16 %v2311, %v2307
    %v3536 = vpack.c.b16 %v2312, %v2308
    %v3537 = vpack.c.b16 %v2313, %v2309
    %v3538 = vpack.c.b16 %v2318, %v2314
    %v3539 = vpack.c.b16 %v2319, %v2315
    %v3540 = vpack.c.b16 %v2320, %v2316
    %v3541 = vpack.c.b16 %v2321, %v2317
    %v3542 = vpack.c.b16 %v2326, %v2322
    %v3543 = vpack.c.b16 %v2327, %v2323
    %v3544 = vpack.c.b16 %v2328, %v2324
    %v3545 = vpack.c.b16 %v2329, %v2325
    %v3546 = vpack.c.b16 %v2334, %v2330
    %v3547 = vpack.c.b16 %v2335, %v2331
    %v3548 = vpack.c.b16 %v2336, %v2332
    %v3549 = vpack.c.b16 %v2337, %v2333
    %v3550 = vpack.c.b16 %v2342, %v2338
    %v3551 = vpack.c.b16 %v2343, %v2339
    %v3552 = vpack.c.b16 %v2344, %v2340
    %v3553 = vpack.c.b16 %v2345, %v2341
    %v3554 = vpack.c.b16 %v2350, %v2346
    %v3555 = vpack.c.b16 %v2351, %v2347
    %v3556 = vpack.c.b16 %v2352, %v2348
    %v3557 = vpack.c.b16 %v2353, %v2349
    %v3558 = vpack.c.b16 %v2358, %v2354
    %v3559 = vpack.c.b16 %v2359, %v2355
    %v3560 = vpack.c.b16 %v2360, %v2356
    %v3561 = vpack.c.b16 %v2361, %v2357
    %v3562 = vpack.c.b16 %v2366, %v2362
    %v3563 = vpack.c.b16 %v2367, %v2363
    %v3564 = vpack.c.b16 %v2368, %v2364
    %v3565 = vpack.c.b16 %v2369, %v2365
    %v3566 = vpack.c.b16 %v2374, %v2370
    %v3567 = vpack.c.b16 %v2375, %v2371
    %v3568 = vpack.c.b16 %v2376, %v2372
    %v3569 = vpack.c.b16 %v2377, %v2373
    %v3570 = vpack.c.b16 %v2382, %v2378
    %v3571 = vpack.c.b16 %v2383, %v2379
    %v3572 = vpack.c.b16 %v2384, %v2380
    %v3573 = vpack.c.b16 %v2385, %v2381
    %v3574 = vpack.c.b16 %v2390, %v2386
    %v3575 = vpack.c.b16 %v2391, %v2387
    %v3576 = vpack.c.b16 %v2392, %v2388
    %v3577 = vpack.c.b16 %v2393, %v2389
    %v3578 = vpack.c.b16 %v2398, %v2394
    %v3579 = vpack.c.b16 %v2399, %v2395
    %v3580 = vpack.c.b16 %v2400, %v2396
    %v3581 = vpack.c.b16 %v2401, %v2397
    %v3582 = vpack.c.b16 %v2406, %v2402
    %v3583 = vpack.c.b16 %v2407, %v2403
    %v3584 = vpack.c.b16 %v2408, %v2404
    %v3585 = vpack.c.b16 %v2409, %v2405
    %v3586 = vpack.c.b16 %v2414, %v2410
    %v3587 = vpack.c.b16 %v2415, %v2411
    %v3588 = vpack.c.b16 %v2416, %v2412
    %v3589 = vpack.c.b16 %v2417, %v2413
    %v3590 = vpack.c.b16 %v2422, %v2418
    %v3591 = vpack.c.b16 %v2423, %v2419
    %v3592 = vpack.c.b16 %v2424, %v2420
    %v3593 = vpack.c.b16 %v2425, %v2421
    %v3594 = vpack.c.b16 %v2430, %v2426
    %v3595 = vpack.c.b16 %v2431, %v2427
    %v3596 = vpack.c.b16 %v2432, %v2428
    %v3597 = vpack.c.b16 %v2433, %v2429
    %v3598 = vpack.c.b16 %v2438, %v2434
    %v3599 = vpack.c.b16 %v2439, %v2435
    %v3600 = vpack.c.b16 %v2440, %v2436
    %v3601 = vpack.c.b16 %v2441, %v2437
    %v3602 = vpack.c.b16 %v2446, %v2442
    %v3603 = vpack.c.b16 %v2447, %v2443
    %v3604 = vpack.c.b16 %v2448, %v2444
    %v3605 = vpack.c.b16 %v2449, %v2445
    %v3606 = vpack.c.b16 %v2454, %v2450
    %v3607 = vpack.c.b16 %v2455, %v2451
    %v3608 = vpack.c.b16 %v2456, %v2452
    %v3609 = vpack.c.b16 %v2457, %v2453
    %v3610 = vpack.c.b16 %v2462, %v2458
    %v3611 = vpack.c.b16 %v2463, %v2459
    %v3612 = vpack.c.b16 %v2464, %v2460
    %v3613 = vpack.c.b16 %v2465, %v2461
    %v3614 = vpack.c.b16 %v2470, %v2466
    %v3615 = vpack.c.b16 %v2471, %v2467
    %v3616 = vpack.c.b16 %v2472, %v2468
    %v3617 = vpack.c.b16 %v2473, %v2469
    %v3618 = vpack.c.b16 %v2478, %v2474
    %v3619 = vpack.c.b16 %v2479, %v2475
    %v3620 = vpack.c.b16 %v2480, %v2476
    %v3621 = vpack.c.b16 %v2481, %v2477
    %v3622 = vpack.c.b16 %v2486, %v2482
    %v3623 = vpack.c.b16 %v2487, %v2483
    %v3624 = vpack.c.b16 %v2488, %v2484
    %v3625 = vpack.c.b16 %v2489, %v2485
    %v3626 = vpack.c.b16 %v2494, %v2490
    %v3627 = vpack.c.b16 %v2495, %v2491
    %v3628 = vpack.c.b16 %v2496, %v2492
    %v3629 = vpack.c.b16 %v2497, %v2493
    %v3630 = vpack.c.b16 %v2502, %v2498
    %v3631 = vpack.c.b16 %v2503, %v2499
    %v3632 = vpack.c.b16 %v2504, %v2500
    %v3633 = vpack.c.b16 %v2505, %v2501
    %v3634 = vpack.c.b16 %v2510, %v2506
    %v3635 = vpack.c.b16 %v2511, %v2507
    %v3636 = vpack.c.b16 %v2512, %v2508
    %v3637 = vpack.c.b16 %v2513, %v2509
    %v3638 = vpack.c.b16 %v2518, %v2514
    %v3639 = vpack.c.b16 %v2519, %v2515
    %v3640 = vpack.c.b16 %v2520, %v2516
    %v3641 = vpack.c.b16 %v2521, %v2517
    %v3642 = vpack.c.b16 %v2526, %v2522
    %v3643 = vpack.c.b16 %v2527, %v2523
    %v3644 = vpack.c.b16 %v2528, %v2524
    %v3645 = vpack.c.b16 %v2529, %v2525
    %v3646 = vpack.c.b16 %v2534, %v2530
    %v3647 = vpack.c.b16 %v2535, %v2531
    %v3648 = vpack.c.b16 %v2536, %v2532
    %v3649 = vpack.c.b16 %v2537, %v2533
    %v3650 = vpack.c.b16 %v2542, %v2538
    %v3651 = vpack.c.b16 %v2543, %v2539
    %v3652 = vpack.c.b16 %v2544, %v2540
    %v3653 = vpack.c.b16 %v2545, %v2541
    %v3654 = vpack.c.b16 %v2550, %v2546
    %v3655 = vpack.c.b16 %v2551, %v2547
    %v3656 = vpack.c.b16 %v2552, %v2548
    %v3657 = vpack.c.b16 %v2553, %v2549
    %v3658 = vpack.c.b16 %v2558, %v2554
    %v3659 = vpack.c.b16 %v2559, %v2555
    %v3660 = vpack.c.b16 %v2560, %v2556
    %v3661 = vpack.c.b16 %v2561, %v2557
    %v3662 = vpack.c.b16 %v2566, %v2562
    %v3663 = vpack.c.b16 %v2567, %v2563
    %v3664 = vpack.c.b16 %v2568, %v2564
    %v3665 = vpack.c.b16 %v2569, %v2565
    %v3666 = vpack.c.b16 %v2574, %v2570
    %v3667 = vpack.c.b16 %v2575, %v2571
    %v3668 = vpack.c.b16 %v2576, %v2572
    %v3669 = vpack.c.b16 %v2577, %v2573
    %v3670 = vpack.c.b16 %v2582, %v2578
    %v3671 = vpack.c.b16 %v2583, %v2579
    %v3672 = vpack.c.b16 %v2584, %v2580
    %v3673 = vpack.c.b16 %v2585, %v2581
    %v3674 = vpack.c.b16 %v2590, %v2586
    %v3675 = vpack.c.b16 %v2591, %v2587
    %v3676 = vpack.c.b16 %v2592, %v2588
    %v3677 = vpack.c.b16 %v2593, %v2589
    %v3678 = vpack.c.b16 %v2598, %v2594
    %v3679 = vpack.c.b16 %v2599, %v2595
    %v3680 = vpack.c.b16 %v2600, %v2596
    %v3681 = vpack.c.b16 %v2601, %v2597
    %v3682 = vpack.c.b16 %v2606, %v2602
    %v3683 = vpack.c.b16 %v2607, %v2603
    %v3684 = vpack.c.b16 %v2608, %v2604
    %v3685 = vpack.c.b16 %v2609, %v2605
    %v3686 = vpack.c.b16 %v2614, %v2610
    %v3687 = vpack.c.b16 %v2615, %v2611
    %v3688 = vpack.c.b16 %v2616, %v2612
    %v3689 = vpack.c.b16 %v2617, %v2613
    %v3690 = vpack.c.b16 %v2622, %v2618
    %v3691 = vpack.c.b16 %v2623, %v2619
    %v3692 = vpack.c.b16 %v2624, %v2620
    %v3693 = vpack.c.b16 %v2625, %v2621
    %v3694 = vpack.c.b16 %v2630, %v2626
    %v3695 = vpack.c.b16 %v2631, %v2627
    %v3696 = vpack.c.b16 %v2632, %v2628
    %v3697 = vpack.c.b16 %v2633, %v2629
    %v3698 = vpack.c.b16 %v2638, %v2634
    %v3699 = vpack.c.b16 %v2639, %v2635
    %v3700 = vpack.c.b16 %v2640, %v2636
    %v3701 = vpack.c.b16 %v2641, %v2637
    %v3702 = vpack.c.b16 %v2646, %v2642
    %v3703 = vpack.c.b16 %v2647, %v2643
    %v3704 = vpack.c.b16 %v2648, %v2644
    %v3705 = vpack.c.b16 %v2649, %v2645
    %v3706 = vpack.c.b16 %v2654, %v2650
    %v3707 = vpack.c.b16 %v2655, %v2651
    %v3708 = vpack.c.b16 %v2656, %v2652
    %v3709 = vpack.c.b16 %v2657, %v2653
    %v3710 = vpack.c.b16 %v2662, %v2658
    %v3711 = vpack.c.b16 %v2663, %v2659
    %v3712 = vpack.c.b16 %v2664, %v2660
    %v3713 = vpack.c.b16 %v2665, %v2661
    %v3714 = vpack.c.b16 %v2670, %v2666
    %v3715 = vpack.c.b16 %v2671, %v2667
    %v3716 = vpack.c.b16 %v2672, %v2668
    %v3717 = vpack.c.b16 %v2673, %v2669
    %v3718 = vpack.c.b16 %v2678, %v2674
    %v3719 = vpack.c.b16 %v2679, %v2675
    %v3720 = vpack.c.b16 %v2680, %v2676
    %v3721 = vpack.c.b16 %v2681, %v2677
    %v3722 = vpack.c.b16 %v2686, %v2682
    %v3723 = vpack.c.b16 %v2687, %v2683
    %v3724 = vpack.c.b16 %v2688, %v2684
    %v3725 = vpack.c.b16 %v2689, %v2685
    %v3726 = vpack.c.b16 %v2694, %v2690
    %v3727 = vpack.c.b16 %v2695, %v2691
    %v3728 = vpack.c.b16 %v2696, %v2692
    %v3729 = vpack.c.b16 %v2697, %v2693
    %v3730 = vpack.c.b16 %v2702, %v2698
    %v3731 = vpack.c.b16 %v2703, %v2699
    %v3732 = vpack.c.b16 %v2704, %v2700
    %v3733 = vpack.c.b16 %v2705, %v2701
    %v3734 = vpack.c.b16 %v2710, %v2706
    %v3735 = vpack.c.b16 %v2711, %v2707
    %v3736 = vpack.c.b16 %v2712, %v2708
    %v3737 = vpack.c.b16 %v2713, %v2709
    %v3738 = vpack.c.b16 %v2718, %v2714
    %v3739 = vpack.c.b16 %v2719, %v2715
    %v3740 = vpack.c.b16 %v2720, %v2716
    %v3741 = vpack.c.b16 %v2721, %v2717
    %v3742 = vpack.c.b16 %v2726, %v2722
    %v3743 = vpack.c.b16 %v2727, %v2723
    %v3744 = vpack.c.b16 %v2728, %v2724
    %v3745 = vpack.c.b16 %v2729, %v2725
    %v3746 = vpack.c.b16 %v2734, %v2730
    %v3747 = vpack.c.b16 %v2735, %v2731
    %v3748 = vpack.c.b16 %v2736, %v2732
    %v3749 = vpack.c.b16 %v2737, %v2733
    %v3750 = vpack.c.b16 %v2742, %v2738
    %v3751 = vpack.c.b16 %v2743, %v2739
    %v3752 = vpack.c.b16 %v2744, %v2740
    %v3753 = vpack.c.b16 %v2745, %v2741
    %v3754 = vpack.c.b16 %v2750, %v2746
    %v3755 = vpack.c.b16 %v2751, %v2747
    %v3756 = vpack.c.b16 %v2752, %v2748
    %v3757 = vpack.c.b16 %v2753, %v2749
    %v3758 = vpack.c.b16 %v2758, %v2754
    %v3759 = vpack.c.b16 %v2759, %v2755
    %v3760 = vpack.c.b16 %v2760, %v2756
    %v3761 = vpack.c.b16 %v2761, %v2757
    %v3762 = vpack.c.b16 %v2766, %v2762
    %v3763 = vpack.c.b16 %v2767, %v2763
    %v3764 = vpack.c.b16 %v2768, %v2764
    %v3765 = vpack.c.b16 %v2769, %v2765
    %v3766 = vpack.c.b16 %v2774, %v2770
    %v3767 = vpack.c.b16 %v2775, %v2771
    %v3768 = vpack.c.b16 %v2776, %v2772
    %v3769 = vpack.c.b16 %v2777, %v2773
    %v3770 = vpack.c.b16 %v2782, %v2778
    %v3771 = vpack.c.b16 %v2783, %v2779
    %v3772 = vpack.c.b16 %v2784, %v2780
    %v3773 = vpack.c.b16 %v2785, %v2781
    %v3774 = vpack.c.b16 %v2790, %v2786
    %v3775 = vpack.c.b16 %v2791, %v2787
    %v3776 = vpack.c.b16 %v2792, %v2788
    %v3777 = vpack.c.b16 %v2793, %v2789
    %v3778 = vpack.c.b16 %v2798, %v2794
    %v3779 = vpack.c.b16 %v2799, %v2795
    %v3780 = vpack.c.b16 %v2800, %v2796
    %v3781 = vpack.c.b16 %v2801, %v2797
    %v3782 = vpack.c.b16 %v2806, %v2802
    %v3783 = vpack.c.b16 %v2807, %v2803
    %v3784 = vpack.c.b16 %v2808, %v2804
    %v3785 = vpack.c.b16 %v2809, %v2805
    %v3786 = vpack.c.b16 %v2814, %v2810
    %v3787 = vpack.c.b16 %v2815, %v2811
    %v3788 = vpack.c.b16 %v2816, %v2812
    %v3789 = vpack.c.b16 %v2817, %v2813
    %v3790 = vpack.c.b16 %v2822, %v2818
    %v3791 = vpack.c.b16 %v2823, %v2819
    %v3792 = vpack.c.b16 %v2824, %v2820
    %v3793 = vpack.c.b16 %v2825, %v2821
    %v3794 = vpack.c.b16 %v2830, %v2826
    %v3795 = vpack.c.b16 %v2831, %v2827
    %v3796 = vpack.c.b16 %v2832, %v2828
    %v3797 = vpack.c.b16 %v2833, %v2829
    %v3798 = vpack.c.b16 %v2838, %v2834
    %v3799 = vpack.c.b16 %v2839, %v2835
    %v3800 = vpack.c.b16 %v2840, %v2836
    %v3801 = vpack.c.b16 %v2841, %v2837
    %v3802 = vpack.c.b16 %v2846, %v2842
    %v3803 = vpack.c.b16 %v2847, %v2843
    %v3804 = vpack.c.b16 %v2848, %v2844
    %v3805 = vpack.c.b16 %v2849, %v2845
    %v3806 = vpack.c.b16 %v2854, %v2850
    %v3807 = vpack.c.b16 %v2855, %v2851
    %v3808 = vpack.c.b16 %v2856, %v2852
    %v3809 = vpack.c.b16 %v2857, %v2853
    %v3810 = vpack.c.b16 %v2862, %v2858
    %v3811 = vpack.c.b16 %v2863, %v2859
    %v3812 = vpack.c.b16 %v2864, %v2860
    %v3813 = vpack.c.b16 %v2865, %v2861
    %v3814 = vpack.c.b16 %v2870, %v2866
    %v3815 = vpack.c.b16 %v2871, %v2867
    %v3816 = vpack.c.b16 %v2872, %v2868
    %v3817 = vpack.c.b16 %v2873, %v2869
    %v3818 = vpack.c.b16 %v2878, %v2874
    %v3819 = vpack.c.b16 %v2879, %v2875
    %v3820 = vpack.c.b16 %v2880, %v2876
    %v3821 = vpack.c.b16 %v2881, %v2877
    %v3822 = vpack.c.b16 %v2886, %v2882
    %v3823 = vpack.c.b16 %v2887, %v2883
    %v3824 = vpack.c.b16 %v2888, %v2884
    %v3825 = vpack.c.b16 %v2889, %v2885
    %v3826 = vpack.c.b16 %v2894, %v2890
    %v3827 = vpack.c.b16 %v2895, %v2891
    %v3828 = vpack.c.b16 %v2896, %v2892
    %v3829 = vpack.c.b16 %v2897, %v2893
    %v3830 = vpack.c.b16 %v2902, %v2898
    %v3831 = vpack.c.b16 %v2903, %v2899
    %v3832 = vpack.c.b16 %v2904, %v2900
    %v3833 = vpack.c.b16 %v2905, %v2901
    %v3834 = vpack.c.b16 %v2910, %v2906
    %v3835 = vpack.c.b16 %v2911, %v2907
    %v3836 = vpack.c.b16 %v2912, %v2908
    %v3837 = vpack.c.b16 %v2913, %v2909
    %v3838 = vpack.c.b16 %v2918, %v2914
    %v3839 = vpack.c.b16 %v2919, %v2915
    %v3840 = vpack.c.b16 %v2920, %v2916
    %v3841 = vpack.c.b16 %v2921, %v2917
    %v3842 = vpack.c.b16 %v2926, %v2922
    %v3843 = vpack.c.b16 %v2927, %v2923
    %v3844 = vpack.c.b16 %v2928, %v2924
    %v3845 = vpack.c.b16 %v2929, %v2925
    %v3846 = vpack.c.b16 %v2934, %v2930
    %v3847 = vpack.c.b16 %v2935, %v2931
    %v3848 = vpack.c.b16 %v2936, %v2932
    %v3849 = vpack.c.b16 %v2937, %v2933
    %v3850 = vpack.c.b16 %v2942, %v2938
    %v3851 = vpack.c.b16 %v2943, %v2939
    %v3852 = vpack.c.b16 %v2944, %v2940
    %v3853 = vpack.c.b16 %v2945, %v2941
    %v3854 = vpack.c.b16 %v2950, %v2946
    %v3855 = vpack.c.b16 %v2951, %v2947
    %v3856 = vpack.c.b16 %v2952, %v2948
    %v3857 = vpack.c.b16 %v2953, %v2949
    %v3858 = vpack.c.b16 %v2958, %v2954
    %v3859 = vpack.c.b16 %v2959, %v2955
    %v3860 = vpack.c.b16 %v2960, %v2956
    %v3861 = vpack.c.b16 %v2961, %v2957
    %v3862 = vpack.c.b16 %v2966, %v2962
    %v3863 = vpack.c.b16 %v2967, %v2963
    %v3864 = vpack.c.b16 %v2968, %v2964
    %v3865 = vpack.c.b16 %v2969, %v2965
    %v3866 = vpack.c.b16 %v2974, %v2970
    %v3867 = vpack.c.b16 %v2975, %v2971
    %v3868 = vpack.c.b16 %v2976, %v2972
    %v3869 = vpack.c.b16 %v2977, %v2973
    %v3870 = vpack.c.b16 %v2982, %v2978
    %v3871 = vpack.c.b16 %v2983, %v2979
    %v3872 = vpack.c.b16 %v2984, %v2980
    %v3873 = vpack.c.b16 %v2985, %v2981
    %v3874 = vpack.c.b16 %v2990, %v2986
    %v3875 = vpack.c.b16 %v2991, %v2987
    %v3876 = vpack.c.b16 %v2992, %v2988
    %v3877 = vpack.c.b16 %v2993, %v2989
    %v3878 = vpack.c.b16 %v2998, %v2994
    %v3879 = vpack.c.b16 %v2999, %v2995
    %v3880 = vpack.c.b16 %v3000, %v2996
    %v3881 = vpack.c.b16 %v3001, %v2997
    %v3882 = vpack.c.b16 %v3006, %v3002
    %v3883 = vpack.c.b16 %v3007, %v3003
    %v3884 = vpack.c.b16 %v3008, %v3004
    %v3885 = vpack.c.b16 %v3009, %v3005
    %v3886 = vpack.c.b16 %v3014, %v3010
    %v3887 = vpack.c.b16 %v3015, %v3011
    %v3888 = vpack.c.b16 %v3016, %v3012
    %v3889 = vpack.c.b16 %v3017, %v3013
    %v3890 = vpack.c.b16 %v3022, %v3018
    %v3891 = vpack.c.b16 %v3023, %v3019
    %v3892 = vpack.c.b16 %v3024, %v3020
    %v3893 = vpack.c.b16 %v3025, %v3021
    %v3894 = vpack.c.b16 %v3030, %v3026
    %v3895 = vpack.c.b16 %v3031, %v3027
    %v3896 = vpack.c.b16 %v3032, %v3028
    %v3897 = vpack.c.b16 %v3033, %v3029
    %v3898 = vpack.c.b16 %v3038, %v3034
    %v3899 = vpack.c.b16 %v3039, %v3035
    %v3900 = vpack.c.b16 %v3040, %v3036
    %v3901 = vpack.c.b16 %v3041, %v3037
    %v3902 = vpack.c.b16 %v3046, %v3042
    %v3903 = vpack.c.b16 %v3047, %v3043
    %v3904 = vpack.c.b16 %v3048, %v3044
    %v3905 = vpack.c.b16 %v3049, %v3045
    %v3906 = vpack.c.b16 %v3054, %v3050
    %v3907 = vpack.c.b16 %v3055, %v3051
    %v3908 = vpack.c.b16 %v3056, %v3052
    %v3909 = vpack.c.b16 %v3057, %v3053
    %v3910 = vpack.c.b16 %v3062, %v3058
    %v3911 = vpack.c.b16 %v3063, %v3059
    %v3912 = vpack.c.b16 %v3064, %v3060
    %v3913 = vpack.c.b16 %v3065, %v3061
    %v3914 = vpack.c.b16 %v3070, %v3066
    %v3915 = vpack.c.b16 %v3071, %v3067
    %v3916 = vpack.c.b16 %v3072, %v3068
    %v3917 = vpack.c.b16 %v3073, %v3069
    %v3918 = vpack.c.b16 %v3078, %v3074
    %v3919 = vpack.c.b16 %v3079, %v3075
    %v3920 = vpack.c.b16 %v3080, %v3076
    %v3921 = vpack.c.b16 %v3081, %v3077
    %v3922 = vpack.c.b16 %v3086, %v3082
    %v3923 = vpack.c.b16 %v3087, %v3083
    %v3924 = vpack.c.b16 %v3088, %v3084
    %v3925 = vpack.c.b16 %v3089, %v3085
    %v3926 = vpack.c.b16 %v3094, %v3090
    %v3927 = vpack.c.b16 %v3095, %v3091
    %v3928 = vpack.c.b16 %v3096, %v3092
    %v3929 = vpack.c.b16 %v3097, %v3093
    %v3930 = vpack.c.b16 %v3102, %v3098
    %v3931 = vpack.c.b16 %v3103, %v3099
    %v3932 = vpack.c.b16 %v3104, %v3100
    %v3933 = vpack.c.b16 %v3105, %v3101
    %v3934 = vpack.c.b16 %v3110, %v3106
    %v3935 = vpack.c.b16 %v3111, %v3107
    %v3936 = vpack.c.b16 %v3112, %v3108
    %v3937 = vpack.c.b16 %v3113, %v3109
    %v3938 = vpack.c.b16 %v3118, %v3114
    %v3939 = vpack.c.b16 %v3119, %v3115
    %v3940 = vpack.c.b16 %v3120, %v3116
    %v3941 = vpack.c.b16 %v3121, %v3117
    %v3942 = vpack.c.b16 %v3126, %v3122
    %v3943 = vpack.c.b16 %v3127, %v3123
    %v3944 = vpack.c.b16 %v3128, %v3124
    %v3945 = vpack.c.b16 %v3129, %v3125
    %v3946 = vpack.c.b16 %v3134, %v3130
    %v3947 = vpack.c.b16 %v3135, %v3131
    %v3948 = vpack.c.b16 %v3136, %v3132
    %v3949 = vpack.c.b16 %v3137, %v3133
    %v3950 = vpack.c.b16 %v3142, %v3138
    %v3951 = vpack.c.b16 %v3143, %v3139
    %v3952 = vpack.c.b16 %v3144, %v3140
    %v3953 = vpack.c.b16 %v3145, %v3141
    %v3954 = vpack.c.b16 %v3150, %v3146
    %v3955 = vpack.c.b16 %v3151, %v3147
    %v3956 = vpack.c.b16 %v3152, %v3148
    %v3957 = vpack.c.b16 %v3153, %v3149
    %v3958 = vpack.c.b16 %v3158, %v3154
    %v3959 = vpack.c.b16 %v3159, %v3155
    %v3960 = vpack.c.b16 %v3160, %v3156
    %v3961 = vpack.c.b16 %v3161, %v3157
    %v3962 = vpack.c.b16 %v3166, %v3162
    %v3963 = vpack.c.b16 %v3167, %v3163
    %v3964 = vpack.c.b16 %v3168, %v3164
    %v3965 = vpack.c.b16 %v3169, %v3165
    %v3966 = vpack.c.b16 %v3174, %v3170
    %v3967 = vpack.c.b16 %v3175, %v3171
    %v3968 = vpack.c.b16 %v3176, %v3172
    %v3969 = vpack.c.b16 %v3177, %v3173
    %v3970 = vpack.c.b16 %v3182, %v3178
    %v3971 = vpack.c.b16 %v3183, %v3179
    %v3972 = vpack.c.b16 %v3184, %v3180
    %v3973 = vpack.c.b16 %v3185, %v3181
    %v3974 = vpack.c.b16 %v3190, %v3186
    %v3975 = vpack.c.b16 %v3191, %v3187
    %v3976 = vpack.c.b16 %v3192, %v3188
    %v3977 = vpack.c.b16 %v3193, %v3189
    %v3978 = vpack.c.b16 %v3198, %v3194
    %v3979 = vpack.c.b16 %v3199, %v3195
    %v3980 = vpack.c.b16 %v3200, %v3196
    %v3981 = vpack.c.b16 %v3201, %v3197
    %v3982 = vpack.c.b16 %v3206, %v3202
    %v3983 = vpack.c.b16 %v3207, %v3203
    %v3984 = vpack.c.b16 %v3208, %v3204
    %v3985 = vpack.c.b16 %v3209, %v3205
    %v3986 = vpack.c.b16 %v3214, %v3210
    %v3987 = vpack.c.b16 %v3215, %v3211
    %v3988 = vpack.c.b16 %v3216, %v3212
    %v3989 = vpack.c.b16 %v3217, %v3213
    %v3990 = vpack.c.b16 %v3222, %v3218
    %v3991 = vpack.c.b16 %v3223, %v3219
    %v3992 = vpack.c.b16 %v3224, %v3220
    %v3993 = vpack.c.b16 %v3225, %v3221
    %4762 = vmatprep.subr.bf16.mxu0 %v3227
    %4763 = vmatpush1.bf16.msra.mxu0 %v3226
    %4764 = vmatprep.subr.bf16.mxu0 %v3231
    %4765 = vmatpush1.bf16.msra.mxu0 %v3230
    %4766 = vmatprep.subr.bf16.mxu0 %v3235
    %4767 = vmatpush1.bf16.msra.mxu0 %v3234
    %4768 = vmatprep.subr.bf16.mxu0 %v3239
    %4769 = vmatpush1.bf16.msra.mxu0 %v3238
    %4770 = vmatprep.subr.bf16.mxu0 %v3243
    %4771 = vmatpush1.bf16.msra.mxu0 %v3242
    %4772 = vmatprep.subr.bf16.mxu0 %v3247
    %4773 = vmatpush1.bf16.msra.mxu0 %v3246
    %4774 = vmatprep.subr.bf16.mxu0 %v3251
    %4775 = vmatpush1.bf16.msra.mxu0 %v3250
    %4776 = vmatprep.subr.bf16.mxu0 %v3255
    %4777 = vmatpush1.bf16.msra.mxu0 %v3254
    %4778 = vmatprep.subr.bf16.mxu0 %v3259
    %4779 = vmatpush1.bf16.msra.mxu0 %v3258
    %4780 = vmatprep.subr.bf16.mxu0 %v3263
    %4781 = vmatpush1.bf16.msra.mxu0 %v3262
    %4782 = vmatprep.subr.bf16.mxu0 %v3267
    %4783 = vmatpush1.bf16.msra.mxu0 %v3266
    %4784 = vmatprep.subr.bf16.mxu0 %v3271
    %4785 = vmatpush1.bf16.msra.mxu0 %v3270
    %4786 = vmatprep.subr.bf16.mxu0 %v3275
    %4787 = vmatpush1.bf16.msra.mxu0 %v3274
    %4788 = vmatprep.subr.bf16.mxu0 %v3279
    %4789 = vmatpush1.bf16.msra.mxu0 %v3278
    %4790 = vmatprep.subr.bf16.mxu0 %v3283
    %4791 = vmatpush1.bf16.msra.mxu0 %v3282
    %4792 = vmatprep.subr.bf16.mxu0 %v3287
    %4793 = vmatpush1.bf16.msra.mxu0 %v3286
    %4794 = vmatprep.mubr.bf16.mxu0 %v109
    %4795 = vmatmul.mubr.bf16.gmra.mrb[0].mxu0 %v108
    %v4796 = vpop.f32.mrb[0].mxu0
    %v4797 = vadd.f32 %v905, %v4796
    %v4798 = vpop.f32.mrb[0].mxu0
    %v4799 = vadd.f32 %v909, %v4798
    %v4800 = vpop.f32.mrb[0].mxu0
    %v4801 = vpop.f32.mrb[0].mxu0
    %4802 = vdwg.mxu0
    %4803 = vmatprep.subr.bf16.mxu0 %v3291
    %4804 = vmatpush1.bf16.msra.mxu0 %v3290
    %4805 = vmatprep.subr.bf16.mxu0 %v3295
    %4806 = vmatpush1.bf16.msra.mxu0 %v3294
    %4807 = vmatprep.subr.bf16.mxu0 %v3299
    %4808 = vmatpush1.bf16.msra.mxu0 %v3298
    %4809 = vmatprep.subr.bf16.mxu0 %v3303
    %4810 = vmatpush1.bf16.msra.mxu0 %v3302
    %4811 = vmatprep.subr.bf16.mxu0 %v3307
    %4812 = vmatpush1.bf16.msra.mxu0 %v3306
    %4813 = vmatprep.subr.bf16.mxu0 %v3311
    %4814 = vmatpush1.bf16.msra.mxu0 %v3310
    %4815 = vmatprep.subr.bf16.mxu0 %v3315
    %4816 = vmatpush1.bf16.msra.mxu0 %v3314
    %4817 = vmatprep.subr.bf16.mxu0 %v3319
    %4818 = vmatpush1.bf16.msra.mxu0 %v3318
    %4819 = vmatprep.subr.bf16.mxu0 %v3323
    %4820 = vmatpush1.bf16.msra.mxu0 %v3322
    %4821 = vmatprep.subr.bf16.mxu0 %v3327
    %4822 = vmatpush1.bf16.msra.mxu0 %v3326
    %4823 = vmatprep.subr.bf16.mxu0 %v3331
    %4824 = vmatpush1.bf16.msra.mxu0 %v3330
    %4825 = vmatprep.subr.bf16.mxu0 %v3335
    %4826 = vmatpush1.bf16.msra.mxu0 %v3334
    %4827 = vmatprep.subr.bf16.mxu0 %v3339
    %4828 = vmatpush1.bf16.msra.mxu0 %v3338
    %4829 = vmatprep.subr.bf16.mxu0 %v3343
    %4830 = vmatpush1.bf16.msra.mxu0 %v3342
    %4831 = vmatprep.subr.bf16.mxu0 %v3347
    %4832 = vmatpush1.bf16.msra.mxu0 %v3346
    %4833 = vmatprep.subr.bf16.mxu0 %v3351
    %4834 = vmatpush1.bf16.msra.mxu0 %v3350
    %4835 = vmatprep.mubr.bf16.mxu0 %v111
    %4836 = vmatmul.mubr.bf16.gmra.mrb[0].mxu0 %v110
    %v4837 = vpop.f32.mrb[0].mxu0
    %v4838 = vadd.f32 %v4797, %v4837
    %v4839 = vpop.f32.mrb[0].mxu0
    %v4840 = vadd.f32 %v4799, %v4839
    %v4841 = vpop.f32.mrb[0].mxu0
    %v4842 = vpop.f32.mrb[0].mxu0
    %4843 = vdwg.mxu0
    %4844 = vmatprep.subr.bf16.mxu0 %v3355
    %4845 = vmatpush1.bf16.msra.mxu0 %v3354
    %4846 = vmatprep.subr.bf16.mxu0 %v3359
    %4847 = vmatpush1.bf16.msra.mxu0 %v3358
    %4848 = vmatprep.subr.bf16.mxu0 %v3363
    %4849 = vmatpush1.bf16.msra.mxu0 %v3362
    %4850 = vmatprep.subr.bf16.mxu0 %v3367
    %4851 = vmatpush1.bf16.msra.mxu0 %v3366
    %4852 = vmatprep.subr.bf16.mxu0 %v3371
    %4853 = vmatpush1.bf16.msra.mxu0 %v3370
    %4854 = vmatprep.subr.bf16.mxu0 %v3375
    %4855 = vmatpush1.bf16.msra.mxu0 %v3374
    %4856 = vmatprep.subr.bf16.mxu0 %v3379
    %4857 = vmatpush1.bf16.msra.mxu0 %v3378
    %4858 = vmatprep.subr.bf16.mxu0 %v3383
    %4859 = vmatpush1.bf16.msra.mxu0 %v3382
    %4860 = vmatprep.subr.bf16.mxu0 %v3387
    %4861 = vmatpush1.bf16.msra.mxu0 %v3386
    %4862 = vmatprep.subr.bf16.mxu0 %v3391
    %4863 = vmatpush1.bf16.msra.mxu0 %v3390
    %4864 = vmatprep.subr.bf16.mxu0 %v3395
    %4865 = vmatpush1.bf16.msra.mxu0 %v3394
    %4866 = vmatprep.subr.bf16.mxu0 %v3399
    %4867 = vmatpush1.bf16.msra.mxu0 %v3398
    %4868 = vmatprep.subr.bf16.mxu0 %v3403
    %4869 = vmatpush1.bf16.msra.mxu0 %v3402
    %4870 = vmatprep.subr.bf16.mxu0 %v3407
    %4871 = vmatpush1.bf16.msra.mxu0 %v3406
    %4872 = vmatprep.subr.bf16.mxu0 %v3411
    %4873 = vmatpush1.bf16.msra.mxu0 %v3410
    %4874 = vmatprep.subr.bf16.mxu0 %v3415
    %4875 = vmatpush1.bf16.msra.mxu0 %v3414
    %4876 = vmatprep.mubr.bf16.mxu0 %v113
    %4877 = vmatmul.mubr.bf16.gmra.mrb[0].mxu0 %v112
    %v4878 = vpop.f32.mrb[0].mxu0
    %v4879 = vadd.f32 %v4838, %v4878
    %v4880 = vpop.f32.mrb[0].mxu0
    %v4881 = vadd.f32 %v4840, %v4880
    %v4882 = vpop.f32.mrb[0].mxu0
    %v4883 = vpop.f32.mrb[0].mxu0
    %4884 = vdwg.mxu0
    %4885 = vmatprep.subr.bf16.mxu0 %v3419
    %4886 = vmatpush1.bf16.msra.mxu0 %v3418
    %4887 = vmatprep.subr.bf16.mxu0 %v3423
    %4888 = vmatpush1.bf16.msra.mxu0 %v3422
    %4889 = vmatprep.subr.bf16.mxu0 %v3427
    %4890 = vmatpush1.bf16.msra.mxu0 %v3426
    %4891 = vmatprep.subr.bf16.mxu0 %v3431
    %4892 = vmatpush1.bf16.msra.mxu0 %v3430
    %4893 = vmatprep.subr.bf16.mxu0 %v3435
    %4894 = vmatpush1.bf16.msra.mxu0 %v3434
    %4895 = vmatprep.subr.bf16.mxu0 %v3439
    %4896 = vmatpush1.bf16.msra.mxu0 %v3438
    %4897 = vmatprep.subr.bf16.mxu0 %v3443
    %4898 = vmatpush1.bf16.msra.mxu0 %v3442
    %4899 = vmatprep.subr.bf16.mxu0 %v3447
    %4900 = vmatpush1.bf16.msra.mxu0 %v3446
    %4901 = vmatprep.subr.bf16.mxu0 %v3451
    %4902 = vmatpush1.bf16.msra.mxu0 %v3450
    %4903 = vmatprep.subr.bf16.mxu0 %v3455
    %4904 = vmatpush1.bf16.msra.mxu0 %v3454
    %4905 = vmatprep.subr.bf16.mxu0 %v3459
    %4906 = vmatpush1.bf16.msra.mxu0 %v3458
    %4907 = vmatprep.subr.bf16.mxu0 %v3463
    %4908 = vmatpush1.bf16.msra.mxu0 %v3462
    %4909 = vmatprep.subr.bf16.mxu0 %v3467
    %4910 = vmatpush1.bf16.msra.mxu0 %v3466
    %4911 = vmatprep.subr.bf16.mxu0 %v3471
    %4912 = vmatpush1.bf16.msra.mxu0 %v3470
    %4913 = vmatprep.subr.bf16.mxu0 %v3475
    %4914 = vmatpush1.bf16.msra.mxu0 %v3474
    %4915 = vmatprep.subr.bf16.mxu0 %v3479
    %4916 = vmatpush1.bf16.msra.mxu0 %v3478
    %4917 = vmatprep.mubr.bf16.mxu0 %v115
    %4918 = vmatmul.mubr.bf16.gmra.mrb[0].mxu0 %v114
    %v4919 = vpop.f32.mrb[0].mxu0
    %v4920 = vadd.f32 %v4879, %v4919
    %v4921 = vpop.f32.mrb[0].mxu0
    %v4922 = vadd.f32 %v4881, %v4921
    %v4923 = vpop.f32.mrb[0].mxu0
    %v4924 = vpop.f32.mrb[0].mxu0
    %4925 = vdwg.mxu0
    %4926 = vmatprep.subr.bf16.mxu0 %v3483
    %4927 = vmatpush1.bf16.msra.mxu0 %v3482
    %4928 = vmatprep.subr.bf16.mxu0 %v3487
    %4929 = vmatpush1.bf16.msra.mxu0 %v3486
    %4930 = vmatprep.subr.bf16.mxu0 %v3491
    %4931 = vmatpush1.bf16.msra.mxu0 %v3490
    %4932 = vmatprep.subr.bf16.mxu0 %v3495
    %4933 = vmatpush1.bf16.msra.mxu0 %v3494
    %4934 = vmatprep.subr.bf16.mxu0 %v3499
    %4935 = vmatpush1.bf16.msra.mxu0 %v3498
    %4936 = vmatprep.subr.bf16.mxu0 %v3503
    %4937 = vmatpush1.bf16.msra.mxu0 %v3502
    %4938 = vmatprep.subr.bf16.mxu0 %v3507
    %4939 = vmatpush1.bf16.msra.mxu0 %v3506
    %4940 = vmatprep.subr.bf16.mxu0 %v3511
    %4941 = vmatpush1.bf16.msra.mxu0 %v3510
    %4942 = vmatprep.subr.bf16.mxu0 %v3515
    %4943 = vmatpush1.bf16.msra.mxu0 %v3514
    %4944 = vmatprep.subr.bf16.mxu0 %v3519
    %4945 = vmatpush1.bf16.msra.mxu0 %v3518
    %4946 = vmatprep.subr.bf16.mxu0 %v3523
    %4947 = vmatpush1.bf16.msra.mxu0 %v3522
    %4948 = vmatprep.subr.bf16.mxu0 %v3527
    %4949 = vmatpush1.bf16.msra.mxu0 %v3526
    %4950 = vmatprep.subr.bf16.mxu0 %v3531
    %4951 = vmatpush1.bf16.msra.mxu0 %v3530
    %4952 = vmatprep.subr.bf16.mxu0 %v3535
    %4953 = vmatpush1.bf16.msra.mxu0 %v3534
    %4954 = vmatprep.subr.bf16.mxu0 %v3539
    %4955 = vmatpush1.bf16.msra.mxu0 %v3538
    %4956 = vmatprep.subr.bf16.mxu0 %v3543
    %4957 = vmatpush1.bf16.msra.mxu0 %v3542
    %4958 = vmatprep.mubr.bf16.mxu0 %v117
    %4959 = vmatmul.mubr.bf16.gmra.mrb[0].mxu0 %v116
    %v4960 = vpop.f32.mrb[0].mxu0
    %v4961 = vadd.f32 %v4920, %v4960
    %v4962 = vpop.f32.mrb[0].mxu0
    %v4963 = vadd.f32 %v4922, %v4962
    %v4964 = vpop.f32.mrb[0].mxu0
    %v4965 = vpop.f32.mrb[0].mxu0
    %4966 = vdwg.mxu0
    %4967 = vmatprep.subr.bf16.mxu0 %v3547
    %4968 = vmatpush1.bf16.msra.mxu0 %v3546
    %4969 = vmatprep.subr.bf16.mxu0 %v3551
    %4970 = vmatpush1.bf16.msra.mxu0 %v3550
    %4971 = vmatprep.subr.bf16.mxu0 %v3555
    %4972 = vmatpush1.bf16.msra.mxu0 %v3554
    %4973 = vmatprep.subr.bf16.mxu0 %v3559
    %4974 = vmatpush1.bf16.msra.mxu0 %v3558
    %4975 = vmatprep.subr.bf16.mxu0 %v3563
    %4976 = vmatpush1.bf16.msra.mxu0 %v3562
    %4977 = vmatprep.subr.bf16.mxu0 %v3567
    %4978 = vmatpush1.bf16.msra.mxu0 %v3566
    %4979 = vmatprep.subr.bf16.mxu0 %v3571
    %4980 = vmatpush1.bf16.msra.mxu0 %v3570
    %4981 = vmatprep.subr.bf16.mxu0 %v3575
    %4982 = vmatpush1.bf16.msra.mxu0 %v3574
    %4983 = vmatprep.subr.bf16.mxu0 %v3579
    %4984 = vmatpush1.bf16.msra.mxu0 %v3578
    %4985 = vmatprep.subr.bf16.mxu0 %v3583
    %4986 = vmatpush1.bf16.msra.mxu0 %v3582
    %4987 = vmatprep.subr.bf16.mxu0 %v3587
    %4988 = vmatpush1.bf16.msra.mxu0 %v3586
    %4989 = vmatprep.subr.bf16.mxu0 %v3591
    %4990 = vmatpush1.bf16.msra.mxu0 %v3590
    %4991 = vmatprep.subr.bf16.mxu0 %v3595
    %4992 = vmatpush1.bf16.msra.mxu0 %v3594
    %4993 = vmatprep.subr.bf16.mxu0 %v3599
    %4994 = vmatpush1.bf16.msra.mxu0 %v3598
    %4995 = vmatprep.subr.bf16.mxu0 %v3603
    %4996 = vmatpush1.bf16.msra.mxu0 %v3602
    %4997 = vmatprep.subr.bf16.mxu0 %v3607
    %4998 = vmatpush1.bf16.msra.mxu0 %v3606
    %4999 = vmatprep.mubr.bf16.mxu0 %v119
    %5000 = vmatmul.mubr.bf16.gmra.mrb[0].mxu0 %v118
    %v5001 = vpop.f32.mrb[0].mxu0
    %v5002 = vadd.f32 %v4961, %v5001
    %v5003 = vpop.f32.mrb[0].mxu0
    %v5004 = vadd.f32 %v4963, %v5003
    %v5005 = vpop.f32.mrb[0].mxu0
    %v5006 = vpop.f32.mrb[0].mxu0
    %5007 = vdwg.mxu0
    %5008 = vmatprep.subr.bf16.mxu0 %v3611
    %5009 = vmatpush1.bf16.msra.mxu0 %v3610
    %5010 = vmatprep.subr.bf16.mxu0 %v3615
    %5011 = vmatpush1.bf16.msra.mxu0 %v3614
    %5012 = vmatprep.subr.bf16.mxu0 %v3619
    %5013 = vmatpush1.bf16.msra.mxu0 %v3618
    %5014 = vmatprep.subr.bf16.mxu0 %v3623
    %5015 = vmatpush1.bf16.msra.mxu0 %v3622
    %5016 = vmatprep.subr.bf16.mxu0 %v3627
    %5017 = vmatpush1.bf16.msra.mxu0 %v3626
    %5018 = vmatprep.subr.bf16.mxu0 %v3631
    %5019 = vmatpush1.bf16.msra.mxu0 %v3630
    %5020 = vmatprep.subr.bf16.mxu0 %v3635
    %5021 = vmatpush1.bf16.msra.mxu0 %v3634
    %5022 = vmatprep.subr.bf16.mxu0 %v3639
    %5023 = vmatpush1.bf16.msra.mxu0 %v3638
    %5024 = vmatprep.subr.bf16.mxu0 %v3643
    %5025 = vmatpush1.bf16.msra.mxu0 %v3642
    %5026 = vmatprep.subr.bf16.mxu0 %v3647
    %5027 = vmatpush1.bf16.msra.mxu0 %v3646
    %5028 = vmatprep.subr.bf16.mxu0 %v3651
    %5029 = vmatpush1.bf16.msra.mxu0 %v3650
    %5030 = vmatprep.subr.bf16.mxu0 %v3655
    %5031 = vmatpush1.bf16.msra.mxu0 %v3654
    %5032 = vmatprep.subr.bf16.mxu0 %v3659
    %5033 = vmatpush1.bf16.msra.mxu0 %v3658
    %5034 = vmatprep.subr.bf16.mxu0 %v3663
    %5035 = vmatpush1.bf16.msra.mxu0 %v3662
    %5036 = vmatprep.subr.bf16.mxu0 %v3667
    %5037 = vmatpush1.bf16.msra.mxu0 %v3666
    %5038 = vmatprep.subr.bf16.mxu0 %v3671
    %5039 = vmatpush1.bf16.msra.mxu0 %v3670
    %5040 = vmatprep.mubr.bf16.mxu0 %v121
    %5041 = vmatmul.mubr.bf16.gmra.mrb[0].mxu0 %v120
    %v5042 = vpop.f32.mrb[0].mxu0
    %v5043 = vadd.f32 %v5002, %v5042
    %v5044 = vpop.f32.mrb[0].mxu0
    %v5045 = vadd.f32 %v5004, %v5044
    %v5046 = vpop.f32.mrb[0].mxu0
    %v5047 = vpop.f32.mrb[0].mxu0
    %5048 = vdwg.mxu0
    %5049 = vmatprep.subr.bf16.mxu0 %v3675
    %5050 = vmatpush1.bf16.msra.mxu0 %v3674
    %5051 = vmatprep.subr.bf16.mxu0 %v3679
    %5052 = vmatpush1.bf16.msra.mxu0 %v3678
    %5053 = vmatprep.subr.bf16.mxu0 %v3683
    %5054 = vmatpush1.bf16.msra.mxu0 %v3682
    %5055 = vmatprep.subr.bf16.mxu0 %v3687
    %5056 = vmatpush1.bf16.msra.mxu0 %v3686
    %5057 = vmatprep.subr.bf16.mxu0 %v3691
    %5058 = vmatpush1.bf16.msra.mxu0 %v3690
    %5059 = vmatprep.subr.bf16.mxu0 %v3695
    %5060 = vmatpush1.bf16.msra.mxu0 %v3694
    %5061 = vmatprep.subr.bf16.mxu0 %v3699
    %5062 = vmatpush1.bf16.msra.mxu0 %v3698
    %5063 = vmatprep.subr.bf16.mxu0 %v3703
    %5064 = vmatpush1.bf16.msra.mxu0 %v3702
    %5065 = vmatprep.subr.bf16.mxu0 %v3707
    %5066 = vmatpush1.bf16.msra.mxu0 %v3706
    %5067 = vmatprep.subr.bf16.mxu0 %v3711
    %5068 = vmatpush1.bf16.msra.mxu0 %v3710
    %5069 = vmatprep.subr.bf16.mxu0 %v3715
    %5070 = vmatpush1.bf16.msra.mxu0 %v3714
    %5071 = vmatprep.subr.bf16.mxu0 %v3719
    %5072 = vmatpush1.bf16.msra.mxu0 %v3718
    %5073 = vmatprep.subr.bf16.mxu0 %v3723
    %5074 = vmatpush1.bf16.msra.mxu0 %v3722
    %5075 = vmatprep.subr.bf16.mxu0 %v3727
    %5076 = vmatpush1.bf16.msra.mxu0 %v3726
    %5077 = vmatprep.subr.bf16.mxu0 %v3731
    %5078 = vmatpush1.bf16.msra.mxu0 %v3730
    %5079 = vmatprep.subr.bf16.mxu0 %v3735
    %5080 = vmatpush1.bf16.msra.mxu0 %v3734
    %5081 = vmatprep.mubr.bf16.mxu0 %v123
    %5082 = vmatmul.mubr.bf16.gmra.mrb[0].mxu0 %v122
    %v5083 = vpop.f32.mrb[0].mxu0
    %v5084 = vadd.f32 %v5043, %v5083
    %v5085 = vpop.f32.mrb[0].mxu0
    %v5086 = vadd.f32 %v5045, %v5085
    %v5087 = vpop.f32.mrb[0].mxu0
    %v5088 = vpop.f32.mrb[0].mxu0
    %5089 = vdwg.mxu0
    %5090 = vmatprep.subr.bf16.mxu0 %v3739
    %5091 = vmatpush1.bf16.msra.mxu0 %v3738
    %5092 = vmatprep.subr.bf16.mxu0 %v3743
    %5093 = vmatpush1.bf16.msra.mxu0 %v3742
    %5094 = vmatprep.subr.bf16.mxu0 %v3747
    %5095 = vmatpush1.bf16.msra.mxu0 %v3746
    %5096 = vmatprep.subr.bf16.mxu0 %v3751
    %5097 = vmatpush1.bf16.msra.mxu0 %v3750
    %5098 = vmatprep.subr.bf16.mxu0 %v3755
    %5099 = vmatpush1.bf16.msra.mxu0 %v3754
    %5100 = vmatprep.subr.bf16.mxu0 %v3759
    %5101 = vmatpush1.bf16.msra.mxu0 %v3758
    %5102 = vmatprep.subr.bf16.mxu0 %v3763
    %5103 = vmatpush1.bf16.msra.mxu0 %v3762
    %5104 = vmatprep.subr.bf16.mxu0 %v3767
    %5105 = vmatpush1.bf16.msra.mxu0 %v3766
    %5106 = vmatprep.subr.bf16.mxu0 %v3771
    %5107 = vmatpush1.bf16.msra.mxu0 %v3770
    %5108 = vmatprep.subr.bf16.mxu0 %v3775
    %5109 = vmatpush1.bf16.msra.mxu0 %v3774
    %5110 = vmatprep.subr.bf16.mxu0 %v3779
    %5111 = vmatpush1.bf16.msra.mxu0 %v3778
    %5112 = vmatprep.subr.bf16.mxu0 %v3783
    %5113 = vmatpush1.bf16.msra.mxu0 %v3782
    %5114 = vmatprep.subr.bf16.mxu0 %v3787
    %5115 = vmatpush1.bf16.msra.mxu0 %v3786
    %5116 = vmatprep.subr.bf16.mxu0 %v3791
    %5117 = vmatpush1.bf16.msra.mxu0 %v3790
    %5118 = vmatprep.subr.bf16.mxu0 %v3795
    %5119 = vmatpush1.bf16.msra.mxu0 %v3794
    %5120 = vmatprep.subr.bf16.mxu0 %v3799
    %5121 = vmatpush1.bf16.msra.mxu0 %v3798
    %5122 = vmatprep.mubr.bf16.mxu0 %v125
    %5123 = vmatmul.mubr.bf16.gmra.mrb[0].mxu0 %v124
    %v5124 = vpop.f32.mrb[0].mxu0
    %v5125 = vadd.f32 %v5084, %v5124
    %v5126 = vpop.f32.mrb[0].mxu0
    %v5127 = vadd.f32 %v5086, %v5126
    %v5128 = vpop.f32.mrb[0].mxu0
    %v5129 = vpop.f32.mrb[0].mxu0
    %5130 = vdwg.mxu0
    %5131 = vmatprep.subr.bf16.mxu0 %v3803
    %5132 = vmatpush1.bf16.msra.mxu0 %v3802
    %5133 = vmatprep.subr.bf16.mxu0 %v3807
    %5134 = vmatpush1.bf16.msra.mxu0 %v3806
    %5135 = vmatprep.subr.bf16.mxu0 %v3811
    %5136 = vmatpush1.bf16.msra.mxu0 %v3810
    %5137 = vmatprep.subr.bf16.mxu0 %v3815
    %5138 = vmatpush1.bf16.msra.mxu0 %v3814
    %5139 = vmatprep.subr.bf16.mxu0 %v3819
    %5140 = vmatpush1.bf16.msra.mxu0 %v3818
    %5141 = vmatprep.subr.bf16.mxu0 %v3823
    %5142 = vmatpush1.bf16.msra.mxu0 %v3822
    %5143 = vmatprep.subr.bf16.mxu0 %v3827
    %5144 = vmatpush1.bf16.msra.mxu0 %v3826
    %5145 = vmatprep.subr.bf16.mxu0 %v3831
    %5146 = vmatpush1.bf16.msra.mxu0 %v3830
    %5147 = vmatprep.subr.bf16.mxu0 %v3835
    %5148 = vmatpush1.bf16.msra.mxu0 %v3834
    %5149 = vmatprep.subr.bf16.mxu0 %v3839
    %5150 = vmatpush1.bf16.msra.mxu0 %v3838
    %5151 = vmatprep.subr.bf16.mxu0 %v3843
    %5152 = vmatpush1.bf16.msra.mxu0 %v3842
    %5153 = vmatprep.subr.bf16.mxu0 %v3847
    %5154 = vmatpush1.bf16.msra.mxu0 %v3846
    %5155 = vmatprep.subr.bf16.mxu0 %v3851
    %5156 = vmatpush1.bf16.msra.mxu0 %v3850
    %5157 = vmatprep.subr.bf16.mxu0 %v3855
    %5158 = vmatpush1.bf16.msra.mxu0 %v3854
    %5159 = vmatprep.subr.bf16.mxu0 %v3859
    %5160 = vmatpush1.bf16.msra.mxu0 %v3858
    %5161 = vmatprep.subr.bf16.mxu0 %v3863
    %5162 = vmatpush1.bf16.msra.mxu0 %v3862
    %5163 = vmatprep.mubr.bf16.mxu0 %v127
    %5164 = vmatmul.mubr.bf16.gmra.mrb[0].mxu0 %v126
    %v5165 = vpop.f32.mrb[0].mxu0
    %v5166 = vadd.f32 %v5125, %v5165
    %v5167 = vpop.f32.mrb[0].mxu0
    %v5168 = vadd.f32 %v5127, %v5167
    %v5169 = vpop.f32.mrb[0].mxu0
    %v5170 = vpop.f32.mrb[0].mxu0
    %5171 = vdwg.mxu0
    %5172 = vmatprep.subr.bf16.mxu0 %v3867
    %5173 = vmatpush1.bf16.msra.mxu0 %v3866
    %5174 = vmatprep.subr.bf16.mxu0 %v3871
    %5175 = vmatpush1.bf16.msra.mxu0 %v3870
    %5176 = vmatprep.subr.bf16.mxu0 %v3875
    %5177 = vmatpush1.bf16.msra.mxu0 %v3874
    %5178 = vmatprep.subr.bf16.mxu0 %v3879
    %5179 = vmatpush1.bf16.msra.mxu0 %v3878
    %5180 = vmatprep.subr.bf16.mxu0 %v3883
    %5181 = vmatpush1.bf16.msra.mxu0 %v3882
    %5182 = vmatprep.subr.bf16.mxu0 %v3887
    %5183 = vmatpush1.bf16.msra.mxu0 %v3886
    %5184 = vmatprep.subr.bf16.mxu0 %v3891
    %5185 = vmatpush1.bf16.msra.mxu0 %v3890
    %5186 = vmatprep.subr.bf16.mxu0 %v3895
    %5187 = vmatpush1.bf16.msra.mxu0 %v3894
    %5188 = vmatprep.subr.bf16.mxu0 %v3899
    %5189 = vmatpush1.bf16.msra.mxu0 %v3898
    %5190 = vmatprep.subr.bf16.mxu0 %v3903
    %5191 = vmatpush1.bf16.msra.mxu0 %v3902
    %5192 = vmatprep.subr.bf16.mxu0 %v3907
    %5193 = vmatpush1.bf16.msra.mxu0 %v3906
    %5194 = vmatprep.subr.bf16.mxu0 %v3911
    %5195 = vmatpush1.bf16.msra.mxu0 %v3910
    %5196 = vmatprep.subr.bf16.mxu0 %v3915
    %5197 = vmatpush1.bf16.msra.mxu0 %v3914
    %5198 = vmatprep.subr.bf16.mxu0 %v3919
    %5199 = vmatpush1.bf16.msra.mxu0 %v3918
    %5200 = vmatprep.subr.bf16.mxu0 %v3923
    %5201 = vmatpush1.bf16.msra.mxu0 %v3922
    %5202 = vmatprep.subr.bf16.mxu0 %v3927
    %5203 = vmatpush1.bf16.msra.mxu0 %v3926
    %5204 = vmatprep.mubr.bf16.mxu0 %v129
    %5205 = vmatmul.mubr.bf16.gmra.mrb[0].mxu0 %v128
    %v5206 = vpop.f32.mrb[0].mxu0
    %v5207 = vadd.f32 %v5166, %v5206
    %v5208 = vpop.f32.mrb[0].mxu0
    %v5209 = vadd.f32 %v5168, %v5208
    %v5210 = vpop.f32.mrb[0].mxu0
    %v5211 = vpop.f32.mrb[0].mxu0
    %5212 = vdwg.mxu0
    %5213 = vmatprep.subr.bf16.mxu0 %v3931
    %5214 = vmatpush1.bf16.msra.mxu0 %v3930
    %5215 = vmatprep.subr.bf16.mxu0 %v3935
    %5216 = vmatpush1.bf16.msra.mxu0 %v3934
    %5217 = vmatprep.subr.bf16.mxu0 %v3939
    %5218 = vmatpush1.bf16.msra.mxu0 %v3938
    %5219 = vmatprep.subr.bf16.mxu0 %v3943
    %5220 = vmatpush1.bf16.msra.mxu0 %v3942
    %5221 = vmatprep.subr.bf16.mxu0 %v3947
    %5222 = vmatpush1.bf16.msra.mxu0 %v3946
    %5223 = vmatprep.subr.bf16.mxu0 %v3951
    %5224 = vmatpush1.bf16.msra.mxu0 %v3950
    %5225 = vmatprep.subr.bf16.mxu0 %v3955
    %5226 = vmatpush1.bf16.msra.mxu0 %v3954
    %5227 = vmatprep.subr.bf16.mxu0 %v3959
    %5228 = vmatpush1.bf16.msra.mxu0 %v3958
    %5229 = vmatprep.subr.bf16.mxu0 %v3963
    %5230 = vmatpush1.bf16.msra.mxu0 %v3962
    %5231 = vmatprep.subr.bf16.mxu0 %v3967
    %5232 = vmatpush1.bf16.msra.mxu0 %v3966
    %5233 = vmatprep.subr.bf16.mxu0 %v3971
    %5234 = vmatpush1.bf16.msra.mxu0 %v3970
    %5235 = vmatprep.subr.bf16.mxu0 %v3975
    %5236 = vmatpush1.bf16.msra.mxu0 %v3974
    %5237 = vmatprep.subr.bf16.mxu0 %v3979
    %5238 = vmatpush1.bf16.msra.mxu0 %v3978
    %5239 = vmatprep.subr.bf16.mxu0 %v3983
    %5240 = vmatpush1.bf16.msra.mxu0 %v3982
    %5241 = vmatprep.subr.bf16.mxu0 %v3987
    %5242 = vmatpush1.bf16.msra.mxu0 %v3986
    %5243 = vmatprep.subr.bf16.mxu0 %v3991
    %5244 = vmatpush1.bf16.msra.mxu0 %v3990
    %5245 = vmatprep.mubr.bf16.mxu0 %v131
    %5246 = vmatmul.mubr.bf16.gmra.mrb[0].mxu0 %v130
    %v5247 = vpop.f32.mrb[0].mxu0
    %v5248 = vadd.f32 %v5207, %v5247
    %v5249 = vpop.f32.mrb[0].mxu0
    %v5250 = vadd.f32 %v5209, %v5249
    %v5251 = vpop.f32.mrb[0].mxu0
    %v5252 = vpop.f32.mrb[0].mxu0
    %5253 = vdwg.mxu0
    %5254 = vmatprep.subr.bf16.mxu0 %v3229
    %5255 = vmatpush1.bf16.msra.mxu0 %v3228
    %5256 = vmatprep.subr.bf16.mxu0 %v3233
    %5257 = vmatpush1.bf16.msra.mxu0 %v3232
    %5258 = vmatprep.subr.bf16.mxu0 %v3237
    %5259 = vmatpush1.bf16.msra.mxu0 %v3236
    %5260 = vmatprep.subr.bf16.mxu0 %v3241
    %5261 = vmatpush1.bf16.msra.mxu0 %v3240
    %5262 = vmatprep.subr.bf16.mxu0 %v3245
    %5263 = vmatpush1.bf16.msra.mxu0 %v3244
    %5264 = vmatprep.subr.bf16.mxu0 %v3249
    %5265 = vmatpush1.bf16.msra.mxu0 %v3248
    %5266 = vmatprep.subr.bf16.mxu0 %v3253
    %5267 = vmatpush1.bf16.msra.mxu0 %v3252
    %5268 = vmatprep.subr.bf16.mxu0 %v3257
    %5269 = vmatpush1.bf16.msra.mxu0 %v3256
    %5270 = vmatprep.subr.bf16.mxu0 %v3261
    %5271 = vmatpush1.bf16.msra.mxu0 %v3260
    %5272 = vmatprep.subr.bf16.mxu0 %v3265
    %5273 = vmatpush1.bf16.msra.mxu0 %v3264
    %5274 = vmatprep.subr.bf16.mxu0 %v3269
    %5275 = vmatpush1.bf16.msra.mxu0 %v3268
    %5276 = vmatprep.subr.bf16.mxu0 %v3273
    %5277 = vmatpush1.bf16.msra.mxu0 %v3272
    %5278 = vmatprep.subr.bf16.mxu0 %v3277
    %5279 = vmatpush1.bf16.msra.mxu0 %v3276
    %5280 = vmatprep.subr.bf16.mxu0 %v3281
    %5281 = vmatpush1.bf16.msra.mxu0 %v3280
    %5282 = vmatprep.subr.bf16.mxu0 %v3285
    %5283 = vmatpush1.bf16.msra.mxu0 %v3284
    %5284 = vmatprep.subr.bf16.mxu0 %v3289
    %5285 = vmatpush1.bf16.msra.mxu0 %v3288
    %5286 = vmatprep.mubr.bf16.mxu0 %v109
    %5287 = vmatmul.mubr.bf16.gmra.mrb[0].mxu0 %v108
    %v5288 = vpop.f32.mrb[0].mxu0
    %v5289 = vadd.f32 %v913, %v5288
    %v5290 = vpop.f32.mrb[0].mxu0
    %v5291 = vadd.f32 %v917, %v5290
    %v5292 = vpop.f32.mrb[0].mxu0
    %v5293 = vpop.f32.mrb[0].mxu0
    %5294 = vdwg.mxu0
    %5295 = vmatprep.subr.bf16.mxu0 %v3293
    %5296 = vmatpush1.bf16.msra.mxu0 %v3292
    %5297 = vmatprep.subr.bf16.mxu0 %v3297
    %5298 = vmatpush1.bf16.msra.mxu0 %v3296
    %5299 = vmatprep.subr.bf16.mxu0 %v3301
    %5300 = vmatpush1.bf16.msra.mxu0 %v3300
    %5301 = vmatprep.subr.bf16.mxu0 %v3305
    %5302 = vmatpush1.bf16.msra.mxu0 %v3304
    %5303 = vmatprep.subr.bf16.mxu0 %v3309
    %5304 = vmatpush1.bf16.msra.mxu0 %v3308
    %5305 = vmatprep.subr.bf16.mxu0 %v3313
    %5306 = vmatpush1.bf16.msra.mxu0 %v3312
    %5307 = vmatprep.subr.bf16.mxu0 %v3317
    %5308 = vmatpush1.bf16.msra.mxu0 %v3316
    %5309 = vmatprep.subr.bf16.mxu0 %v3321
    %5310 = vmatpush1.bf16.msra.mxu0 %v3320
    %5311 = vmatprep.subr.bf16.mxu0 %v3325
    %5312 = vmatpush1.bf16.msra.mxu0 %v3324
    %5313 = vmatprep.subr.bf16.mxu0 %v3329
    %5314 = vmatpush1.bf16.msra.mxu0 %v3328
    %5315 = vmatprep.subr.bf16.mxu0 %v3333
    %5316 = vmatpush1.bf16.msra.mxu0 %v3332
    %5317 = vmatprep.subr.bf16.mxu0 %v3337
    %5318 = vmatpush1.bf16.msra.mxu0 %v3336
    %5319 = vmatprep.subr.bf16.mxu0 %v3341
    %5320 = vmatpush1.bf16.msra.mxu0 %v3340
    %5321 = vmatprep.subr.bf16.mxu0 %v3345
    %5322 = vmatpush1.bf16.msra.mxu0 %v3344
    %5323 = vmatprep.subr.bf16.mxu0 %v3349
    %5324 = vmatpush1.bf16.msra.mxu0 %v3348
    %5325 = vmatprep.subr.bf16.mxu0 %v3353
    %5326 = vmatpush1.bf16.msra.mxu0 %v3352
    %5327 = vmatprep.mubr.bf16.mxu0 %v111
    %5328 = vmatmul.mubr.bf16.gmra.mrb[0].mxu0 %v110
    %v5329 = vpop.f32.mrb[0].mxu0
    %v5330 = vadd.f32 %v5289, %v5329
    %v5331 = vpop.f32.mrb[0].mxu0
    %v5332 = vadd.f32 %v5291, %v5331
    %v5333 = vpop.f32.mrb[0].mxu0
    %v5334 = vpop.f32.mrb[0].mxu0
    %5335 = vdwg.mxu0
    %5336 = vmatprep.subr.bf16.mxu0 %v3357
    %5337 = vmatpush1.bf16.msra.mxu0 %v3356
    %5338 = vmatprep.subr.bf16.mxu0 %v3361
    %5339 = vmatpush1.bf16.msra.mxu0 %v3360
    %5340 = vmatprep.subr.bf16.mxu0 %v3365
    %5341 = vmatpush1.bf16.msra.mxu0 %v3364
    %5342 = vmatprep.subr.bf16.mxu0 %v3369
    %5343 = vmatpush1.bf16.msra.mxu0 %v3368
    %5344 = vmatprep.subr.bf16.mxu0 %v3373
    %5345 = vmatpush1.bf16.msra.mxu0 %v3372
    %5346 = vmatprep.subr.bf16.mxu0 %v3377
    %5347 = vmatpush1.bf16.msra.mxu0 %v3376
    %5348 = vmatprep.subr.bf16.mxu0 %v3381
    %5349 = vmatpush1.bf16.msra.mxu0 %v3380
    %5350 = vmatprep.subr.bf16.mxu0 %v3385
    %5351 = vmatpush1.bf16.msra.mxu0 %v3384
    %5352 = vmatprep.subr.bf16.mxu0 %v3389
    %5353 = vmatpush1.bf16.msra.mxu0 %v3388
    %5354 = vmatprep.subr.bf16.mxu0 %v3393
    %5355 = vmatpush1.bf16.msra.mxu0 %v3392
    %5356 = vmatprep.subr.bf16.mxu0 %v3397
    %5357 = vmatpush1.bf16.msra.mxu0 %v3396
    %5358 = vmatprep.subr.bf16.mxu0 %v3401
    %5359 = vmatpush1.bf16.msra.mxu0 %v3400
    %5360 = vmatprep.subr.bf16.mxu0 %v3405
    %5361 = vmatpush1.bf16.msra.mxu0 %v3404
    %5362 = vmatprep.subr.bf16.mxu0 %v3409
    %5363 = vmatpush1.bf16.msra.mxu0 %v3408
    %5364 = vmatprep.subr.bf16.mxu0 %v3413
    %5365 = vmatpush1.bf16.msra.mxu0 %v3412
    %5366 = vmatprep.subr.bf16.mxu0 %v3417
    %5367 = vmatpush1.bf16.msra.mxu0 %v3416
    %5368 = vmatprep.mubr.bf16.mxu0 %v113
    %5369 = vmatmul.mubr.bf16.gmra.mrb[0].mxu0 %v112
    %v5370 = vpop.f32.mrb[0].mxu0
    %v5371 = vadd.f32 %v5330, %v5370
    %v5372 = vpop.f32.mrb[0].mxu0
    %v5373 = vadd.f32 %v5332, %v5372
    %v5374 = vpop.f32.mrb[0].mxu0
    %v5375 = vpop.f32.mrb[0].mxu0
    %5376 = vdwg.mxu0
    %5377 = vmatprep.subr.bf16.mxu0 %v3421
    %5378 = vmatpush1.bf16.msra.mxu0 %v3420
    %5379 = vmatprep.subr.bf16.mxu0 %v3425
    %5380 = vmatpush1.bf16.msra.mxu0 %v3424
    %5381 = vmatprep.subr.bf16.mxu0 %v3429
    %5382 = vmatpush1.bf16.msra.mxu0 %v3428
    %5383 = vmatprep.subr.bf16.mxu0 %v3433
    %5384 = vmatpush1.bf16.msra.mxu0 %v3432
    %5385 = vmatprep.subr.bf16.mxu0 %v3437
    %5386 = vmatpush1.bf16.msra.mxu0 %v3436
    %5387 = vmatprep.subr.bf16.mxu0 %v3441
    %5388 = vmatpush1.bf16.msra.mxu0 %v3440
    %5389 = vmatprep.subr.bf16.mxu0 %v3445
    %5390 = vmatpush1.bf16.msra.mxu0 %v3444
    %5391 = vmatprep.subr.bf16.mxu0 %v3449
    %5392 = vmatpush1.bf16.msra.mxu0 %v3448
    %5393 = vmatprep.subr.bf16.mxu0 %v3453
    %5394 = vmatpush1.bf16.msra.mxu0 %v3452
    %5395 = vmatprep.subr.bf16.mxu0 %v3457
    %5396 = vmatpush1.bf16.msra.mxu0 %v3456
    %5397 = vmatprep.subr.bf16.mxu0 %v3461
    %5398 = vmatpush1.bf16.msra.mxu0 %v3460
    %5399 = vmatprep.subr.bf16.mxu0 %v3465
    %5400 = vmatpush1.bf16.msra.mxu0 %v3464
    %5401 = vmatprep.subr.bf16.mxu0 %v3469
    %5402 = vmatpush1.bf16.msra.mxu0 %v3468
    %5403 = vmatprep.subr.bf16.mxu0 %v3473
    %5404 = vmatpush1.bf16.msra.mxu0 %v3472
    %5405 = vmatprep.subr.bf16.mxu0 %v3477
    %5406 = vmatpush1.bf16.msra.mxu0 %v3476
    %5407 = vmatprep.subr.bf16.mxu0 %v3481
    %5408 = vmatpush1.bf16.msra.mxu0 %v3480
    %5409 = vmatprep.mubr.bf16.mxu0 %v115
    %5410 = vmatmul.mubr.bf16.gmra.mrb[0].mxu0 %v114
    %v5411 = vpop.f32.mrb[0].mxu0
    %v5412 = vadd.f32 %v5371, %v5411
    %v5413 = vpop.f32.mrb[0].mxu0
    %v5414 = vadd.f32 %v5373, %v5413
    %v5415 = vpop.f32.mrb[0].mxu0
    %v5416 = vpop.f32.mrb[0].mxu0
    %5417 = vdwg.mxu0
    %5418 = vmatprep.subr.bf16.mxu0 %v3485
    %5419 = vmatpush1.bf16.msra.mxu0 %v3484
    %5420 = vmatprep.subr.bf16.mxu0 %v3489
    %5421 = vmatpush1.bf16.msra.mxu0 %v3488
    %5422 = vmatprep.subr.bf16.mxu0 %v3493
    %5423 = vmatpush1.bf16.msra.mxu0 %v3492
    %5424 = vmatprep.subr.bf16.mxu0 %v3497
    %5425 = vmatpush1.bf16.msra.mxu0 %v3496
    %5426 = vmatprep.subr.bf16.mxu0 %v3501
    %5427 = vmatpush1.bf16.msra.mxu0 %v3500
    %5428 = vmatprep.subr.bf16.mxu0 %v3505
    %5429 = vmatpush1.bf16.msra.mxu0 %v3504
    %5430 = vmatprep.subr.bf16.mxu0 %v3509
    %5431 = vmatpush1.bf16.msra.mxu0 %v3508
    %5432 = vmatprep.subr.bf16.mxu0 %v3513
    %5433 = vmatpush1.bf16.msra.mxu0 %v3512
    %5434 = vmatprep.subr.bf16.mxu0 %v3517
    %5435 = vmatpush1.bf16.msra.mxu0 %v3516
    %5436 = vmatprep.subr.bf16.mxu0 %v3521
    %5437 = vmatpush1.bf16.msra.mxu0 %v3520
    %5438 = vmatprep.subr.bf16.mxu0 %v3525
    %5439 = vmatpush1.bf16.msra.mxu0 %v3524
    %5440 = vmatprep.subr.bf16.mxu0 %v3529
    %5441 = vmatpush1.bf16.msra.mxu0 %v3528
    %5442 = vmatprep.subr.bf16.mxu0 %v3533
    %5443 = vmatpush1.bf16.msra.mxu0 %v3532
    %5444 = vmatprep.subr.bf16.mxu0 %v3537
    %5445 = vmatpush1.bf16.msra.mxu0 %v3536
    %5446 = vmatprep.subr.bf16.mxu0 %v3541
    %5447 = vmatpush1.bf16.msra.mxu0 %v3540
    %5448 = vmatprep.subr.bf16.mxu0 %v3545
    %5449 = vmatpush1.bf16.msra.mxu0 %v3544
    %5450 = vmatprep.mubr.bf16.mxu0 %v117
    %5451 = vmatmul.mubr.bf16.gmra.mrb[0].mxu0 %v116
    %v5452 = vpop.f32.mrb[0].mxu0
    %v5453 = vadd.f32 %v5412, %v5452
    %v5454 = vpop.f32.mrb[0].mxu0
    %v5455 = vadd.f32 %v5414, %v5454
    %v5456 = vpop.f32.mrb[0].mxu0
    %v5457 = vpop.f32.mrb[0].mxu0
    %5458 = vdwg.mxu0
    %5459 = vmatprep.subr.bf16.mxu0 %v3549
    %5460 = vmatpush1.bf16.msra.mxu0 %v3548
    %5461 = vmatprep.subr.bf16.mxu0 %v3553
    %5462 = vmatpush1.bf16.msra.mxu0 %v3552
    %5463 = vmatprep.subr.bf16.mxu0 %v3557
    %5464 = vmatpush1.bf16.msra.mxu0 %v3556
    %5465 = vmatprep.subr.bf16.mxu0 %v3561
    %5466 = vmatpush1.bf16.msra.mxu0 %v3560
    %5467 = vmatprep.subr.bf16.mxu0 %v3565
    %5468 = vmatpush1.bf16.msra.mxu0 %v3564
    %5469 = vmatprep.subr.bf16.mxu0 %v3569
    %5470 = vmatpush1.bf16.msra.mxu0 %v3568
    %5471 = vmatprep.subr.bf16.mxu0 %v3573
    %5472 = vmatpush1.bf16.msra.mxu0 %v3572
    %5473 = vmatprep.subr.bf16.mxu0 %v3577
    %5474 = vmatpush1.bf16.msra.mxu0 %v3576
    %5475 = vmatprep.subr.bf16.mxu0 %v3581
    %5476 = vmatpush1.bf16.msra.mxu0 %v3580
    %5477 = vmatprep.subr.bf16.mxu0 %v3585
    %5478 = vmatpush1.bf16.msra.mxu0 %v3584
    %5479 = vmatprep.subr.bf16.mxu0 %v3589
    %5480 = vmatpush1.bf16.msra.mxu0 %v3588
    %5481 = vmatprep.subr.bf16.mxu0 %v3593
    %5482 = vmatpush1.bf16.msra.mxu0 %v3592
    %5483 = vmatprep.subr.bf16.mxu0 %v3597
    %5484 = vmatpush1.bf16.msra.mxu0 %v3596
    %5485 = vmatprep.subr.bf16.mxu0 %v3601
    %5486 = vmatpush1.bf16.msra.mxu0 %v3600
    %5487 = vmatprep.subr.bf16.mxu0 %v3605
    %5488 = vmatpush1.bf16.msra.mxu0 %v3604
    %5489 = vmatprep.subr.bf16.mxu0 %v3609
    %5490 = vmatpush1.bf16.msra.mxu0 %v3608
    %5491 = vmatprep.mubr.bf16.mxu0 %v119
    %5492 = vmatmul.mubr.bf16.gmra.mrb[0].mxu0 %v118
    %v5493 = vpop.f32.mrb[0].mxu0
    %v5494 = vadd.f32 %v5453, %v5493
    %v5495 = vpop.f32.mrb[0].mxu0
    %v5496 = vadd.f32 %v5455, %v5495
    %v5497 = vpop.f32.mrb[0].mxu0
    %v5498 = vpop.f32.mrb[0].mxu0
    %5499 = vdwg.mxu0
    %5500 = vmatprep.subr.bf16.mxu0 %v3613
    %5501 = vmatpush1.bf16.msra.mxu0 %v3612
    %5502 = vmatprep.subr.bf16.mxu0 %v3617
    %5503 = vmatpush1.bf16.msra.mxu0 %v3616
    %5504 = vmatprep.subr.bf16.mxu0 %v3621
    %5505 = vmatpush1.bf16.msra.mxu0 %v3620
    %5506 = vmatprep.subr.bf16.mxu0 %v3625
    %5507 = vmatpush1.bf16.msra.mxu0 %v3624
    %5508 = vmatprep.subr.bf16.mxu0 %v3629
    %5509 = vmatpush1.bf16.msra.mxu0 %v3628
    %5510 = vmatprep.subr.bf16.mxu0 %v3633
    %5511 = vmatpush1.bf16.msra.mxu0 %v3632
    %5512 = vmatprep.subr.bf16.mxu0 %v3637
    %5513 = vmatpush1.bf16.msra.mxu0 %v3636
    %5514 = vmatprep.subr.bf16.mxu0 %v3641
    %5515 = vmatpush1.bf16.msra.mxu0 %v3640
    %5516 = vmatprep.subr.bf16.mxu0 %v3645
    %5517 = vmatpush1.bf16.msra.mxu0 %v3644
    %5518 = vmatprep.subr.bf16.mxu0 %v3649
    %5519 = vmatpush1.bf16.msra.mxu0 %v3648
    %5520 = vmatprep.subr.bf16.mxu0 %v3653
    %5521 = vmatpush1.bf16.msra.mxu0 %v3652
    %5522 = vmatprep.subr.bf16.mxu0 %v3657
    %5523 = vmatpush1.bf16.msra.mxu0 %v3656
    %5524 = vmatprep.subr.bf16.mxu0 %v3661
    %5525 = vmatpush1.bf16.msra.mxu0 %v3660
    %5526 = vmatprep.subr.bf16.mxu0 %v3665
    %5527 = vmatpush1.bf16.msra.mxu0 %v3664
    %5528 = vmatprep.subr.bf16.mxu0 %v3669
    %5529 = vmatpush1.bf16.msra.mxu0 %v3668
    %5530 = vmatprep.subr.bf16.mxu0 %v3673
    %5531 = vmatpush1.bf16.msra.mxu0 %v3672
    %5532 = vmatprep.mubr.bf16.mxu0 %v121
    %5533 = vmatmul.mubr.bf16.gmra.mrb[0].mxu0 %v120
    %v5534 = vpop.f32.mrb[0].mxu0
    %v5535 = vadd.f32 %v5494, %v5534
    %v5536 = vpop.f32.mrb[0].mxu0
    %v5537 = vadd.f32 %v5496, %v5536
    %v5538 = vpop.f32.mrb[0].mxu0
    %v5539 = vpop.f32.mrb[0].mxu0
    %5540 = vdwg.mxu0
    %5541 = vmatprep.subr.bf16.mxu0 %v3677
    %5542 = vmatpush1.bf16.msra.mxu0 %v3676
    %5543 = vmatprep.subr.bf16.mxu0 %v3681
    %5544 = vmatpush1.bf16.msra.mxu0 %v3680
    %5545 = vmatprep.subr.bf16.mxu0 %v3685
    %5546 = vmatpush1.bf16.msra.mxu0 %v3684
    %5547 = vmatprep.subr.bf16.mxu0 %v3689
    %5548 = vmatpush1.bf16.msra.mxu0 %v3688
    %5549 = vmatprep.subr.bf16.mxu0 %v3693
    %5550 = vmatpush1.bf16.msra.mxu0 %v3692
    %5551 = vmatprep.subr.bf16.mxu0 %v3697
    %5552 = vmatpush1.bf16.msra.mxu0 %v3696
    %5553 = vmatprep.subr.bf16.mxu0 %v3701
    %5554 = vmatpush1.bf16.msra.mxu0 %v3700
    %5555 = vmatprep.subr.bf16.mxu0 %v3705
    %5556 = vmatpush1.bf16.msra.mxu0 %v3704
    %5557 = vmatprep.subr.bf16.mxu0 %v3709
    %5558 = vmatpush1.bf16.msra.mxu0 %v3708
    %5559 = vmatprep.subr.bf16.mxu0 %v3713
    %5560 = vmatpush1.bf16.msra.mxu0 %v3712
    %5561 = vmatprep.subr.bf16.mxu0 %v3717
    %5562 = vmatpush1.bf16.msra.mxu0 %v3716
    %5563 = vmatprep.subr.bf16.mxu0 %v3721
    %5564 = vmatpush1.bf16.msra.mxu0 %v3720
    %5565 = vmatprep.subr.bf16.mxu0 %v3725
    %5566 = vmatpush1.bf16.msra.mxu0 %v3724
    %5567 = vmatprep.subr.bf16.mxu0 %v3729
    %5568 = vmatpush1.bf16.msra.mxu0 %v3728
    %5569 = vmatprep.subr.bf16.mxu0 %v3733
    %5570 = vmatpush1.bf16.msra.mxu0 %v3732
    %5571 = vmatprep.subr.bf16.mxu0 %v3737
    %5572 = vmatpush1.bf16.msra.mxu0 %v3736
    %5573 = vmatprep.mubr.bf16.mxu0 %v123
    %5574 = vmatmul.mubr.bf16.gmra.mrb[0].mxu0 %v122
    %v5575 = vpop.f32.mrb[0].mxu0
    %v5576 = vadd.f32 %v5535, %v5575
    %v5577 = vpop.f32.mrb[0].mxu0
    %v5578 = vadd.f32 %v5537, %v5577
    %v5579 = vpop.f32.mrb[0].mxu0
    %v5580 = vpop.f32.mrb[0].mxu0
    %5581 = vdwg.mxu0
    %5582 = vmatprep.subr.bf16.mxu0 %v3741
    %5583 = vmatpush1.bf16.msra.mxu0 %v3740
    %5584 = vmatprep.subr.bf16.mxu0 %v3745
    %5585 = vmatpush1.bf16.msra.mxu0 %v3744
    %5586 = vmatprep.subr.bf16.mxu0 %v3749
    %5587 = vmatpush1.bf16.msra.mxu0 %v3748
    %5588 = vmatprep.subr.bf16.mxu0 %v3753
    %5589 = vmatpush1.bf16.msra.mxu0 %v3752
    %5590 = vmatprep.subr.bf16.mxu0 %v3757
    %5591 = vmatpush1.bf16.msra.mxu0 %v3756
    %5592 = vmatprep.subr.bf16.mxu0 %v3761
    %5593 = vmatpush1.bf16.msra.mxu0 %v3760
    %5594 = vmatprep.subr.bf16.mxu0 %v3765
    %5595 = vmatpush1.bf16.msra.mxu0 %v3764
    %5596 = vmatprep.subr.bf16.mxu0 %v3769
    %5597 = vmatpush1.bf16.msra.mxu0 %v3768
    %5598 = vmatprep.subr.bf16.mxu0 %v3773
    %5599 = vmatpush1.bf16.msra.mxu0 %v3772
    %5600 = vmatprep.subr.bf16.mxu0 %v3777
    %5601 = vmatpush1.bf16.msra.mxu0 %v3776
    %5602 = vmatprep.subr.bf16.mxu0 %v3781
    %5603 = vmatpush1.bf16.msra.mxu0 %v3780
    %5604 = vmatprep.subr.bf16.mxu0 %v3785
    %5605 = vmatpush1.bf16.msra.mxu0 %v3784
    %5606 = vmatprep.subr.bf16.mxu0 %v3789
    %5607 = vmatpush1.bf16.msra.mxu0 %v3788
    %5608 = vmatprep.subr.bf16.mxu0 %v3793
    %5609 = vmatpush1.bf16.msra.mxu0 %v3792
    %5610 = vmatprep.subr.bf16.mxu0 %v3797
    %5611 = vmatpush1.bf16.msra.mxu0 %v3796
    %5612 = vmatprep.subr.bf16.mxu0 %v3801
    %5613 = vmatpush1.bf16.msra.mxu0 %v3800
    %5614 = vmatprep.mubr.bf16.mxu0 %v125
    %5615 = vmatmul.mubr.bf16.gmra.mrb[0].mxu0 %v124
    %v5616 = vpop.f32.mrb[0].mxu0
    %v5617 = vadd.f32 %v5576, %v5616
    %v5618 = vpop.f32.mrb[0].mxu0
    %v5619 = vadd.f32 %v5578, %v5618
    %v5620 = vpop.f32.mrb[0].mxu0
    %v5621 = vpop.f32.mrb[0].mxu0
    %5622 = vdwg.mxu0
    %5623 = vmatprep.subr.bf16.mxu0 %v3805
    %5624 = vmatpush1.bf16.msra.mxu0 %v3804
    %5625 = vmatprep.subr.bf16.mxu0 %v3809
    %5626 = vmatpush1.bf16.msra.mxu0 %v3808
    %5627 = vmatprep.subr.bf16.mxu0 %v3813
    %5628 = vmatpush1.bf16.msra.mxu0 %v3812
    %5629 = vmatprep.subr.bf16.mxu0 %v3817
    %5630 = vmatpush1.bf16.msra.mxu0 %v3816
    %5631 = vmatprep.subr.bf16.mxu0 %v3821
    %5632 = vmatpush1.bf16.msra.mxu0 %v3820
    %5633 = vmatprep.subr.bf16.mxu0 %v3825
    %5634 = vmatpush1.bf16.msra.mxu0 %v3824
    %5635 = vmatprep.subr.bf16.mxu0 %v3829
    %5636 = vmatpush1.bf16.msra.mxu0 %v3828
    %5637 = vmatprep.subr.bf16.mxu0 %v3833
    %5638 = vmatpush1.bf16.msra.mxu0 %v3832
    %5639 = vmatprep.subr.bf16.mxu0 %v3837
    %5640 = vmatpush1.bf16.msra.mxu0 %v3836
    %5641 = vmatprep.subr.bf16.mxu0 %v3841
    %5642 = vmatpush1.bf16.msra.mxu0 %v3840
    %5643 = vmatprep.subr.bf16.mxu0 %v3845
    %5644 = vmatpush1.bf16.msra.mxu0 %v3844
    %5645 = vmatprep.subr.bf16.mxu0 %v3849
    %5646 = vmatpush1.bf16.msra.mxu0 %v3848
    %5647 = vmatprep.subr.bf16.mxu0 %v3853
    %5648 = vmatpush1.bf16.msra.mxu0 %v3852
    %5649 = vmatprep.subr.bf16.mxu0 %v3857
    %5650 = vmatpush1.bf16.msra.mxu0 %v3856
    %5651 = vmatprep.subr.bf16.mxu0 %v3861
    %5652 = vmatpush1.bf16.msra.mxu0 %v3860
    %5653 = vmatprep.subr.bf16.mxu0 %v3865
    %5654 = vmatpush1.bf16.msra.mxu0 %v3864
    %5655 = vmatprep.mubr.bf16.mxu0 %v127
    %5656 = vmatmul.mubr.bf16.gmra.mrb[0].mxu0 %v126
    %v5657 = vpop.f32.mrb[0].mxu0
    %v5658 = vadd.f32 %v5617, %v5657
    %v5659 = vpop.f32.mrb[0].mxu0
    %v5660 = vadd.f32 %v5619, %v5659
    %v5661 = vpop.f32.mrb[0].mxu0
    %v5662 = vpop.f32.mrb[0].mxu0
    %5663 = vdwg.mxu0
    %5664 = vmatprep.subr.bf16.mxu0 %v3869
    %5665 = vmatpush1.bf16.msra.mxu0 %v3868
    %5666 = vmatprep.subr.bf16.mxu0 %v3873
    %5667 = vmatpush1.bf16.msra.mxu0 %v3872
    %5668 = vmatprep.subr.bf16.mxu0 %v3877
    %5669 = vmatpush1.bf16.msra.mxu0 %v3876
    %5670 = vmatprep.subr.bf16.mxu0 %v3881
    %5671 = vmatpush1.bf16.msra.mxu0 %v3880
    %5672 = vmatprep.subr.bf16.mxu0 %v3885
    %5673 = vmatpush1.bf16.msra.mxu0 %v3884
    %5674 = vmatprep.subr.bf16.mxu0 %v3889
    %5675 = vmatpush1.bf16.msra.mxu0 %v3888
    %5676 = vmatprep.subr.bf16.mxu0 %v3893
    %5677 = vmatpush1.bf16.msra.mxu0 %v3892
    %5678 = vmatprep.subr.bf16.mxu0 %v3897
    %5679 = vmatpush1.bf16.msra.mxu0 %v3896
    %5680 = vmatprep.subr.bf16.mxu0 %v3901
    %5681 = vmatpush1.bf16.msra.mxu0 %v3900
    %5682 = vmatprep.subr.bf16.mxu0 %v3905
    %5683 = vmatpush1.bf16.msra.mxu0 %v3904
    %5684 = vmatprep.subr.bf16.mxu0 %v3909
    %5685 = vmatpush1.bf16.msra.mxu0 %v3908
    %5686 = vmatprep.subr.bf16.mxu0 %v3913
    %5687 = vmatpush1.bf16.msra.mxu0 %v3912
    %5688 = vmatprep.subr.bf16.mxu0 %v3917
    %5689 = vmatpush1.bf16.msra.mxu0 %v3916
    %5690 = vmatprep.subr.bf16.mxu0 %v3921
    %5691 = vmatpush1.bf16.msra.mxu0 %v3920
    %5692 = vmatprep.subr.bf16.mxu0 %v3925
    %5693 = vmatpush1.bf16.msra.mxu0 %v3924
    %5694 = vmatprep.subr.bf16.mxu0 %v3929
    %5695 = vmatpush1.bf16.msra.mxu0 %v3928
    %5696 = vmatprep.mubr.bf16.mxu0 %v129
    %5697 = vmatmul.mubr.bf16.gmra.mrb[0].mxu0 %v128
    %v5698 = vpop.f32.mrb[0].mxu0
    %v5699 = vadd.f32 %v5658, %v5698
    %v5700 = vpop.f32.mrb[0].mxu0
    %v5701 = vadd.f32 %v5660, %v5700
    %v5702 = vpop.f32.mrb[0].mxu0
    %v5703 = vpop.f32.mrb[0].mxu0
    %5704 = vdwg.mxu0
    %5705 = vmatprep.subr.bf16.mxu0 %v3933
    %5706 = vmatpush1.bf16.msra.mxu0 %v3932
    %5707 = vmatprep.subr.bf16.mxu0 %v3937
    %5708 = vmatpush1.bf16.msra.mxu0 %v3936
    %5709 = vmatprep.subr.bf16.mxu0 %v3941
    %5710 = vmatpush1.bf16.msra.mxu0 %v3940
    %5711 = vmatprep.subr.bf16.mxu0 %v3945
    %5712 = vmatpush1.bf16.msra.mxu0 %v3944
    %5713 = vmatprep.subr.bf16.mxu0 %v3949
    %5714 = vmatpush1.bf16.msra.mxu0 %v3948
    %5715 = vmatprep.subr.bf16.mxu0 %v3953
    %5716 = vmatpush1.bf16.msra.mxu0 %v3952
    %5717 = vmatprep.subr.bf16.mxu0 %v3957
    %5718 = vmatpush1.bf16.msra.mxu0 %v3956
    %5719 = vmatprep.subr.bf16.mxu0 %v3961
    %5720 = vmatpush1.bf16.msra.mxu0 %v3960
    %5721 = vmatprep.subr.bf16.mxu0 %v3965
    %5722 = vmatpush1.bf16.msra.mxu0 %v3964
    %5723 = vmatprep.subr.bf16.mxu0 %v3969
    %5724 = vmatpush1.bf16.msra.mxu0 %v3968
    %5725 = vmatprep.subr.bf16.mxu0 %v3973
    %5726 = vmatpush1.bf16.msra.mxu0 %v3972
    %5727 = vmatprep.subr.bf16.mxu0 %v3977
    %5728 = vmatpush1.bf16.msra.mxu0 %v3976
    %5729 = vmatprep.subr.bf16.mxu0 %v3981
    %5730 = vmatpush1.bf16.msra.mxu0 %v3980
    %5731 = vmatprep.subr.bf16.mxu0 %v3985
    %5732 = vmatpush1.bf16.msra.mxu0 %v3984
    %5733 = vmatprep.subr.bf16.mxu0 %v3989
    %5734 = vmatpush1.bf16.msra.mxu0 %v3988
    %5735 = vmatprep.subr.bf16.mxu0 %v3993
    %5736 = vmatpush1.bf16.msra.mxu0 %v3992
    %5737 = vmatprep.mubr.bf16.mxu0 %v131
    %5738 = vmatmul.mubr.bf16.gmra.mrb[0].mxu0 %v130
    %v5739 = vpop.f32.mrb[0].mxu0
    %v5740 = vadd.f32 %v5699, %v5739
    %v5741 = vpop.f32.mrb[0].mxu0
    %v5742 = vadd.f32 %v5701, %v5741
    %v5743 = vpop.f32.mrb[0].mxu0
    %v5744 = vpop.f32.mrb[0].mxu0
    %5745 = vdwg.mxu0
    %v5746 = vpack.c.bf16 %v5248, %v5248
    %v5747 = vpack.c.bf16 %v5250, %v5250
    %v5748 = vpack.c.bf16 %v5740, %v5740
    %v5749 = vpack.c.bf16 %v5742, %v5742
    %v5750 = vld [vmem:[#allocation8] sm:$0xf]
    %v5751 = vld [vmem:[#allocation8 + $0x4] sm:$0xf]
    %v5752 = vld [vmem:[#allocation8 + $0x8] sm:$0xf]
    %v5753 = vld [vmem:[#allocation8 + $0xc] sm:$0xf]
    %v5754 = vld [vmem:[#allocation8 + $0x10] sm:$0xf]
    %v5755 = vld [vmem:[#allocation8 + $0x14] sm:$0xf]
    %v5756 = vld [vmem:[#allocation8 + $0x18] sm:$0xf]
    %v5757 = vld [vmem:[#allocation8 + $0x1c] sm:$0xf]
    %v5758 = vld [vmem:[#allocation8 + $0x20] sm:$0xf]
    %v5759 = vld [vmem:[#allocation8 + $0x24] sm:$0xf]
    %v5760 = vld [vmem:[#allocation8 + $0x28] sm:$0xf]
    %v5761 = vld [vmem:[#allocation8 + $0x2c] sm:$0xf]
    %v5762 = vld [vmem:[#allocation8 + $0x30] sm:$0xf]
    %v5763 = vld [vmem:[#allocation8 + $0x34] sm:$0xf]
    %v5764 = vld [vmem:[#allocation8 + $0x38] sm:$0xf]
    %v5765 = vld [vmem:[#allocation8 + $0x3c] sm:$0xf]
    %v5766 = vld [vmem:[#allocation8 + $0x40] sm:$0xf]
    %v5767 = vld [vmem:[#allocation8 + $0x44] sm:$0xf]
    %v5768 = vld [vmem:[#allocation8 + $0x48] sm:$0xf]
    %v5769 = vld [vmem:[#allocation8 + $0x4c] sm:$0xf]
    %v5770 = vld [vmem:[#allocation8 + $0x50] sm:$0xf]
    %v5771 = vld [vmem:[#allocation8 + $0x54] sm:$0xf]
    %v5772 = vld [vmem:[#allocation8 + $0x58] sm:$0xf]
    %v5773 = vld [vmem:[#allocation8 + $0x5c] sm:$0xf]
    %v5774 = vld [vmem:[#allocation8 + $0x60] sm:$0xf]
    %v5775 = vld [vmem:[#allocation8 + $0x64] sm:$0xf]
    %v5776 = vld [vmem:[#allocation8 + $0x68] sm:$0xf]
    %v5777 = vld [vmem:[#allocation8 + $0x6c] sm:$0xf]
    %v5778 = vld [vmem:[#allocation8 + $0x70] sm:$0xf]
    %v5779 = vld [vmem:[#allocation8 + $0x74] sm:$0xf]
    %v5780 = vld [vmem:[#allocation8 + $0x78] sm:$0xf]
    %v5781 = vld [vmem:[#allocation8 + $0x7c] sm:$0xf]
    %v5782 = vld [vmem:[#allocation8 + $0x80] sm:$0xf]
    %v5783 = vld [vmem:[#allocation8 + $0x84] sm:$0xf]
    %v5784 = vld [vmem:[#allocation8 + $0x88] sm:$0xf]
    %v5785 = vld [vmem:[#allocation8 + $0x8c] sm:$0xf]
    %v5786 = vld [vmem:[#allocation8 + $0x90] sm:$0xf]
    %v5787 = vld [vmem:[#allocation8 + $0x94] sm:$0xf]
    %v5788 = vld [vmem:[#allocation8 + $0x98] sm:$0xf]
    %v5789 = vld [vmem:[#allocation8 + $0x9c] sm:$0xf]
    %v5790 = vld [vmem:[#allocation8 + $0xa0] sm:$0xf]
    %v5791 = vld [vmem:[#allocation8 + $0xa4] sm:$0xf]
    %v5792 = vld [vmem:[#allocation8 + $0xa8] sm:$0xf]
    %v5793 = vld [vmem:[#allocation8 + $0xac] sm:$0xf]
    %v5794 = vld [vmem:[#allocation8 + $0xb0] sm:$0xf]
    %v5795 = vld [vmem:[#allocation8 + $0xb4] sm:$0xf]
    %v5796 = vld [vmem:[#allocation8 + $0xb8] sm:$0xf]
    %v5797 = vld [vmem:[#allocation8 + $0xbc] sm:$0xf]
    %v5798 = vld [vmem:[#allocation8 + $0xc0] sm:$0xf]
    %v5799 = vld [vmem:[#allocation8 + $0xc4] sm:$0xf]
    %v5800 = vld [vmem:[#allocation8 + $0xc8] sm:$0xf]
    %v5801 = vld [vmem:[#allocation8 + $0xcc] sm:$0xf]
    %v5802 = vld [vmem:[#allocation8 + $0xd0] sm:$0xf]
    %v5803 = vld [vmem:[#allocation8 + $0xd4] sm:$0xf]
    %v5804 = vld [vmem:[#allocation8 + $0xd8] sm:$0xf]
    %v5805 = vld [vmem:[#allocation8 + $0xdc] sm:$0xf]
    %v5806 = vld [vmem:[#allocation8 + $0xe0] sm:$0xf]
    %v5807 = vld [vmem:[#allocation8 + $0xe4] sm:$0xf]
    %v5808 = vld [vmem:[#allocation8 + $0xe8] sm:$0xf]
    %v5809 = vld [vmem:[#allocation8 + $0xec] sm:$0xf]
    %v5810 = vld [vmem:[#allocation8 + $0xf0] sm:$0xf]
    %v5811 = vld [vmem:[#allocation8 + $0xf4] sm:$0xf]
    %v5812 = vld [vmem:[#allocation8 + $0xf8] sm:$0xf]
    %v5813 = vld [vmem:[#allocation8 + $0xfc] sm:$0xf]
    %v5814 = vld [vmem:[#allocation10] sm:$0x1]
    %v5816 = vlaneseq
    %v5817 = vshrl.u32 %v5816, 7
    %v5818 = vsub.s32 0, %v5817
    %v5819 = vrot.slane %v5814, %v5818
    %v5885 = vunpack.c.l.b16 %v5750
    %v5886 = vunpack.c.l.b16 %v5751
    %v5887 = vunpack.c.l.b16 %v5752
    %v5888 = vunpack.c.l.b16 %v5753
    %v5889 = vunpack.c.l.b16 %v5754
    %v5890 = vunpack.c.l.b16 %v5755
    %v5891 = vunpack.c.l.b16 %v5756
    %v5892 = vunpack.c.l.b16 %v5757
    %v5893 = vunpack.c.l.b16 %v5758
    %v5894 = vunpack.c.l.b16 %v5759
    %v5895 = vunpack.c.l.b16 %v5760
    %v5896 = vunpack.c.l.b16 %v5761
    %v5897 = vunpack.c.l.b16 %v5762
    %v5898 = vunpack.c.l.b16 %v5763
    %v5899 = vunpack.c.l.b16 %v5764
    %v5900 = vunpack.c.l.b16 %v5765
    %v5901 = vunpack.c.l.b16 %v5766
    %v5902 = vunpack.c.l.b16 %v5767
    %v5903 = vunpack.c.l.b16 %v5768
    %v5904 = vunpack.c.l.b16 %v5769
    %v5905 = vunpack.c.l.b16 %v5770
    %v5906 = vunpack.c.l.b16 %v5771
    %v5907 = vunpack.c.l.b16 %v5772
    %v5908 = vunpack.c.l.b16 %v5773
    %v5909 = vunpack.c.l.b16 %v5774
    %v5910 = vunpack.c.l.b16 %v5775
    %v5911 = vunpack.c.l.b16 %v5776
    %v5912 = vunpack.c.l.b16 %v5777
    %v5913 = vunpack.c.l.b16 %v5778
    %v5914 = vunpack.c.l.b16 %v5779
    %v5915 = vunpack.c.l.b16 %v5780
    %v5916 = vunpack.c.l.b16 %v5781
    %v5917 = vunpack.c.l.b16 %v5782
    %v5918 = vunpack.c.l.b16 %v5783
    %v5919 = vunpack.c.l.b16 %v5784
    %v5920 = vunpack.c.l.b16 %v5785
    %v5921 = vunpack.c.l.b16 %v5786
    %v5922 = vunpack.c.l.b16 %v5787
    %v5923 = vunpack.c.l.b16 %v5788
    %v5924 = vunpack.c.l.b16 %v5789
    %v5925 = vunpack.c.l.b16 %v5790
    %v5926 = vunpack.c.l.b16 %v5791
    %v5927 = vunpack.c.l.b16 %v5792
    %v5928 = vunpack.c.l.b16 %v5793
    %v5929 = vunpack.c.l.b16 %v5794
    %v5930 = vunpack.c.l.b16 %v5795
    %v5931 = vunpack.c.l.b16 %v5796
    %v5932 = vunpack.c.l.b16 %v5797
    %v5933 = vunpack.c.l.b16 %v5798
    %v5934 = vunpack.c.l.b16 %v5799
    %v5935 = vunpack.c.l.b16 %v5800
    %v5936 = vunpack.c.l.b16 %v5801
    %v5937 = vunpack.c.l.b16 %v5802
    %v5938 = vunpack.c.l.b16 %v5803
    %v5939 = vunpack.c.l.b16 %v5804
    %v5940 = vunpack.c.l.b16 %v5805
    %v5941 = vunpack.c.l.b16 %v5806
    %v5942 = vunpack.c.l.b16 %v5807
    %v5943 = vunpack.c.l.b16 %v5808
    %v5944 = vunpack.c.l.b16 %v5809
    %v5945 = vunpack.c.l.b16 %v5810
    %v5946 = vunpack.c.l.b16 %v5811
    %v5947 = vunpack.c.l.b16 %v5812
    %v5948 = vunpack.c.l.b16 %v5813
    %v5949 = vpack.c.b16 %v5886, %v5885
    %v5950 = vpack.c.b16 %v5888, %v5887
    %v5951 = vpack.c.b16 %v5890, %v5889
    %v5952 = vpack.c.b16 %v5892, %v5891
    %v5953 = vpack.c.b16 %v5894, %v5893
    %v5954 = vpack.c.b16 %v5896, %v5895
    %v5955 = vpack.c.b16 %v5898, %v5897
    %v5956 = vpack.c.b16 %v5900, %v5899
    %v5957 = vpack.c.b16 %v5902, %v5901
    %v5958 = vpack.c.b16 %v5904, %v5903
    %v5959 = vpack.c.b16 %v5906, %v5905
    %v5960 = vpack.c.b16 %v5908, %v5907
    %v5961 = vpack.c.b16 %v5910, %v5909
    %v5962 = vpack.c.b16 %v5912, %v5911
    %v5963 = vpack.c.b16 %v5914, %v5913
    %v5964 = vpack.c.b16 %v5916, %v5915
    %v5965 = vpack.c.b16 %v5918, %v5917
    %v5966 = vpack.c.b16 %v5920, %v5919
    %v5967 = vpack.c.b16 %v5922, %v5921
    %v5968 = vpack.c.b16 %v5924, %v5923
    %v5969 = vpack.c.b16 %v5926, %v5925
    %v5970 = vpack.c.b16 %v5928, %v5927
    %v5971 = vpack.c.b16 %v5930, %v5929
    %v5972 = vpack.c.b16 %v5932, %v5931
    %v5973 = vpack.c.b16 %v5934, %v5933
    %v5974 = vpack.c.b16 %v5936, %v5935
    %v5975 = vpack.c.b16 %v5938, %v5937
    %v5976 = vpack.c.b16 %v5940, %v5939
    %v5977 = vpack.c.b16 %v5942, %v5941
    %v5978 = vpack.c.b16 %v5944, %v5943
    %v5979 = vpack.c.b16 %v5946, %v5945
    %v5980 = vpack.c.b16 %v5948, %v5947
    %6013 = vmatprep.subr.bf16.mxu0 0
    %6014 = vmatpush1.bf16.msra.mxu0 %v5949
    %6015 = vmatprep.subr.bf16.mxu0 0
    %6016 = vmatpush1.bf16.msra.mxu0 %v5950
    %6017 = vmatprep.subr.bf16.mxu0 0
    %6018 = vmatpush1.bf16.msra.mxu0 %v5951
    %6019 = vmatprep.subr.bf16.mxu0 0
    %6020 = vmatpush1.bf16.msra.mxu0 %v5952
    %6021 = vmatprep.subr.bf16.mxu0 0
    %6022 = vmatpush1.bf16.msra.mxu0 %v5953
    %6023 = vmatprep.subr.bf16.mxu0 0
    %6024 = vmatpush1.bf16.msra.mxu0 %v5954
    %6025 = vmatprep.subr.bf16.mxu0 0
    %6026 = vmatpush1.bf16.msra.mxu0 %v5955
    %6027 = vmatprep.subr.bf16.mxu0 0
    %6028 = vmatpush1.bf16.msra.mxu0 %v5956
    %6029 = vmatprep.subr.bf16.mxu0 0
    %6030 = vmatpush1.bf16.msra.mxu0 %v5957
    %6031 = vmatprep.subr.bf16.mxu0 0
    %6032 = vmatpush1.bf16.msra.mxu0 %v5958
    %6033 = vmatprep.subr.bf16.mxu0 0
    %6034 = vmatpush1.bf16.msra.mxu0 %v5959
    %6035 = vmatprep.subr.bf16.mxu0 0
    %6036 = vmatpush1.bf16.msra.mxu0 %v5960
    %6037 = vmatprep.subr.bf16.mxu0 0
    %6038 = vmatpush1.bf16.msra.mxu0 %v5961
    %6039 = vmatprep.subr.bf16.mxu0 0
    %6040 = vmatpush1.bf16.msra.mxu0 %v5962
    %6041 = vmatprep.subr.bf16.mxu0 0
    %6042 = vmatpush1.bf16.msra.mxu0 %v5963
    %6043 = vmatprep.subr.bf16.mxu0 0
    %6044 = vmatpush1.bf16.msra.mxu0 %v5964
    %6045 = vmatprep.mubr.bf16.mxu0 %v5747
    %6046 = vmatmul.mubr.bf16.gmra.mrb[0].mxu0 %v5746
    %v6047 = vpop.f32.mrb[0].mxu0
    %v6048 = vadd.f32 %v5819, %v6047
    %v6049 = vpop.f32.mrb[0].mxu0
    %v6050 = vpop.f32.mrb[0].mxu0
    %v6051 = vpop.f32.mrb[0].mxu0
    %6052 = vdwg.mxu0
    %6053 = vmatprep.subr.bf16.mxu0 0
    %6054 = vmatpush1.bf16.msra.mxu0 %v5965
    %6055 = vmatprep.subr.bf16.mxu0 0
    %6056 = vmatpush1.bf16.msra.mxu0 %v5966
    %6057 = vmatprep.subr.bf16.mxu0 0
    %6058 = vmatpush1.bf16.msra.mxu0 %v5967
    %6059 = vmatprep.subr.bf16.mxu0 0
    %6060 = vmatpush1.bf16.msra.mxu0 %v5968
    %6061 = vmatprep.subr.bf16.mxu0 0
    %6062 = vmatpush1.bf16.msra.mxu0 %v5969
    %6063 = vmatprep.subr.bf16.mxu0 0
    %6064 = vmatpush1.bf16.msra.mxu0 %v5970
    %6065 = vmatprep.subr.bf16.mxu0 0
    %6066 = vmatpush1.bf16.msra.mxu0 %v5971
    %6067 = vmatprep.subr.bf16.mxu0 0
    %6068 = vmatpush1.bf16.msra.mxu0 %v5972
    %6069 = vmatprep.subr.bf16.mxu0 0
    %6070 = vmatpush1.bf16.msra.mxu0 %v5973
    %6071 = vmatprep.subr.bf16.mxu0 0
    %6072 = vmatpush1.bf16.msra.mxu0 %v5974
    %6073 = vmatprep.subr.bf16.mxu0 0
    %6074 = vmatpush1.bf16.msra.mxu0 %v5975
    %6075 = vmatprep.subr.bf16.mxu0 0
    %6076 = vmatpush1.bf16.msra.mxu0 %v5976
    %6077 = vmatprep.subr.bf16.mxu0 0
    %6078 = vmatpush1.bf16.msra.mxu0 %v5977
    %6079 = vmatprep.subr.bf16.mxu0 0
    %6080 = vmatpush1.bf16.msra.mxu0 %v5978
    %6081 = vmatprep.subr.bf16.mxu0 0
    %6082 = vmatpush1.bf16.msra.mxu0 %v5979
    %6083 = vmatprep.subr.bf16.mxu0 0
    %6084 = vmatpush1.bf16.msra.mxu0 %v5980
    %6085 = vmatprep.mubr.bf16.mxu0 %v5749
    %6086 = vmatmul.mubr.bf16.gmra.mrb[0].mxu0 %v5748
    %v6087 = vpop.f32.mrb[0].mxu0
    %v6088 = vadd.f32 %v6048, %v6087
    %v6089 = vpop.f32.mrb[0].mxu0
    %v6090 = vpop.f32.mrb[0].mxu0
    %v6091 = vpop.f32.mrb[0].mxu0
    %6092 = vdwg.mxu0
    %6093 = vst [vmem:[#allocation11] sm:$0xff] %v6088
    // Predicated region
    $region42: #{tpu_custom_call.1} parent=1 // pred_check
      _
    $region43: #{tpu_custom_call.1} parent=1 // pred_check_branch
      %6095 = sbr.rel (0) target = $region45
    $region44: #{tpu_custom_call.1} parent=1 // pred_region
      %s6097 = ssub.s32 128, 128
      %6098 = vsyncadd [#allocation4], %s6097
      %s6100 = sshll.u32 [#allocation11], 4
      %s6101 = int_to_ptr.vmem [resolvable:$true] %s6100
      %6103 = dma.vmem_to_hbm [thread:$0]  %s6101, 128, %s5, [#allocation4]
    $region45: #{tpu_custom_call.1} parent=1 // pred_fallthru
      _
    // Predicated region
    $region46: #{tpu_custom_call.1} parent=1 // pred_check
      _
    $region47: #{tpu_custom_call.1} parent=1 // pred_check_branch
      %6105 = sbr.rel (0) target = $region49
    $region48: #{tpu_custom_call.1} parent=1 // pred_region
      %6106 = dma.done [#allocation4], 128
    $region49: #{tpu_custom_call.1} parent=1 // pred_fallthru
      _
    %6107 = vsyncpa [#allocation3], 1
    %6108 = vsyncpa [#allocation6], 1
    %6109 = vsyncpa [#allocation9], 1
    %6110 = vsyncpa [#allocation4], 1

</llo_original>
